<compile_context>
chip_gen: v5e
topology: v5e:2x2
jax: 0.10.0
libtpu: 0.0.40
codegen_flags: <defaults>
</compile_context>

<pallas_src>
import functools
import math

import numpy as np
import jax
import jax.numpy as jnp
from jax import lax
from jax.experimental import pallas as pl
from jax.experimental.pallas import tpu as pltpu


_CORE = 128       # lane-aligned start of the "core" (first real pixel) in every flat buffer
_HEAD_CIN = 16    # head-conv Cin zero-padded to one bf16 sublane tile (was 16 = n_feats before)


# ---------------------------------------------------------------------------
# Flat channel-major layout helpers.
# ---------------------------------------------------------------------------
def _flat_layout(H, W, B_sub):
    """Layout constants for B_sub stacked (H, W) images, channel-major flat-padded.

    Padded pixel (r, s) of image b lives at lane BASE + b*S + r*P + s.  Every
    3x3 tap is then a contiguous lane slice of the buffer, and the conv is a
    single MXU matmul (Cout, 9*Cin) @ (9*Cin, L) with spatial on lanes.
    """
    P = W + 2                                  # row pitch (1-px zero border left/right)
    S = (H + 2) * P                            # padded image length
    T = B_sub * S                              # B_sub images stacked along lanes
    L = (B_sub - 1) * S + (H - 1) * P + W      # contiguous span covering every real pixel
    BASE = _CORE - (P + 1)                     # lane of semantic position 0 (aligned core)
    TB = BASE + T                              # buffer lanes; max tap read == TB exactly
    # TODO(synk): row-strip tiling for wide images (needs P <= 127 here).
    assert BASE >= 0, "image width too large for the single-block flat layout"
    return dict(P=P, S=S, T=T, L=L, BASE=BASE, TB=TB)


def _core_mask(H, W, B_sub):
    """(1, L) f32 mask: 1 at real-pixel positions of the core span, 0 at border positions."""
    lay = _flat_layout(H, W, B_sub)
    P, S, L = lay["P"], lay["S"], lay["L"]
    pos = np.arange(P + 1, P + 1 + L)
    local = pos % S
    r, s = local // P, local % P
    m = ((r >= 1) & (r <= H) & (s >= 1) & (s <= W)).astype(np.float32)
    return jnp.asarray(m[None, :])


# ---------------------------------------------------------------------------
# In-kernel conv building blocks.
# ---------------------------------------------------------------------------
def _conv_taps(read, w_ref, b_ref, *, P, L, relu):
    """3x3 'same' conv as ONE MXU matmul: (Cout, 9*Cin) @ (9*Cin, L), f32 accum."""
    deltas = [(ky - 1) * P + (kx - 1) for ky in range(3) for kx in range(3)]
    # Each tap is a contiguous lane slice (bf16, 16-row tile-aligned sublane concat).
    patches = jnp.concatenate([read(_CORE + d, L) for d in deltas], axis=0)
    acc = jnp.dot(w_ref[...], patches, preferred_element_type=jnp.float32)
    acc = acc + b_ref[...]                     # (Cout, 1) broadcast over lanes
    if relu:
        acc = jnp.maximum(acc, 0.0)
    return acc                                 # (Cout, L) f32


def _store_out(o_ref, val, L):
    """Lane-aligned core store; only the tiny halo strips get zero-filled."""
    cout, tb = o_ref.shape[1], o_ref.shape[2]
    o_ref[0, :, :_CORE] = jnp.zeros((cout, _CORE), o_ref.dtype)
    o_ref[0, :, _CORE + L:] = jnp.zeros((cout, tb - _CORE - L), o_ref.dtype)
    o_ref[0, :, _CORE:_CORE + L] = val.astype(o_ref.dtype)


# ---------------------------------------------------------------------------
# Kernel 1: fused LR trunk.
#   head conv + n_resblocks ResBlocks + body-tail conv + long skip
#   + the first upsampler conv (F -> 4F).  All intermediates stay in VMEM.
# ---------------------------------------------------------------------------
def _lr_trunk_kernel(x_ref, mask_ref, *rest, lay, n_feats, n_resblocks, res_scale):
    *p, o_ref, feat, xh_ref, res_ref = rest
    P, L, TB = lay["P"], lay["L"], lay["TB"]
    F = n_feats
    mask = mask_ref[...]                                    # (1, L) f32

    # Zero only the halo strips of the bf16 staging scratch (its core span is
    # always overwritten, masked, before being read).  Re-done every grid step:
    # scratch state must not be relied on across parallel grid iterations.
    feat[:, :_CORE] = jnp.zeros((F, _CORE), jnp.bfloat16)
    feat[:, _CORE + L:] = jnp.zeros((F, TB - _CORE - L), jnp.bfloat16)

    read_x = lambda s, n: x_ref[0, :, s:s + n]              # bf16 taps, no casts
    read_f = lambda s, n: feat[:, s:s + n]

    def put(v):                                             # stage f32 -> bf16 scratch, re-zeroing
        feat[:, _CORE:_CORE + L] = (v * mask).astype(jnp.bfloat16)   # the border positions

    it = iter(range(0, len(p), 2))

    def conv(read, relu=False):
        i = next(it)
        return _conv_taps(read, p[i], p[i + 1], P=P, L=L, relu=relu)

    x_head = conv(read_x)                                   # head conv (Cin zero-padded)
    xh_ref[...] = x_head                                    # long-skip operand (f32 VMEM)
    res_ref[...] = x_head                                   # running residual (f32 VMEM)
    for _ in range(n_resblocks):                            # conv -> ReLU -> conv -> *scale + x
        put(res_ref[...])
        put(conv(read_f, relu=True))
        res_ref[...] = conv(read_f) * res_scale + res_ref[...]
    put(res_ref[...])
    res_ref[...] = conv(read_f) + xh_ref[...]               # body-tail conv + long skip
    put(res_ref[...])
    _store_out(o_ref, conv(read_f), L)                      # first upsampler conv: F -> 4F


# ---------------------------------------------------------------------------
# Kernel 2: single fused 3x3 conv (later upsampler stages and the tail conv).
# ---------------------------------------------------------------------------
def _conv3x3_kernel(x_ref, w_ref, b_ref, o_ref, *, lay, relu):
    acc = _conv_taps(lambda s, n: x_ref[0, :, s:s + n], w_ref, b_ref,
                     P=lay["P"], L=lay["L"], relu=relu)
    _store_out(o_ref, acc, lay["L"])


# ---------------------------------------------------------------------------
# pallas_call wrappers.
# ---------------------------------------------------------------------------
def _full_spec(shape):
    nd = len(shape)
    return pl.BlockSpec(shape, lambda n, _nd=nd: (0,) * _nd)


def _cost(weights, L, n_steps, inputs, out_nbytes):
    flops = n_steps * sum(2 * int(w.shape[0]) * int(w.shape[1]) * int(L) for w in weights)
    bytes_accessed = sum(int(a.size) * np.dtype(a.dtype).itemsize for a in inputs)
    return pl.CostEstimate(flops=int(flops), transcendentals=0,
                           bytes_accessed=int(bytes_accessed + out_nbytes))


def lr_trunk(xf, mask, params, lay, *, res_scale):
    """Fused head + body (ResBlocks + tail conv + long skip) + first up conv."""
    NB, Cin, TB = xf.shape
    plist = list(params["head"])
    for blk in params["blocks"]:
        plist += list(blk)
    plist += [*params["body_tail"], *params["up"][0]]
    F = params["head"][0].shape[0]
    Cout = params["up"][0][0].shape[0]                       # 4*F

    kernel = functools.partial(
        _lr_trunk_kernel, lay=lay, n_feats=F,
        n_resblocks=len(params["blocks"]), res_scale=float(res_scale))

    in_specs = [pl.BlockSpec((1, Cin, TB), lambda n: (n, 0, 0)),
                _full_spec(mask.shape)]
    # TODO(synk): pipeline_mode=pl.Buffered(1) on the weight specs (constant index_map).
    in_specs += [_full_spec(a.shape) for a in plist]

    cost = _cost(plist[0::2], lay["L"], NB, [xf, mask, *plist], NB * Cout * TB * 2)

    return pl.pallas_call(
        kernel,
        out_shape=jax.ShapeDtypeStruct((NB, Cout, TB), jnp.bfloat16),
        grid=(NB,),
        in_specs=in_specs,
        out_specs=pl.BlockSpec((1, Cout, TB), lambda n: (n, 0, 0)),
        scratch_shapes=[pltpu.VMEM((F, TB), jnp.bfloat16),        # bf16 conv-input staging
                        pltpu.VMEM((F, lay["L"]), jnp.float32),   # x_head (long skip), f32
                        pltpu.VMEM((F, lay["L"]), jnp.float32)],  # running residual, f32
        compiler_params=pltpu.CompilerParams(dimension_semantics=("parallel",)),
        cost_estimate=cost,
    )(xf, mask, *plist)


def conv3x3_flat(xf, w2d, b2d, lay, *, relu=False, out_dtype=jnp.bfloat16):
    """Standalone fused 3x3 'same' conv on a channel-major flat-padded input."""
    NB, Cin, TB = xf.shape
    Cout = w2d.shape[0]
    kernel = functools.partial(_conv3x3_kernel, lay=lay, relu=relu)
    cost = _cost([w2d], lay["L"], NB, [xf, w2d, b2d],
                 NB * Cout * TB * np.dtype(out_dtype).itemsize)
    return pl.pallas_call(
        kernel,
        out_shape=jax.ShapeDtypeStruct((NB, Cout, TB), out_dtype),
        grid=(NB,),
        in_specs=[pl.BlockSpec((1, Cin, TB), lambda n: (n, 0, 0)),
                  _full_spec(w2d.shape), _full_spec(b2d.shape)],
        out_specs=pl.BlockSpec((1, Cout, TB), lambda n: (n, 0, 0)),
        compiler_params=pltpu.CompilerParams(dimension_semantics=("parallel",)),
        cost_estimate=cost,
    )(xf, w2d, b2d)


# ---------------------------------------------------------------------------
# XLA layout glue (small tensors at these shapes).
# ---------------------------------------------------------------------------
def _to_flat(y, B_sub, lay):
    """NCHW (N, C, H, W) -> (N//B_sub, C, TB) bf16 channel-major flat-padded."""
    N, C, Hh, Ww = y.shape
    y = jnp.pad(y, ((0, 0), (0, 0), (1, 1), (1, 1)))
    y = y.reshape(N // B_sub, B_sub, C, lay["S"])
    y = y.transpose(0, 2, 1, 3).reshape(N // B_sub, C, lay["T"])
    y = jnp.pad(y, ((0, 0), (0, 0), (lay["BASE"], 0)))
    return y.astype(jnp.bfloat16)


def _from_flat(o, B_sub, C, Hh, Ww, lay):
    """(N//B_sub, C, TB) -> NCHW (N, C, H, W); drops zero-border / masked positions."""
    NB = o.shape[0]
    o = o[:, :, lay["BASE"]:lay["BASE"] + lay["T"]]
    o = o.reshape(NB, C, B_sub, Hh + 2, Ww + 2)[:, :, :, 1:Hh + 1, 1:Ww + 1]
    return o.transpose(0, 2, 1, 3, 4).reshape(NB * B_sub, C, Hh, Ww)


def _pixel_shuffle_nchw(y, r):
    # TODO(synk): fuse into the upsampler conv's output stores (sub-pixel strided
    # writes into the next stage's flat-padded layout) to kill this HBM round trip.
    N, C, Hh, Ww = y.shape
    c = C // (r * r)
    y = y.reshape(N, c, r, r, Hh, Ww)
    y = y.transpose(0, 1, 4, 2, 5, 3)
    return y.reshape(N, c, Hh * r, Ww * r)


# ---------------------------------------------------------------------------
# Parameters: deterministic synthetic init, kernel layout
# (weights (Cout, 9*Cin) bf16, tap-major / channel-minor; biases (Cout, 1) f32).
# ---------------------------------------------------------------------------
def _conv_param(key, cin, cout, *, pad_cin_to=None):
    k1, k2 = jax.random.split(key)
    w = jax.random.normal(k1, (3, 3, cin, cout), jnp.float32) / math.sqrt(9 * cin)
    b = jax.random.normal(k2, (cout,), jnp.float32) * 0.01
    if pad_cin_to is not None and pad_cin_to > cin:
        w = jnp.pad(w, ((0, 0), (0, 0), (0, pad_cin_to - cin), (0, 0)))
        cin = pad_cin_to
    w2d = w.reshape(9 * cin, cout).T.astype(jnp.bfloat16)    # (Cout, 9*Cin)
    b2d = b.reshape(cout, 1).astype(jnp.float32)             # (Cout, 1)
    return w2d, b2d


def init_edsr_params(key, *, n_colours=3, n_feats=16, n_resblocks=2, scale=4):
    assert scale >= 2 and scale & (scale - 1) == 0, "power-of-two scale only"
    n_up = int(math.log2(scale))
    keys = jax.random.split(key, 3 + 2 * n_resblocks + n_up)
    ki = iter(keys)
    params = {}
    params["head"] = _conv_param(next(ki), n_colours, n_feats,
                                 pad_cin_to=max(_HEAD_CIN, n_colours))
    params["blocks"] = []
    for _ in range(n_resblocks):
        w1, b1 = _conv_param(next(ki), n_feats, n_feats)
        w2, b2 = _conv_param(next(ki), n_feats, n_feats)
        params["blocks"].append((w1, b1, w2, b2))
    params["body_tail"] = _conv_param(next(ki), n_feats, n_feats)
    params["up"] = [_conv_param(next(ki), n_feats, 4 * n_feats) for _ in range(n_up)]
    params["tail"] = _conv_param(next(ki), n_feats, n_colours)
    return params


# ---------------------------------------------------------------------------
# EDSR forward (NCHW in / NCHW out; channel-major everywhere, spatial on lanes).
# ---------------------------------------------------------------------------
def edsr_forward(x_nchw, params, *, res_scale=1.0, batch_block=4):
    N, C, H, W = x_nchw.shape
    F = params["head"][0].shape[0]                 # n_feats
    n_col = params["tail"][0].shape[0]             # n_colours
    head_cin = params["head"][0].shape[1] // 9

    B_sub = max(1, min(batch_block, N))            # images stacked per grid step
    while N % B_sub:
        B_sub -= 1

    # Fused LR trunk: head + all ResBlocks + body-tail conv + long skip + up conv #1.
    lay = _flat_layout(H, W, B_sub)
    mask = _core_mask(H, W, B_sub)
    x = jnp.pad(x_nchw.astype(jnp.float32),
                ((0, 0), (0, head_cin - C), (0, 0), (0, 0)))
    y = lr_trunk(_to_flat(x, B_sub, lay), mask, params, lay, res_scale=res_scale)
    y = _from_flat(y, B_sub, 4 * F, H, W, lay)               # (N, 4F, H, W) bf16
    y = _pixel_shuffle_nchw(y, 2)                            # (N, F, 2H, 2W)
    hh, ww = 2 * H, 2 * W

    # Remaining upsampler stages (conv -> PixelShuffle(2)).
    for (wu, bu) in params["up"][1:]:
        lay = _flat_layout(hh, ww, B_sub)
        y = conv3x3_flat(_to_flat(y, B_sub, lay), wu, bu, lay)
        y = _from_flat(y, B_sub, 4 * F, hh, ww, lay)
        y = _pixel_shuffle_nchw(y, 2)
        hh, ww = 2 * hh, 2 * ww

    # Tail conv back to colour channels: channel-major output == NCHW for free.
    lay = _flat_layout(hh, ww, B_sub)
    tw, tb = params["tail"]
    o = conv3x3_flat(_to_flat(y, B_sub, lay), tw, tb, lay, out_dtype=jnp.float32)
    return _from_flat(o, B_sub, n_col, hh, ww, lay)          # (N, 3, hh, ww) f32


# ---------------------------------------------------------------------------
# Pure-JAX f32 reference (mirrors the PyTorch module exactly).
# ---------------------------------------------------------------------------
def _ref_conv(x, w2d, b2d):
    cout, k9 = w2d.shape
    cin = k9 // 9
    w = w2d.astype(jnp.float32).reshape(cout, 3, 3, cin).transpose(0, 3, 1, 2)  # OIHW
    if x.shape[1] < cin:
        x = jnp.pad(x, ((0, 0), (0, cin - x.shape[1]), (0, 0), (0, 0)))
    y = lax.conv_general_dilated(x, w, (1, 1), "SAME",
                                 dimension_numbers=("NCHW", "OIHW", "NCHW"))
    return y + b2d.reshape(1, cout, 1, 1)


def edsr_reference(x, params, *, res_scale=1.0):
    xh = _ref_conv(x, *params["head"])
    res = xh
    for (w1, b1, w2, b2) in params["blocks"]:
        h = jnp.maximum(_ref_conv(res, w1, b1), 0.0)
        res = _ref_conv(h, w2, b2) * res_scale + res
    res = _ref_conv(res, *params["body_tail"]) + xh
    y = res
    for (wu, bu) in params["up"]:
        y = _pixel_shuffle_nchw(_ref_conv(y, wu, bu), 2)
    return _ref_conv(y, *params["tail"])


if __name__ == "__main__":
    # Small shapes consistent with the module: batch=2, n_colours=3, 8x8 LR input,
    # n_feats=16, n_resblocks=2, scale_factor=4.
    key = jax.random.PRNGKey(0)
    pkey, xkey = jax.random.split(key)

    N, C, H, W = 2, 3, 8, 8
    scale = 4
    params = init_edsr_params(pkey, n_colours=C, n_feats=16, n_resblocks=2, scale=scale)
    x = jax.random.normal(xkey, (N, C, H, W), jnp.float32)

    fwd = jax.jit(edsr_forward)
    out = jax.block_until_ready(fwd(x, params))

    expected = (N, C, H * scale, W * scale)
    assert out.shape == expected, (out.shape, expected)
    assert out.dtype == jnp.float32
    assert bool(jnp.all(jnp.isfinite(out)))

    # Loose sanity check against a pure-JAX f32 reference (kernel path stages
    # activations in bf16, so allow a few % of the output scale).
    x_q = x.astype(jnp.bfloat16).astype(jnp.float32)
    ref = edsr_reference(x_q, params)
    rel = float(jnp.max(jnp.abs(out - ref)) / jnp.maximum(jnp.max(jnp.abs(ref)), 1.0))
    assert rel < 0.1, f"relative error vs reference too large: {rel}"

    print("KERNEL_OK")
</pallas_src>

<mosaic_0001>
module attributes {stable_mosaic.version = 11 : i64} {
  func.func @_lr_trunk_kernel(%arg0: i32, %arg1: memref<1x16x317xbf16, #tpu.memory_space<vmem>>, %arg2: memref<1x178xf32, #tpu.memory_space<vmem>>, %arg3: memref<16x144xbf16, #tpu.memory_space<vmem>>, %arg4: memref<16x1xf32, #tpu.memory_space<vmem>>, %arg5: memref<16x144xbf16, #tpu.memory_space<vmem>>, %arg6: memref<16x1xf32, #tpu.memory_space<vmem>>, %arg7: memref<16x144xbf16, #tpu.memory_space<vmem>>, %arg8: memref<16x1xf32, #tpu.memory_space<vmem>>, %arg9: memref<16x144xbf16, #tpu.memory_space<vmem>>, %arg10: memref<16x1xf32, #tpu.memory_space<vmem>>, %arg11: memref<16x144xbf16, #tpu.memory_space<vmem>>, %arg12: memref<16x1xf32, #tpu.memory_space<vmem>>, %arg13: memref<16x144xbf16, #tpu.memory_space<vmem>>, %arg14: memref<16x1xf32, #tpu.memory_space<vmem>>, %arg15: memref<64x144xbf16, #tpu.memory_space<vmem>>, %arg16: memref<64x1xf32, #tpu.memory_space<vmem>>, %arg17: memref<1x64x317xbf16, #tpu.memory_space<vmem>>, %arg18: memref<16x317xbf16, #tpu.memory_space<vmem>>, %arg19: memref<16x178xf32, #tpu.memory_space<vmem>>, %arg20: memref<16x178xf32, #tpu.memory_space<vmem>>) attributes {dimension_semantics = [#tpu.dimension_semantics<parallel>], iteration_bounds = array<i64: 1>, scalar_prefetch = 0 : i64, scratch_operands = 3 : i64, tpu.core_type = #tpu.core_type<tc>, window_params = [{transform_indices = @transform_0, window_bounds = array<i64: 1, 16, 317>}, {pipeline_mode = #tpu.pipeline_mode<synchronous>, transform_indices = @transform_1, window_bounds = array<i64: 1, 178>}, {pipeline_mode = #tpu.pipeline_mode<synchronous>, transform_indices = @transform_2, window_bounds = array<i64: 16, 144>}, {pipeline_mode = #tpu.pipeline_mode<synchronous>, transform_indices = @transform_3, window_bounds = array<i64: 16, 1>}, {pipeline_mode = #tpu.pipeline_mode<synchronous>, transform_indices = @transform_4, window_bounds = array<i64: 16, 144>}, {pipeline_mode = #tpu.pipeline_mode<synchronous>, transform_indices = @transform_5, window_bounds = array<i64: 16, 1>}, {pipeline_mode = #tpu.pipeline_mode<synchronous>, transform_indices = @transform_6, window_bounds = array<i64: 16, 144>}, {pipeline_mode = #tpu.pipeline_mode<synchronous>, transform_indices = @transform_7, window_bounds = array<i64: 16, 1>}, {pipeline_mode = #tpu.pipeline_mode<synchronous>, transform_indices = @transform_8, window_bounds = array<i64: 16, 144>}, {pipeline_mode = #tpu.pipeline_mode<synchronous>, transform_indices = @transform_9, window_bounds = array<i64: 16, 1>}, {pipeline_mode = #tpu.pipeline_mode<synchronous>, transform_indices = @transform_10, window_bounds = array<i64: 16, 144>}, {pipeline_mode = #tpu.pipeline_mode<synchronous>, transform_indices = @transform_11, window_bounds = array<i64: 16, 1>}, {pipeline_mode = #tpu.pipeline_mode<synchronous>, transform_indices = @transform_12, window_bounds = array<i64: 16, 144>}, {pipeline_mode = #tpu.pipeline_mode<synchronous>, transform_indices = @transform_13, window_bounds = array<i64: 16, 1>}, {pipeline_mode = #tpu.pipeline_mode<synchronous>, transform_indices = @transform_14, window_bounds = array<i64: 64, 144>}, {pipeline_mode = #tpu.pipeline_mode<synchronous>, transform_indices = @transform_15, window_bounds = array<i64: 64, 1>}, {transform_indices = @transform_16, window_bounds = array<i64: 1, 64, 317>}]} {
    %c0 = arith.constant 0 : index
    %c0_0 = arith.constant 0 : index
    %0 = vector.load %arg2[%c0, %c0_0] : memref<1x178xf32, #tpu.memory_space<vmem>>, vector<1x178xf32>
    %cst = arith.constant 0.000000e+00 : bf16
    %1 = vector.broadcast %cst : bf16 to vector<16x128xbf16>
    %c0_1 = arith.constant 0 : index
    %c0_2 = arith.constant 0 : index
    %2 = vector.load %arg18[%c0_1, %c0_2] : memref<16x317xbf16, #tpu.memory_space<vmem>>, vector<16x128xbf16>
    tpu.vector_store %arg18[%c0_1, %c0_2], %1 {strides = array<i32>} : memref<16x317xbf16, #tpu.memory_space<vmem>>, vector<16x128xbf16>,
    %cst_3 = arith.constant 0.000000e+00 : bf16
    %3 = vector.broadcast %cst_3 : bf16 to vector<16x11xbf16>
    %c0_4 = arith.constant 0 : index
    %c306 = arith.constant 306 : index
    %4 = vector.load %arg18[%c0_4, %c306] : memref<16x317xbf16, #tpu.memory_space<vmem>>, vector<16x11xbf16>
    tpu.vector_store %arg18[%c0_4, %c306], %3 {strides = array<i32>} : memref<16x317xbf16, #tpu.memory_space<vmem>>, vector<16x11xbf16>,
    %c0_5 = arith.constant 0 : index
    %c0_6 = arith.constant 0 : index
    %c117 = arith.constant 117 : index
    %5 = vector.load %arg1[%c0_5, %c0_6, %c117] : memref<1x16x317xbf16, #tpu.memory_space<vmem>>, vector<1x16x178xbf16>
    %6 = vector.shape_cast %5 : vector<1x16x178xbf16> to vector<16x178xbf16>
    %c0_7 = arith.constant 0 : index
    %c0_8 = arith.constant 0 : index
    %c118 = arith.constant 118 : index
    %7 = vector.load %arg1[%c0_7, %c0_8, %c118] : memref<1x16x317xbf16, #tpu.memory_space<vmem>>, vector<1x16x178xbf16>
    %8 = vector.shape_cast %7 : vector<1x16x178xbf16> to vector<16x178xbf16>
    %c0_9 = arith.constant 0 : index
    %c0_10 = arith.constant 0 : index
    %c119 = arith.constant 119 : index
    %9 = vector.load %arg1[%c0_9, %c0_10, %c119] : memref<1x16x317xbf16, #tpu.memory_space<vmem>>, vector<1x16x178xbf16>
    %10 = vector.shape_cast %9 : vector<1x16x178xbf16> to vector<16x178xbf16>
    %c0_11 = arith.constant 0 : index
    %c0_12 = arith.constant 0 : index
    %c127 = arith.constant 127 : index
    %11 = vector.load %arg1[%c0_11, %c0_12, %c127] : memref<1x16x317xbf16, #tpu.memory_space<vmem>>, vector<1x16x178xbf16>
    %12 = vector.shape_cast %11 : vector<1x16x178xbf16> to vector<16x178xbf16>
    %c0_13 = arith.constant 0 : index
    %c0_14 = arith.constant 0 : index
    %c128 = arith.constant 128 : index
    %13 = vector.load %arg1[%c0_13, %c0_14, %c128] : memref<1x16x317xbf16, #tpu.memory_space<vmem>>, vector<1x16x178xbf16>
    %14 = vector.shape_cast %13 : vector<1x16x178xbf16> to vector<16x178xbf16>
    %c0_15 = arith.constant 0 : index
    %c0_16 = arith.constant 0 : index
    %c129 = arith.constant 129 : index
    %15 = vector.load %arg1[%c0_15, %c0_16, %c129] : memref<1x16x317xbf16, #tpu.memory_space<vmem>>, vector<1x16x178xbf16>
    %16 = vector.shape_cast %15 : vector<1x16x178xbf16> to vector<16x178xbf16>
    %c0_17 = arith.constant 0 : index
    %c0_18 = arith.constant 0 : index
    %c137 = arith.constant 137 : index
    %17 = vector.load %arg1[%c0_17, %c0_18, %c137] : memref<1x16x317xbf16, #tpu.memory_space<vmem>>, vector<1x16x178xbf16>
    %18 = vector.shape_cast %17 : vector<1x16x178xbf16> to vector<16x178xbf16>
    %c0_19 = arith.constant 0 : index
    %c0_20 = arith.constant 0 : index
    %c138 = arith.constant 138 : index
    %19 = vector.load %arg1[%c0_19, %c0_20, %c138] : memref<1x16x317xbf16, #tpu.memory_space<vmem>>, vector<1x16x178xbf16>
    %20 = vector.shape_cast %19 : vector<1x16x178xbf16> to vector<16x178xbf16>
    %c0_21 = arith.constant 0 : index
    %c0_22 = arith.constant 0 : index
    %c139 = arith.constant 139 : index
    %21 = vector.load %arg1[%c0_21, %c0_22, %c139] : memref<1x16x317xbf16, #tpu.memory_space<vmem>>, vector<1x16x178xbf16>
    %22 = vector.shape_cast %21 : vector<1x16x178xbf16> to vector<16x178xbf16>
    %23 = tpu.concatenate %6, %8, %10, %12, %14, %16, %18, %20, %22 in 0 : vector<16x178xbf16>, vector<16x178xbf16>, vector<16x178xbf16>, vector<16x178xbf16>, vector<16x178xbf16>, vector<16x178xbf16>, vector<16x178xbf16>, vector<16x178xbf16>, vector<16x178xbf16> -> vector<144x178xbf16>
    %c0_23 = arith.constant 0 : index
    %c0_24 = arith.constant 0 : index
    %24 = vector.load %arg3[%c0_23, %c0_24] : memref<16x144xbf16, #tpu.memory_space<vmem>>, vector<16x144xbf16>
    %cst_25 = arith.constant dense<0.000000e+00> : vector<16x178xf32>
    %25 = tpu.matmul %24, %23, %cst_25 {dimension_numbers = #tpu.dot_dimension_numbers<[1], [0], [0], [1], [0, 0, 1, 1], [], []>} : vector<16x144xbf16>, vector<144x178xbf16>, vector<16x178xf32> -> vector<16x178xf32>
    %c0_26 = arith.constant 0 : index
    %c0_27 = arith.constant 0 : index
    %26 = vector.load %arg4[%c0_26, %c0_27] : memref<16x1xf32, #tpu.memory_space<vmem>>, vector<16x1xf32>
    %27 = vector.broadcast %26 : vector<16x1xf32> to vector<16x178xf32>
    %28 = arith.addf %25, %27 : vector<16x178xf32>
    %c0_28 = arith.constant 0 : index
    %c0_29 = arith.constant 0 : index
    %29 = vector.load %arg19[%c0_28, %c0_29] : memref<16x178xf32, #tpu.memory_space<vmem>>, vector<16x178xf32>
    tpu.vector_store %arg19[%c0_28, %c0_29], %28 {strides = array<i32>} : memref<16x178xf32, #tpu.memory_space<vmem>>, vector<16x178xf32>,
    %c0_30 = arith.constant 0 : index
    %c0_31 = arith.constant 0 : index
    %30 = vector.load %arg20[%c0_30, %c0_31] : memref<16x178xf32, #tpu.memory_space<vmem>>, vector<16x178xf32>
    tpu.vector_store %arg20[%c0_30, %c0_31], %28 {strides = array<i32>} : memref<16x178xf32, #tpu.memory_space<vmem>>, vector<16x178xf32>,
    %c0_32 = arith.constant 0 : index
    %c0_33 = arith.constant 0 : index
    %31 = vector.load %arg20[%c0_32, %c0_33] : memref<16x178xf32, #tpu.memory_space<vmem>>, vector<16x178xf32>
    %32 = vector.broadcast %0 : vector<1x178xf32> to vector<16x178xf32>
    %33 = arith.mulf %31, %32 : vector<16x178xf32>
    %34 = arith.truncf %33 : vector<16x178xf32> to vector<16x178xbf16>
    %c0_34 = arith.constant 0 : index
    %c128_35 = arith.constant 128 : index
    %35 = vector.load %arg18[%c0_34, %c128_35] : memref<16x317xbf16, #tpu.memory_space<vmem>>, vector<16x178xbf16>
    tpu.vector_store %arg18[%c0_34, %c128_35], %34 {strides = array<i32>} : memref<16x317xbf16, #tpu.memory_space<vmem>>, vector<16x178xbf16>,
    %c0_36 = arith.constant 0 : index
    %c117_37 = arith.constant 117 : index
    %36 = vector.load %arg18[%c0_36, %c117_37] : memref<16x317xbf16, #tpu.memory_space<vmem>>, vector<16x178xbf16>
    %c0_38 = arith.constant 0 : index
    %c118_39 = arith.constant 118 : index
    %37 = vector.load %arg18[%c0_38, %c118_39] : memref<16x317xbf16, #tpu.memory_space<vmem>>, vector<16x178xbf16>
    %c0_40 = arith.constant 0 : index
    %c119_41 = arith.constant 119 : index
    %38 = vector.load %arg18[%c0_40, %c119_41] : memref<16x317xbf16, #tpu.memory_space<vmem>>, vector<16x178xbf16>
    %c0_42 = arith.constant 0 : index
    %c127_43 = arith.constant 127 : index
    %39 = vector.load %arg18[%c0_42, %c127_43] : memref<16x317xbf16, #tpu.memory_space<vmem>>, vector<16x178xbf16>
    %c0_44 = arith.constant 0 : index
    %c128_45 = arith.constant 128 : index
    %40 = vector.load %arg18[%c0_44, %c128_45] : memref<16x317xbf16, #tpu.memory_space<vmem>>, vector<16x178xbf16>
    %c0_46 = arith.constant 0 : index
    %c129_47 = arith.constant 129 : index
    %41 = vector.load %arg18[%c0_46, %c129_47] : memref<16x317xbf16, #tpu.memory_space<vmem>>, vector<16x178xbf16>
    %c0_48 = arith.constant 0 : index
    %c137_49 = arith.constant 137 : index
    %42 = vector.load %arg18[%c0_48, %c137_49] : memref<16x317xbf16, #tpu.memory_space<vmem>>, vector<16x178xbf16>
    %c0_50 = arith.constant 0 : index
    %c138_51 = arith.constant 138 : index
    %43 = vector.load %arg18[%c0_50, %c138_51] : memref<16x317xbf16, #tpu.memory_space<vmem>>, vector<16x178xbf16>
    %c0_52 = arith.constant 0 : index
    %c139_53 = arith.constant 139 : index
    %44 = vector.load %arg18[%c0_52, %c139_53] : memref<16x317xbf16, #tpu.memory_space<vmem>>, vector<16x178xbf16>
    %45 = tpu.concatenate %36, %37, %38, %39, %40, %41, %42, %43, %44 in 0 : vector<16x178xbf16>, vector<16x178xbf16>, vector<16x178xbf16>, vector<16x178xbf16>, vector<16x178xbf16>, vector<16x178xbf16>, vector<16x178xbf16>, vector<16x178xbf16>, vector<16x178xbf16> -> vector<144x178xbf16>
    %c0_54 = arith.constant 0 : index
    %c0_55 = arith.constant 0 : index
    %46 = vector.load %arg5[%c0_54, %c0_55] : memref<16x144xbf16, #tpu.memory_space<vmem>>, vector<16x144xbf16>
    %cst_56 = arith.constant dense<0.000000e+00> : vector<16x178xf32>
    %47 = tpu.matmul %46, %45, %cst_56 {dimension_numbers = #tpu.dot_dimension_numbers<[1], [0], [0], [1], [0, 0, 1, 1], [], []>} : vector<16x144xbf16>, vector<144x178xbf16>, vector<16x178xf32> -> vector<16x178xf32>
    %c0_57 = arith.constant 0 : index
    %c0_58 = arith.constant 0 : index
    %48 = vector.load %arg6[%c0_57, %c0_58] : memref<16x1xf32, #tpu.memory_space<vmem>>, vector<16x1xf32>
    %49 = vector.broadcast %48 : vector<16x1xf32> to vector<16x178xf32>
    %50 = arith.addf %47, %49 : vector<16x178xf32>
    %cst_59 = arith.constant 0.000000e+00 : f32
    %51 = vector.broadcast %cst_59 : f32 to vector<16x178xf32>
    %52 = arith.maximumf %50, %51 : vector<16x178xf32>
    %53 = vector.broadcast %0 : vector<1x178xf32> to vector<16x178xf32>
    %54 = arith.mulf %52, %53 : vector<16x178xf32>
    %55 = arith.truncf %54 : vector<16x178xf32> to vector<16x178xbf16>
    %c0_60 = arith.constant 0 : index
    %c128_61 = arith.constant 128 : index
    %56 = vector.load %arg18[%c0_60, %c128_61] : memref<16x317xbf16, #tpu.memory_space<vmem>>, vector<16x178xbf16>
    tpu.vector_store %arg18[%c0_60, %c128_61], %55 {strides = array<i32>} : memref<16x317xbf16, #tpu.memory_space<vmem>>, vector<16x178xbf16>,
    %c0_62 = arith.constant 0 : index
    %c117_63 = arith.constant 117 : index
    %57 = vector.load %arg18[%c0_62, %c117_63] : memref<16x317xbf16, #tpu.memory_space<vmem>>, vector<16x178xbf16>
    %c0_64 = arith.constant 0 : index
    %c118_65 = arith.constant 118 : index
    %58 = vector.load %arg18[%c0_64, %c118_65] : memref<16x317xbf16, #tpu.memory_space<vmem>>, vector<16x178xbf16>
    %c0_66 = arith.constant 0 : index
    %c119_67 = arith.constant 119 : index
    %59 = vector.load %arg18[%c0_66, %c119_67] : memref<16x317xbf16, #tpu.memory_space<vmem>>, vector<16x178xbf16>
    %c0_68 = arith.constant 0 : index
    %c127_69 = arith.constant 127 : index
    %60 = vector.load %arg18[%c0_68, %c127_69] : memref<16x317xbf16, #tpu.memory_space<vmem>>, vector<16x178xbf16>
    %c0_70 = arith.constant 0 : index
    %c128_71 = arith.constant 128 : index
    %61 = vector.load %arg18[%c0_70, %c128_71] : memref<16x317xbf16, #tpu.memory_space<vmem>>, vector<16x178xbf16>
    %c0_72 = arith.constant 0 : index
    %c129_73 = arith.constant 129 : index
    %62 = vector.load %arg18[%c0_72, %c129_73] : memref<16x317xbf16, #tpu.memory_space<vmem>>, vector<16x178xbf16>
    %c0_74 = arith.constant 0 : index
    %c137_75 = arith.constant 137 : index
    %63 = vector.load %arg18[%c0_74, %c137_75] : memref<16x317xbf16, #tpu.memory_space<vmem>>, vector<16x178xbf16>
    %c0_76 = arith.constant 0 : index
    %c138_77 = arith.constant 138 : index
    %64 = vector.load %arg18[%c0_76, %c138_77] : memref<16x317xbf16, #tpu.memory_space<vmem>>, vector<16x178xbf16>
    %c0_78 = arith.constant 0 : index
    %c139_79 = arith.constant 139 : index
    %65 = vector.load %arg18[%c0_78, %c139_79] : memref<16x317xbf16, #tpu.memory_space<vmem>>, vector<16x178xbf16>
    %66 = tpu.concatenate %57, %58, %59, %60, %61, %62, %63, %64, %65 in 0 : vector<16x178xbf16>, vector<16x178xbf16>, vector<16x178xbf16>, vector<16x178xbf16>, vector<16x178xbf16>, vector<16x178xbf16>, vector<16x178xbf16>, vector<16x178xbf16>, vector<16x178xbf16> -> vector<144x178xbf16>
    %c0_80 = arith.constant 0 : index
    %c0_81 = arith.constant 0 : index
    %67 = vector.load %arg7[%c0_80, %c0_81] : memref<16x144xbf16, #tpu.memory_space<vmem>>, vector<16x144xbf16>
    %cst_82 = arith.constant dense<0.000000e+00> : vector<16x178xf32>
    %68 = tpu.matmul %67, %66, %cst_82 {dimension_numbers = #tpu.dot_dimension_numbers<[1], [0], [0], [1], [0, 0, 1, 1], [], []>} : vector<16x144xbf16>, vector<144x178xbf16>, vector<16x178xf32> -> vector<16x178xf32>
    %c0_83 = arith.constant 0 : index
    %c0_84 = arith.constant 0 : index
    %69 = vector.load %arg8[%c0_83, %c0_84] : memref<16x1xf32, #tpu.memory_space<vmem>>, vector<16x1xf32>
    %70 = vector.broadcast %69 : vector<16x1xf32> to vector<16x178xf32>
    %71 = arith.addf %68, %70 : vector<16x178xf32>
    %cst_85 = arith.constant 1.000000e+00 : f32
    %72 = vector.broadcast %cst_85 : f32 to vector<16x178xf32>
    %73 = arith.mulf %71, %72 : vector<16x178xf32>
    %c0_86 = arith.constant 0 : index
    %c0_87 = arith.constant 0 : index
    %74 = vector.load %arg20[%c0_86, %c0_87] : memref<16x178xf32, #tpu.memory_space<vmem>>, vector<16x178xf32>
    %75 = arith.addf %73, %74 : vector<16x178xf32>
    %c0_88 = arith.constant 0 : index
    %c0_89 = arith.constant 0 : index
    %76 = vector.load %arg20[%c0_88, %c0_89] : memref<16x178xf32, #tpu.memory_space<vmem>>, vector<16x178xf32>
    tpu.vector_store %arg20[%c0_88, %c0_89], %75 {strides = array<i32>} : memref<16x178xf32, #tpu.memory_space<vmem>>, vector<16x178xf32>,
    %c0_90 = arith.constant 0 : index
    %c0_91 = arith.constant 0 : index
    %77 = vector.load %arg20[%c0_90, %c0_91] : memref<16x178xf32, #tpu.memory_space<vmem>>, vector<16x178xf32>
    %78 = vector.broadcast %0 : vector<1x178xf32> to vector<16x178xf32>
    %79 = arith.mulf %77, %78 : vector<16x178xf32>
    %80 = arith.truncf %79 : vector<16x178xf32> to vector<16x178xbf16>
    %c0_92 = arith.constant 0 : index
    %c128_93 = arith.constant 128 : index
    %81 = vector.load %arg18[%c0_92, %c128_93] : memref<16x317xbf16, #tpu.memory_space<vmem>>, vector<16x178xbf16>
    tpu.vector_store %arg18[%c0_92, %c128_93], %80 {strides = array<i32>} : memref<16x317xbf16, #tpu.memory_space<vmem>>, vector<16x178xbf16>,
    %c0_94 = arith.constant 0 : index
    %c117_95 = arith.constant 117 : index
    %82 = vector.load %arg18[%c0_94, %c117_95] : memref<16x317xbf16, #tpu.memory_space<vmem>>, vector<16x178xbf16>
    %c0_96 = arith.constant 0 : index
    %c118_97 = arith.constant 118 : index
    %83 = vector.load %arg18[%c0_96, %c118_97] : memref<16x317xbf16, #tpu.memory_space<vmem>>, vector<16x178xbf16>
    %c0_98 = arith.constant 0 : index
    %c119_99 = arith.constant 119 : index
    %84 = vector.load %arg18[%c0_98, %c119_99] : memref<16x317xbf16, #tpu.memory_space<vmem>>, vector<16x178xbf16>
    %c0_100 = arith.constant 0 : index
    %c127_101 = arith.constant 127 : index
    %85 = vector.load %arg18[%c0_100, %c127_101] : memref<16x317xbf16, #tpu.memory_space<vmem>>, vector<16x178xbf16>
    %c0_102 = arith.constant 0 : index
    %c128_103 = arith.constant 128 : index
    %86 = vector.load %arg18[%c0_102, %c128_103] : memref<16x317xbf16, #tpu.memory_space<vmem>>, vector<16x178xbf16>
    %c0_104 = arith.constant 0 : index
    %c129_105 = arith.constant 129 : index
    %87 = vector.load %arg18[%c0_104, %c129_105] : memref<16x317xbf16, #tpu.memory_space<vmem>>, vector<16x178xbf16>
    %c0_106 = arith.constant 0 : index
    %c137_107 = arith.constant 137 : index
    %88 = vector.load %arg18[%c0_106, %c137_107] : memref<16x317xbf16, #tpu.memory_space<vmem>>, vector<16x178xbf16>
    %c0_108 = arith.constant 0 : index
    %c138_109 = arith.constant 138 : index
    %89 = vector.load %arg18[%c0_108, %c138_109] : memref<16x317xbf16, #tpu.memory_space<vmem>>, vector<16x178xbf16>
    %c0_110 = arith.constant 0 : index
    %c139_111 = arith.constant 139 : index
    %90 = vector.load %arg18[%c0_110, %c139_111] : memref<16x317xbf16, #tpu.memory_space<vmem>>, vector<16x178xbf16>
    %91 = tpu.concatenate %82, %83, %84, %85, %86, %87, %88, %89, %90 in 0 : vector<16x178xbf16>, vector<16x178xbf16>, vector<16x178xbf16>, vector<16x178xbf16>, vector<16x178xbf16>, vector<16x178xbf16>, vector<16x178xbf16>, vector<16x178xbf16>, vector<16x178xbf16> -> vector<144x178xbf16>
    %c0_112 = arith.constant 0 : index
    %c0_113 = arith.constant 0 : index
    %92 = vector.load %arg9[%c0_112, %c0_113] : memref<16x144xbf16, #tpu.memory_space<vmem>>, vector<16x144xbf16>
    %cst_114 = arith.constant dense<0.000000e+00> : vector<16x178xf32>
    %93 = tpu.matmul %92, %91, %cst_114 {dimension_numbers = #tpu.dot_dimension_numbers<[1], [0], [0], [1], [0, 0, 1, 1], [], []>} : vector<16x144xbf16>, vector<144x178xbf16>, vector<16x178xf32> -> vector<16x178xf32>
    %c0_115 = arith.constant 0 : index
    %c0_116 = arith.constant 0 : index
    %94 = vector.load %arg10[%c0_115, %c0_116] : memref<16x1xf32, #tpu.memory_space<vmem>>, vector<16x1xf32>
    %95 = vector.broadcast %94 : vector<16x1xf32> to vector<16x178xf32>
    %96 = arith.addf %93, %95 : vector<16x178xf32>
    %cst_117 = arith.constant 0.000000e+00 : f32
    %97 = vector.broadcast %cst_117 : f32 to vector<16x178xf32>
    %98 = arith.maximumf %96, %97 : vector<16x178xf32>
    %99 = vector.broadcast %0 : vector<1x178xf32> to vector<16x178xf32>
    %100 = arith.mulf %98, %99 : vector<16x178xf32>
    %101 = arith.truncf %100 : vector<16x178xf32> to vector<16x178xbf16>
    %c0_118 = arith.constant 0 : index
    %c128_119 = arith.constant 128 : index
    %102 = vector.load %arg18[%c0_118, %c128_119] : memref<16x317xbf16, #tpu.memory_space<vmem>>, vector<16x178xbf16>
    tpu.vector_store %arg18[%c0_118, %c128_119], %101 {strides = array<i32>} : memref<16x317xbf16, #tpu.memory_space<vmem>>, vector<16x178xbf16>,
    %c0_120 = arith.constant 0 : index
    %c117_121 = arith.constant 117 : index
    %103 = vector.load %arg18[%c0_120, %c117_121] : memref<16x317xbf16, #tpu.memory_space<vmem>>, vector<16x178xbf16>
    %c0_122 = arith.constant 0 : index
    %c118_123 = arith.constant 118 : index
    %104 = vector.load %arg18[%c0_122, %c118_123] : memref<16x317xbf16, #tpu.memory_space<vmem>>, vector<16x178xbf16>
    %c0_124 = arith.constant 0 : index
    %c119_125 = arith.constant 119 : index
    %105 = vector.load %arg18[%c0_124, %c119_125] : memref<16x317xbf16, #tpu.memory_space<vmem>>, vector<16x178xbf16>
    %c0_126 = arith.constant 0 : index
    %c127_127 = arith.constant 127 : index
    %106 = vector.load %arg18[%c0_126, %c127_127] : memref<16x317xbf16, #tpu.memory_space<vmem>>, vector<16x178xbf16>
    %c0_128 = arith.constant 0 : index
    %c128_129 = arith.constant 128 : index
    %107 = vector.load %arg18[%c0_128, %c128_129] : memref<16x317xbf16, #tpu.memory_space<vmem>>, vector<16x178xbf16>
    %c0_130 = arith.constant 0 : index
    %c129_131 = arith.constant 129 : index
    %108 = vector.load %arg18[%c0_130, %c129_131] : memref<16x317xbf16, #tpu.memory_space<vmem>>, vector<16x178xbf16>
    %c0_132 = arith.constant 0 : index
    %c137_133 = arith.constant 137 : index
    %109 = vector.load %arg18[%c0_132, %c137_133] : memref<16x317xbf16, #tpu.memory_space<vmem>>, vector<16x178xbf16>
    %c0_134 = arith.constant 0 : index
    %c138_135 = arith.constant 138 : index
    %110 = vector.load %arg18[%c0_134, %c138_135] : memref<16x317xbf16, #tpu.memory_space<vmem>>, vector<16x178xbf16>
    %c0_136 = arith.constant 0 : index
    %c139_137 = arith.constant 139 : index
    %111 = vector.load %arg18[%c0_136, %c139_137] : memref<16x317xbf16, #tpu.memory_space<vmem>>, vector<16x178xbf16>
    %112 = tpu.concatenate %103, %104, %105, %106, %107, %108, %109, %110, %111 in 0 : vector<16x178xbf16>, vector<16x178xbf16>, vector<16x178xbf16>, vector<16x178xbf16>, vector<16x178xbf16>, vector<16x178xbf16>, vector<16x178xbf16>, vector<16x178xbf16>, vector<16x178xbf16> -> vector<144x178xbf16>
    %c0_138 = arith.constant 0 : index
    %c0_139 = arith.constant 0 : index
    %113 = vector.load %arg11[%c0_138, %c0_139] : memref<16x144xbf16, #tpu.memory_space<vmem>>, vector<16x144xbf16>
    %cst_140 = arith.constant dense<0.000000e+00> : vector<16x178xf32>
    %114 = tpu.matmul %113, %112, %cst_140 {dimension_numbers = #tpu.dot_dimension_numbers<[1], [0], [0], [1], [0, 0, 1, 1], [], []>} : vector<16x144xbf16>, vector<144x178xbf16>, vector<16x178xf32> -> vector<16x178xf32>
    %c0_141 = arith.constant 0 : index
    %c0_142 = arith.constant 0 : index
    %115 = vector.load %arg12[%c0_141, %c0_142] : memref<16x1xf32, #tpu.memory_space<vmem>>, vector<16x1xf32>
    %116 = vector.broadcast %115 : vector<16x1xf32> to vector<16x178xf32>
    %117 = arith.addf %114, %116 : vector<16x178xf32>
    %cst_143 = arith.constant 1.000000e+00 : f32
    %118 = vector.broadcast %cst_143 : f32 to vector<16x178xf32>
    %119 = arith.mulf %117, %118 : vector<16x178xf32>
    %c0_144 = arith.constant 0 : index
    %c0_145 = arith.constant 0 : index
    %120 = vector.load %arg20[%c0_144, %c0_145] : memref<16x178xf32, #tpu.memory_space<vmem>>, vector<16x178xf32>
    %121 = arith.addf %119, %120 : vector<16x178xf32>
    %c0_146 = arith.constant 0 : index
    %c0_147 = arith.constant 0 : index
    %122 = vector.load %arg20[%c0_146, %c0_147] : memref<16x178xf32, #tpu.memory_space<vmem>>, vector<16x178xf32>
    tpu.vector_store %arg20[%c0_146, %c0_147], %121 {strides = array<i32>} : memref<16x178xf32, #tpu.memory_space<vmem>>, vector<16x178xf32>,
    %c0_148 = arith.constant 0 : index
    %c0_149 = arith.constant 0 : index
    %123 = vector.load %arg20[%c0_148, %c0_149] : memref<16x178xf32, #tpu.memory_space<vmem>>, vector<16x178xf32>
    %124 = vector.broadcast %0 : vector<1x178xf32> to vector<16x178xf32>
    %125 = arith.mulf %123, %124 : vector<16x178xf32>
    %126 = arith.truncf %125 : vector<16x178xf32> to vector<16x178xbf16>
    %c0_150 = arith.constant 0 : index
    %c128_151 = arith.constant 128 : index
    %127 = vector.load %arg18[%c0_150, %c128_151] : memref<16x317xbf16, #tpu.memory_space<vmem>>, vector<16x178xbf16>
    tpu.vector_store %arg18[%c0_150, %c128_151], %126 {strides = array<i32>} : memref<16x317xbf16, #tpu.memory_space<vmem>>, vector<16x178xbf16>,
    %c0_152 = arith.constant 0 : index
    %c117_153 = arith.constant 117 : index
    %128 = vector.load %arg18[%c0_152, %c117_153] : memref<16x317xbf16, #tpu.memory_space<vmem>>, vector<16x178xbf16>
    %c0_154 = arith.constant 0 : index
    %c118_155 = arith.constant 118 : index
    %129 = vector.load %arg18[%c0_154, %c118_155] : memref<16x317xbf16, #tpu.memory_space<vmem>>, vector<16x178xbf16>
    %c0_156 = arith.constant 0 : index
    %c119_157 = arith.constant 119 : index
    %130 = vector.load %arg18[%c0_156, %c119_157] : memref<16x317xbf16, #tpu.memory_space<vmem>>, vector<16x178xbf16>
    %c0_158 = arith.constant 0 : index
    %c127_159 = arith.constant 127 : index
    %131 = vector.load %arg18[%c0_158, %c127_159] : memref<16x317xbf16, #tpu.memory_space<vmem>>, vector<16x178xbf16>
    %c0_160 = arith.constant 0 : index
    %c128_161 = arith.constant 128 : index
    %132 = vector.load %arg18[%c0_160, %c128_161] : memref<16x317xbf16, #tpu.memory_space<vmem>>, vector<16x178xbf16>
    %c0_162 = arith.constant 0 : index
    %c129_163 = arith.constant 129 : index
    %133 = vector.load %arg18[%c0_162, %c129_163] : memref<16x317xbf16, #tpu.memory_space<vmem>>, vector<16x178xbf16>
    %c0_164 = arith.constant 0 : index
    %c137_165 = arith.constant 137 : index
    %134 = vector.load %arg18[%c0_164, %c137_165] : memref<16x317xbf16, #tpu.memory_space<vmem>>, vector<16x178xbf16>
    %c0_166 = arith.constant 0 : index
    %c138_167 = arith.constant 138 : index
    %135 = vector.load %arg18[%c0_166, %c138_167] : memref<16x317xbf16, #tpu.memory_space<vmem>>, vector<16x178xbf16>
    %c0_168 = arith.constant 0 : index
    %c139_169 = arith.constant 139 : index
    %136 = vector.load %arg18[%c0_168, %c139_169] : memref<16x317xbf16, #tpu.memory_space<vmem>>, vector<16x178xbf16>
    %137 = tpu.concatenate %128, %129, %130, %131, %132, %133, %134, %135, %136 in 0 : vector<16x178xbf16>, vector<16x178xbf16>, vector<16x178xbf16>, vector<16x178xbf16>, vector<16x178xbf16>, vector<16x178xbf16>, vector<16x178xbf16>, vector<16x178xbf16>, vector<16x178xbf16> -> vector<144x178xbf16>
    %c0_170 = arith.constant 0 : index
    %c0_171 = arith.constant 0 : index
    %138 = vector.load %arg13[%c0_170, %c0_171] : memref<16x144xbf16, #tpu.memory_space<vmem>>, vector<16x144xbf16>
    %cst_172 = arith.constant dense<0.000000e+00> : vector<16x178xf32>
    %139 = tpu.matmul %138, %137, %cst_172 {dimension_numbers = #tpu.dot_dimension_numbers<[1], [0], [0], [1], [0, 0, 1, 1], [], []>} : vector<16x144xbf16>, vector<144x178xbf16>, vector<16x178xf32> -> vector<16x178xf32>
    %c0_173 = arith.constant 0 : index
    %c0_174 = arith.constant 0 : index
    %140 = vector.load %arg14[%c0_173, %c0_174] : memref<16x1xf32, #tpu.memory_space<vmem>>, vector<16x1xf32>
    %141 = vector.broadcast %140 : vector<16x1xf32> to vector<16x178xf32>
    %142 = arith.addf %139, %141 : vector<16x178xf32>
    %c0_175 = arith.constant 0 : index
    %c0_176 = arith.constant 0 : index
    %143 = vector.load %arg19[%c0_175, %c0_176] : memref<16x178xf32, #tpu.memory_space<vmem>>, vector<16x178xf32>
    %144 = arith.addf %142, %143 : vector<16x178xf32>
    %c0_177 = arith.constant 0 : index
    %c0_178 = arith.constant 0 : index
    %145 = vector.load %arg20[%c0_177, %c0_178] : memref<16x178xf32, #tpu.memory_space<vmem>>, vector<16x178xf32>
    tpu.vector_store %arg20[%c0_177, %c0_178], %144 {strides = array<i32>} : memref<16x178xf32, #tpu.memory_space<vmem>>, vector<16x178xf32>,
    %c0_179 = arith.constant 0 : index
    %c0_180 = arith.constant 0 : index
    %146 = vector.load %arg20[%c0_179, %c0_180] : memref<16x178xf32, #tpu.memory_space<vmem>>, vector<16x178xf32>
    %147 = vector.broadcast %0 : vector<1x178xf32> to vector<16x178xf32>
    %148 = arith.mulf %146, %147 : vector<16x178xf32>
    %149 = arith.truncf %148 : vector<16x178xf32> to vector<16x178xbf16>
    %c0_181 = arith.constant 0 : index
    %c128_182 = arith.constant 128 : index
    %150 = vector.load %arg18[%c0_181, %c128_182] : memref<16x317xbf16, #tpu.memory_space<vmem>>, vector<16x178xbf16>
    tpu.vector_store %arg18[%c0_181, %c128_182], %149 {strides = array<i32>} : memref<16x317xbf16, #tpu.memory_space<vmem>>, vector<16x178xbf16>,
    %c0_183 = arith.constant 0 : index
    %c117_184 = arith.constant 117 : index
    %151 = vector.load %arg18[%c0_183, %c117_184] : memref<16x317xbf16, #tpu.memory_space<vmem>>, vector<16x178xbf16>
    %c0_185 = arith.constant 0 : index
    %c118_186 = arith.constant 118 : index
    %152 = vector.load %arg18[%c0_185, %c118_186] : memref<16x317xbf16, #tpu.memory_space<vmem>>, vector<16x178xbf16>
    %c0_187 = arith.constant 0 : index
    %c119_188 = arith.constant 119 : index
    %153 = vector.load %arg18[%c0_187, %c119_188] : memref<16x317xbf16, #tpu.memory_space<vmem>>, vector<16x178xbf16>
    %c0_189 = arith.constant 0 : index
    %c127_190 = arith.constant 127 : index
    %154 = vector.load %arg18[%c0_189, %c127_190] : memref<16x317xbf16, #tpu.memory_space<vmem>>, vector<16x178xbf16>
    %c0_191 = arith.constant 0 : index
    %c128_192 = arith.constant 128 : index
    %155 = vector.load %arg18[%c0_191, %c128_192] : memref<16x317xbf16, #tpu.memory_space<vmem>>, vector<16x178xbf16>
    %c0_193 = arith.constant 0 : index
    %c129_194 = arith.constant 129 : index
    %156 = vector.load %arg18[%c0_193, %c129_194] : memref<16x317xbf16, #tpu.memory_space<vmem>>, vector<16x178xbf16>
    %c0_195 = arith.constant 0 : index
    %c137_196 = arith.constant 137 : index
    %157 = vector.load %arg18[%c0_195, %c137_196] : memref<16x317xbf16, #tpu.memory_space<vmem>>, vector<16x178xbf16>
    %c0_197 = arith.constant 0 : index
    %c138_198 = arith.constant 138 : index
    %158 = vector.load %arg18[%c0_197, %c138_198] : memref<16x317xbf16, #tpu.memory_space<vmem>>, vector<16x178xbf16>
    %c0_199 = arith.constant 0 : index
    %c139_200 = arith.constant 139 : index
    %159 = vector.load %arg18[%c0_199, %c139_200] : memref<16x317xbf16, #tpu.memory_space<vmem>>, vector<16x178xbf16>
    %160 = tpu.concatenate %151, %152, %153, %154, %155, %156, %157, %158, %159 in 0 : vector<16x178xbf16>, vector<16x178xbf16>, vector<16x178xbf16>, vector<16x178xbf16>, vector<16x178xbf16>, vector<16x178xbf16>, vector<16x178xbf16>, vector<16x178xbf16>, vector<16x178xbf16> -> vector<144x178xbf16>
    %c0_201 = arith.constant 0 : index
    %c0_202 = arith.constant 0 : index
    %161 = vector.load %arg15[%c0_201, %c0_202] : memref<64x144xbf16, #tpu.memory_space<vmem>>, vector<64x144xbf16>
    %cst_203 = arith.constant dense<0.000000e+00> : vector<64x178xf32>
    %162 = tpu.matmul %161, %160, %cst_203 {dimension_numbers = #tpu.dot_dimension_numbers<[1], [0], [0], [1], [0, 0, 1, 1], [], []>} : vector<64x144xbf16>, vector<144x178xbf16>, vector<64x178xf32> -> vector<64x178xf32>
    %c0_204 = arith.constant 0 : index
    %c0_205 = arith.constant 0 : index
    %163 = vector.load %arg16[%c0_204, %c0_205] : memref<64x1xf32, #tpu.memory_space<vmem>>, vector<64x1xf32>
    %164 = vector.broadcast %163 : vector<64x1xf32> to vector<64x178xf32>
    %165 = arith.addf %162, %164 : vector<64x178xf32>
    %cst_206 = arith.constant 0.000000e+00 : bf16
    %166 = vector.broadcast %cst_206 : bf16 to vector<64x128xbf16>
    %c0_207 = arith.constant 0 : index
    %c0_208 = arith.constant 0 : index
    %c0_209 = arith.constant 0 : index
    %167 = vector.load %arg17[%c0_207, %c0_208, %c0_209] : memref<1x64x317xbf16, #tpu.memory_space<vmem>>, vector<1x64x128xbf16>
    %168 = vector.shape_cast %167 : vector<1x64x128xbf16> to vector<64x128xbf16>
    %169 = vector.shape_cast %166 : vector<64x128xbf16> to vector<1x64x128xbf16>
    tpu.vector_store %arg17[%c0_207, %c0_208, %c0_209], %169 {strides = array<i32>} : memref<1x64x317xbf16, #tpu.memory_space<vmem>>, vector<1x64x128xbf16>,
    %cst_210 = arith.constant 0.000000e+00 : bf16
    %170 = vector.broadcast %cst_210 : bf16 to vector<64x11xbf16>
    %c0_211 = arith.constant 0 : index
    %c0_212 = arith.constant 0 : index
    %c306_213 = arith.constant 306 : index
    %171 = vector.load %arg17[%c0_211, %c0_212, %c306_213] : memref<1x64x317xbf16, #tpu.memory_space<vmem>>, vector<1x64x11xbf16>
    %172 = vector.shape_cast %171 : vector<1x64x11xbf16> to vector<64x11xbf16>
    %173 = vector.shape_cast %170 : vector<64x11xbf16> to vector<1x64x11xbf16>
    tpu.vector_store %arg17[%c0_211, %c0_212, %c306_213], %173 {strides = array<i32>} : memref<1x64x317xbf16, #tpu.memory_space<vmem>>, vector<1x64x11xbf16>,
    %174 = arith.truncf %165 : vector<64x178xf32> to vector<64x178xbf16>
    %c0_214 = arith.constant 0 : index
    %c0_215 = arith.constant 0 : index
    %c128_216 = arith.constant 128 : index
    %175 = vector.load %arg17[%c0_214, %c0_215, %c128_216] : memref<1x64x317xbf16, #tpu.memory_space<vmem>>, vector<1x64x178xbf16>
    %176 = vector.shape_cast %175 : vector<1x64x178xbf16> to vector<64x178xbf16>
    %177 = vector.shape_cast %174 : vector<64x178xbf16> to vector<1x64x178xbf16>
    tpu.vector_store %arg17[%c0_214, %c0_215, %c128_216], %177 {strides = array<i32>} : memref<1x64x317xbf16, #tpu.memory_space<vmem>>, vector<1x64x178xbf16>,
    return
  }
  func.func @transform_0(%arg0: i32) -> (i32, i32, i32) {
    %c0_i32 = arith.constant 0 : i32
    %c0_i32_0 = arith.constant 0 : i32
    %c0_i32_1 = arith.constant 0 : i32
    return %arg0, %c0_i32, %c0_i32_0 : i32, i32, i32
  }
  func.func @transform_1(%arg0: i32) -> (i32, i32) {
    %c0_i32 = arith.constant 0 : i32
    %c0_i32_0 = arith.constant 0 : i32
    %c0_i32_1 = arith.constant 0 : i32
    return %c0_i32, %c0_i32_0 : i32, i32
  }
  func.func @transform_2(%arg0: i32) -> (i32, i32) {
    %c0_i32 = arith.constant 0 : i32
    %c0_i32_0 = arith.constant 0 : i32
    %c0_i32_1 = arith.constant 0 : i32
    return %c0_i32, %c0_i32_0 : i32, i32
  }
  func.func @transform_3(%arg0: i32) -> (i32, i32) {
    %c0_i32 = arith.constant 0 : i32
    %c0_i32_0 = arith.constant 0 : i32
    %c0_i32_1 = arith.constant 0 : i32
    return %c0_i32, %c0_i32_0 : i32, i32
  }
  func.func @transform_4(%arg0: i32) -> (i32, i32) {
    %c0_i32 = arith.constant 0 : i32
    %c0_i32_0 = arith.constant 0 : i32
    %c0_i32_1 = arith.constant 0 : i32
    return %c0_i32, %c0_i32_0 : i32, i32
  }
  func.func @transform_5(%arg0: i32) -> (i32, i32) {
    %c0_i32 = arith.constant 0 : i32
    %c0_i32_0 = arith.constant 0 : i32
    %c0_i32_1 = arith.constant 0 : i32
    return %c0_i32, %c0_i32_0 : i32, i32
  }
  func.func @transform_6(%arg0: i32) -> (i32, i32) {
    %c0_i32 = arith.constant 0 : i32
    %c0_i32_0 = arith.constant 0 : i32
    %c0_i32_1 = arith.constant 0 : i32
    return %c0_i32, %c0_i32_0 : i32, i32
  }
  func.func @transform_7(%arg0: i32) -> (i32, i32) {
    %c0_i32 = arith.constant 0 : i32
    %c0_i32_0 = arith.constant 0 : i32
    %c0_i32_1 = arith.constant 0 : i32
    return %c0_i32, %c0_i32_0 : i32, i32
  }
  func.func @transform_8(%arg0: i32) -> (i32, i32) {
    %c0_i32 = arith.constant 0 : i32
    %c0_i32_0 = arith.constant 0 : i32
    %c0_i32_1 = arith.constant 0 : i32
    return %c0_i32, %c0_i32_0 : i32, i32
  }
  func.func @transform_9(%arg0: i32) -> (i32, i32) {
    %c0_i32 = arith.constant 0 : i32
    %c0_i32_0 = arith.constant 0 : i32
    %c0_i32_1 = arith.constant 0 : i32
    return %c0_i32, %c0_i32_0 : i32, i32
  }
  func.func @transform_10(%arg0: i32) -> (i32, i32) {
    %c0_i32 = arith.constant 0 : i32
    %c0_i32_0 = arith.constant 0 : i32
    %c0_i32_1 = arith.constant 0 : i32
    return %c0_i32, %c0_i32_0 : i32, i32
  }
  func.func @transform_11(%arg0: i32) -> (i32, i32) {
    %c0_i32 = arith.constant 0 : i32
    %c0_i32_0 = arith.constant 0 : i32
    %c0_i32_1 = arith.constant 0 : i32
    return %c0_i32, %c0_i32_0 : i32, i32
  }
  func.func @transform_12(%arg0: i32) -> (i32, i32) {
    %c0_i32 = arith.constant 0 : i32
    %c0_i32_0 = arith.constant 0 : i32
    %c0_i32_1 = arith.constant 0 : i32
    return %c0_i32, %c0_i32_0 : i32, i32
  }
  func.func @transform_13(%arg0: i32) -> (i32, i32) {
    %c0_i32 = arith.constant 0 : i32
    %c0_i32_0 = arith.constant 0 : i32
    %c0_i32_1 = arith.constant 0 : i32
    return %c0_i32, %c0_i32_0 : i32, i32
  }
  func.func @transform_14(%arg0: i32) -> (i32, i32) {
    %c0_i32 = arith.constant 0 : i32
    %c0_i32_0 = arith.constant 0 : i32
    %c0_i32_1 = arith.constant 0 : i32
    return %c0_i32, %c0_i32_0 : i32, i32
  }
  func.func @transform_15(%arg0: i32) -> (i32, i32) {
    %c0_i32 = arith.constant 0 : i32
    %c0_i32_0 = arith.constant 0 : i32
    %c0_i32_1 = arith.constant 0 : i32
    return %c0_i32, %c0_i32_0 : i32, i32
  }
  func.func @transform_16(%arg0: i32) -> (i32, i32, i32) {
    %c0_i32 = arith.constant 0 : i32
    %c0_i32_0 = arith.constant 0 : i32
    %c0_i32_1 = arith.constant 0 : i32
    return %arg0, %c0_i32, %c0_i32_0 : i32, i32, i32
  }
}

module attributes {stable_mosaic.version = 11 : i64} {
  func.func @_conv3x3_kernel(%arg0: i32, %arg1: memref<1x16x757xbf16, #tpu.memory_space<vmem>>, %arg2: memref<64x144xbf16, #tpu.memory_space<vmem>>, %arg3: memref<64x1xf32, #tpu.memory_space<vmem>>, %arg4: memref<1x64x757xbf16, #tpu.memory_space<vmem>>) attributes {dimension_semantics = [#tpu.dimension_semantics<parallel>], iteration_bounds = array<i64: 1>, scalar_prefetch = 0 : i64, scratch_operands = 0 : i64, tpu.core_type = #tpu.core_type<tc>, window_params = [{transform_indices = @transform_0, window_bounds = array<i64: 1, 16, 757>}, {pipeline_mode = #tpu.pipeline_mode<synchronous>, transform_indices = @transform_1, window_bounds = array<i64: 64, 144>}, {pipeline_mode = #tpu.pipeline_mode<synchronous>, transform_indices = @transform_2, window_bounds = array<i64: 64, 1>}, {transform_indices = @transform_3, window_bounds = array<i64: 1, 64, 757>}]} {
    %c0 = arith.constant 0 : index
    %c0_0 = arith.constant 0 : index
    %c109 = arith.constant 109 : index
    %0 = vector.load %arg1[%c0, %c0_0, %c109] : memref<1x16x757xbf16, #tpu.memory_space<vmem>>, vector<1x16x610xbf16>
    %1 = vector.shape_cast %0 : vector<1x16x610xbf16> to vector<16x610xbf16>
    %c0_1 = arith.constant 0 : index
    %c0_2 = arith.constant 0 : index
    %c110 = arith.constant 110 : index
    %2 = vector.load %arg1[%c0_1, %c0_2, %c110] : memref<1x16x757xbf16, #tpu.memory_space<vmem>>, vector<1x16x610xbf16>
    %3 = vector.shape_cast %2 : vector<1x16x610xbf16> to vector<16x610xbf16>
    %c0_3 = arith.constant 0 : index
    %c0_4 = arith.constant 0 : index
    %c111 = arith.constant 111 : index
    %4 = vector.load %arg1[%c0_3, %c0_4, %c111] : memref<1x16x757xbf16, #tpu.memory_space<vmem>>, vector<1x16x610xbf16>
    %5 = vector.shape_cast %4 : vector<1x16x610xbf16> to vector<16x610xbf16>
    %c0_5 = arith.constant 0 : index
    %c0_6 = arith.constant 0 : index
    %c127 = arith.constant 127 : index
    %6 = vector.load %arg1[%c0_5, %c0_6, %c127] : memref<1x16x757xbf16, #tpu.memory_space<vmem>>, vector<1x16x610xbf16>
    %7 = vector.shape_cast %6 : vector<1x16x610xbf16> to vector<16x610xbf16>
    %c0_7 = arith.constant 0 : index
    %c0_8 = arith.constant 0 : index
    %c128 = arith.constant 128 : index
    %8 = vector.load %arg1[%c0_7, %c0_8, %c128] : memref<1x16x757xbf16, #tpu.memory_space<vmem>>, vector<1x16x610xbf16>
    %9 = vector.shape_cast %8 : vector<1x16x610xbf16> to vector<16x610xbf16>
    %c0_9 = arith.constant 0 : index
    %c0_10 = arith.constant 0 : index
    %c129 = arith.constant 129 : index
    %10 = vector.load %arg1[%c0_9, %c0_10, %c129] : memref<1x16x757xbf16, #tpu.memory_space<vmem>>, vector<1x16x610xbf16>
    %11 = vector.shape_cast %10 : vector<1x16x610xbf16> to vector<16x610xbf16>
    %c0_11 = arith.constant 0 : index
    %c0_12 = arith.constant 0 : index
    %c145 = arith.constant 145 : index
    %12 = vector.load %arg1[%c0_11, %c0_12, %c145] : memref<1x16x757xbf16, #tpu.memory_space<vmem>>, vector<1x16x610xbf16>
    %13 = vector.shape_cast %12 : vector<1x16x610xbf16> to vector<16x610xbf16>
    %c0_13 = arith.constant 0 : index
    %c0_14 = arith.constant 0 : index
    %c146 = arith.constant 146 : index
    %14 = vector.load %arg1[%c0_13, %c0_14, %c146] : memref<1x16x757xbf16, #tpu.memory_space<vmem>>, vector<1x16x610xbf16>
    %15 = vector.shape_cast %14 : vector<1x16x610xbf16> to vector<16x610xbf16>
    %c0_15 = arith.constant 0 : index
    %c0_16 = arith.constant 0 : index
    %c147 = arith.constant 147 : index
    %16 = vector.load %arg1[%c0_15, %c0_16, %c147] : memref<1x16x757xbf16, #tpu.memory_space<vmem>>, vector<1x16x610xbf16>
    %17 = vector.shape_cast %16 : vector<1x16x610xbf16> to vector<16x610xbf16>
    %18 = tpu.concatenate %1, %3, %5, %7, %9, %11, %13, %15, %17 in 0 : vector<16x610xbf16>, vector<16x610xbf16>, vector<16x610xbf16>, vector<16x610xbf16>, vector<16x610xbf16>, vector<16x610xbf16>, vector<16x610xbf16>, vector<16x610xbf16>, vector<16x610xbf16> -> vector<144x610xbf16>
    %c0_17 = arith.constant 0 : index
    %c0_18 = arith.constant 0 : index
    %19 = vector.load %arg2[%c0_17, %c0_18] : memref<64x144xbf16, #tpu.memory_space<vmem>>, vector<64x144xbf16>
    %cst = arith.constant dense<0.000000e+00> : vector<64x610xf32>
    %20 = tpu.matmul %19, %18, %cst {dimension_numbers = #tpu.dot_dimension_numbers<[1], [0], [0], [1], [0, 0, 1, 1], [], []>} : vector<64x144xbf16>, vector<144x610xbf16>, vector<64x610xf32> -> vector<64x610xf32>
    %c0_19 = arith.constant 0 : index
    %c0_20 = arith.constant 0 : index
    %21 = vector.load %arg3[%c0_19, %c0_20] : memref<64x1xf32, #tpu.memory_space<vmem>>, vector<64x1xf32>
    %22 = vector.broadcast %21 : vector<64x1xf32> to vector<64x610xf32>
    %23 = arith.addf %20, %22 : vector<64x610xf32>
    %cst_21 = arith.constant 0.000000e+00 : bf16
    %24 = vector.broadcast %cst_21 : bf16 to vector<64x128xbf16>
    %c0_22 = arith.constant 0 : index
    %c0_23 = arith.constant 0 : index
    %c0_24 = arith.constant 0 : index
    %25 = vector.load %arg4[%c0_22, %c0_23, %c0_24] : memref<1x64x757xbf16, #tpu.memory_space<vmem>>, vector<1x64x128xbf16>
    %26 = vector.shape_cast %25 : vector<1x64x128xbf16> to vector<64x128xbf16>
    %27 = vector.shape_cast %24 : vector<64x128xbf16> to vector<1x64x128xbf16>
    tpu.vector_store %arg4[%c0_22, %c0_23, %c0_24], %27 {strides = array<i32>} : memref<1x64x757xbf16, #tpu.memory_space<vmem>>, vector<1x64x128xbf16>,
    %cst_25 = arith.constant 0.000000e+00 : bf16
    %28 = vector.broadcast %cst_25 : bf16 to vector<64x19xbf16>
    %c0_26 = arith.constant 0 : index
    %c0_27 = arith.constant 0 : index
    %c738 = arith.constant 738 : index
    %29 = vector.load %arg4[%c0_26, %c0_27, %c738] : memref<1x64x757xbf16, #tpu.memory_space<vmem>>, vector<1x64x19xbf16>
    %30 = vector.shape_cast %29 : vector<1x64x19xbf16> to vector<64x19xbf16>
    %31 = vector.shape_cast %28 : vector<64x19xbf16> to vector<1x64x19xbf16>
    tpu.vector_store %arg4[%c0_26, %c0_27, %c738], %31 {strides = array<i32>} : memref<1x64x757xbf16, #tpu.memory_space<vmem>>, vector<1x64x19xbf16>,
    %32 = arith.truncf %23 : vector<64x610xf32> to vector<64x610xbf16>
    %c0_28 = arith.constant 0 : index
    %c0_29 = arith.constant 0 : index
    %c128_30 = arith.constant 128 : index
    %33 = vector.load %arg4[%c0_28, %c0_29, %c128_30] : memref<1x64x757xbf16, #tpu.memory_space<vmem>>, vector<1x64x610xbf16>
    %34 = vector.shape_cast %33 : vector<1x64x610xbf16> to vector<64x610xbf16>
    %35 = vector.shape_cast %32 : vector<64x610xbf16> to vector<1x64x610xbf16>
    tpu.vector_store %arg4[%c0_28, %c0_29, %c128_30], %35 {strides = array<i32>} : memref<1x64x757xbf16, #tpu.memory_space<vmem>>, vector<1x64x610xbf16>,
    return
  }
  func.func @transform_0(%arg0: i32) -> (i32, i32, i32) {
    %c0_i32 = arith.constant 0 : i32
    %c0_i32_0 = arith.constant 0 : i32
    %c0_i32_1 = arith.constant 0 : i32
    return %arg0, %c0_i32, %c0_i32_0 : i32, i32, i32
  }
  func.func @transform_1(%arg0: i32) -> (i32, i32) {
    %c0_i32 = arith.constant 0 : i32
    %c0_i32_0 = arith.constant 0 : i32
    %c0_i32_1 = arith.constant 0 : i32
    return %c0_i32, %c0_i32_0 : i32, i32
  }
  func.func @transform_2(%arg0: i32) -> (i32, i32) {
    %c0_i32 = arith.constant 0 : i32
    %c0_i32_0 = arith.constant 0 : i32
    %c0_i32_1 = arith.constant 0 : i32
    return %c0_i32, %c0_i32_0 : i32, i32
  }
  func.func @transform_3(%arg0: i32) -> (i32, i32, i32) {
    %c0_i32 = arith.constant 0 : i32
    %c0_i32_0 = arith.constant 0 : i32
    %c0_i32_1 = arith.constant 0 : i32
    return %arg0, %c0_i32, %c0_i32_0 : i32, i32, i32
  }
}

module attributes {stable_mosaic.version = 11 : i64} {
  func.func @_conv3x3_kernel(%arg0: i32, %arg1: memref<1x16x2405xbf16, #tpu.memory_space<vmem>>, %arg2: memref<3x144xbf16, #tpu.memory_space<vmem>>, %arg3: memref<3x1xf32, #tpu.memory_space<vmem>>, %arg4: memref<1x3x2405xf32, #tpu.memory_space<vmem>>) attributes {dimension_semantics = [#tpu.dimension_semantics<parallel>], iteration_bounds = array<i64: 1>, scalar_prefetch = 0 : i64, scratch_operands = 0 : i64, tpu.core_type = #tpu.core_type<tc>, window_params = [{transform_indices = @transform_0, window_bounds = array<i64: 1, 16, 2405>}, {pipeline_mode = #tpu.pipeline_mode<synchronous>, transform_indices = @transform_1, window_bounds = array<i64: 3, 144>}, {pipeline_mode = #tpu.pipeline_mode<synchronous>, transform_indices = @transform_2, window_bounds = array<i64: 3, 1>}, {transform_indices = @transform_3, window_bounds = array<i64: 1, 3, 2405>}]} {
    %c0 = arith.constant 0 : index
    %c0_0 = arith.constant 0 : index
    %c93 = arith.constant 93 : index
    %0 = vector.load %arg1[%c0, %c0_0, %c93] : memref<1x16x2405xbf16, #tpu.memory_space<vmem>>, vector<1x16x2242xbf16>
    %1 = vector.shape_cast %0 : vector<1x16x2242xbf16> to vector<16x2242xbf16>
    %c0_1 = arith.constant 0 : index
    %c0_2 = arith.constant 0 : index
    %c94 = arith.constant 94 : index
    %2 = vector.load %arg1[%c0_1, %c0_2, %c94] : memref<1x16x2405xbf16, #tpu.memory_space<vmem>>, vector<1x16x2242xbf16>
    %3 = vector.shape_cast %2 : vector<1x16x2242xbf16> to vector<16x2242xbf16>
    %c0_3 = arith.constant 0 : index
    %c0_4 = arith.constant 0 : index
    %c95 = arith.constant 95 : index
    %4 = vector.load %arg1[%c0_3, %c0_4, %c95] : memref<1x16x2405xbf16, #tpu.memory_space<vmem>>, vector<1x16x2242xbf16>
    %5 = vector.shape_cast %4 : vector<1x16x2242xbf16> to vector<16x2242xbf16>
    %c0_5 = arith.constant 0 : index
    %c0_6 = arith.constant 0 : index
    %c127 = arith.constant 127 : index
    %6 = vector.load %arg1[%c0_5, %c0_6, %c127] : memref<1x16x2405xbf16, #tpu.memory_space<vmem>>, vector<1x16x2242xbf16>
    %7 = vector.shape_cast %6 : vector<1x16x2242xbf16> to vector<16x2242xbf16>
    %c0_7 = arith.constant 0 : index
    %c0_8 = arith.constant 0 : index
    %c128 = arith.constant 128 : index
    %8 = vector.load %arg1[%c0_7, %c0_8, %c128] : memref<1x16x2405xbf16, #tpu.memory_space<vmem>>, vector<1x16x2242xbf16>
    %9 = vector.shape_cast %8 : vector<1x16x2242xbf16> to vector<16x2242xbf16>
    %c0_9 = arith.constant 0 : index
    %c0_10 = arith.constant 0 : index
    %c129 = arith.constant 129 : index
    %10 = vector.load %arg1[%c0_9, %c0_10, %c129] : memref<1x16x2405xbf16, #tpu.memory_space<vmem>>, vector<1x16x2242xbf16>
    %11 = vector.shape_cast %10 : vector<1x16x2242xbf16> to vector<16x2242xbf16>
    %c0_11 = arith.constant 0 : index
    %c0_12 = arith.constant 0 : index
    %c161 = arith.constant 161 : index
    %12 = vector.load %arg1[%c0_11, %c0_12, %c161] : memref<1x16x2405xbf16, #tpu.memory_space<vmem>>, vector<1x16x2242xbf16>
    %13 = vector.shape_cast %12 : vector<1x16x2242xbf16> to vector<16x2242xbf16>
    %c0_13 = arith.constant 0 : index
    %c0_14 = arith.constant 0 : index
    %c162 = arith.constant 162 : index
    %14 = vector.load %arg1[%c0_13, %c0_14, %c162] : memref<1x16x2405xbf16, #tpu.memory_space<vmem>>, vector<1x16x2242xbf16>
    %15 = vector.shape_cast %14 : vector<1x16x2242xbf16> to vector<16x2242xbf16>
    %c0_15 = arith.constant 0 : index
    %c0_16 = arith.constant 0 : index
    %c163 = arith.constant 163 : index
    %16 = vector.load %arg1[%c0_15, %c0_16, %c163] : memref<1x16x2405xbf16, #tpu.memory_space<vmem>>, vector<1x16x2242xbf16>
    %17 = vector.shape_cast %16 : vector<1x16x2242xbf16> to vector<16x2242xbf16>
    %18 = tpu.concatenate %1, %3, %5, %7, %9, %11, %13, %15, %17 in 0 : vector<16x2242xbf16>, vector<16x2242xbf16>, vector<16x2242xbf16>, vector<16x2242xbf16>, vector<16x2242xbf16>, vector<16x2242xbf16>, vector<16x2242xbf16>, vector<16x2242xbf16>, vector<16x2242xbf16> -> vector<144x2242xbf16>
    %c0_17 = arith.constant 0 : index
    %c0_18 = arith.constant 0 : index
    %19 = vector.load %arg2[%c0_17, %c0_18] : memref<3x144xbf16, #tpu.memory_space<vmem>>, vector<3x144xbf16>
    %cst = arith.constant dense<0.000000e+00> : vector<3x2242xf32>
    %20 = tpu.matmul %19, %18, %cst {dimension_numbers = #tpu.dot_dimension_numbers<[1], [0], [0], [1], [0, 0, 1, 1], [], []>} : vector<3x144xbf16>, vector<144x2242xbf16>, vector<3x2242xf32> -> vector<3x2242xf32>
    %c0_19 = arith.constant 0 : index
    %c0_20 = arith.constant 0 : index
    %21 = vector.load %arg3[%c0_19, %c0_20] : memref<3x1xf32, #tpu.memory_space<vmem>>, vector<3x1xf32>
    %22 = vector.broadcast %21 : vector<3x1xf32> to vector<3x2242xf32>
    %23 = arith.addf %20, %22 : vector<3x2242xf32>
    %cst_21 = arith.constant 0.000000e+00 : f32
    %24 = vector.broadcast %cst_21 : f32 to vector<3x128xf32>
    %c0_22 = arith.constant 0 : index
    %c0_23 = arith.constant 0 : index
    %c0_24 = arith.constant 0 : index
    %25 = vector.load %arg4[%c0_22, %c0_23, %c0_24] : memref<1x3x2405xf32, #tpu.memory_space<vmem>>, vector<1x3x128xf32>
    %26 = vector.shape_cast %25 : vector<1x3x128xf32> to vector<3x128xf32>
    %27 = vector.shape_cast %24 : vector<3x128xf32> to vector<1x3x128xf32>
    tpu.vector_store %arg4[%c0_22, %c0_23, %c0_24], %27 {strides = array<i32>} : memref<1x3x2405xf32, #tpu.memory_space<vmem>>, vector<1x3x128xf32>,
    %cst_25 = arith.constant 0.000000e+00 : f32
    %28 = vector.broadcast %cst_25 : f32 to vector<3x35xf32>
    %c0_26 = arith.constant 0 : index
    %c0_27 = arith.constant 0 : index
    %c2370 = arith.constant 2370 : index
    %29 = vector.load %arg4[%c0_26, %c0_27, %c2370] : memref<1x3x2405xf32, #tpu.memory_space<vmem>>, vector<1x3x35xf32>
    %30 = vector.shape_cast %29 : vector<1x3x35xf32> to vector<3x35xf32>
    %31 = vector.shape_cast %28 : vector<3x35xf32> to vector<1x3x35xf32>
    tpu.vector_store %arg4[%c0_26, %c0_27, %c2370], %31 {strides = array<i32>} : memref<1x3x2405xf32, #tpu.memory_space<vmem>>, vector<1x3x35xf32>,
    %c0_28 = arith.constant 0 : index
    %c0_29 = arith.constant 0 : index
    %c128_30 = arith.constant 128 : index
    %32 = vector.load %arg4[%c0_28, %c0_29, %c128_30] : memref<1x3x2405xf32, #tpu.memory_space<vmem>>, vector<1x3x2242xf32>
    %33 = vector.shape_cast %32 : vector<1x3x2242xf32> to vector<3x2242xf32>
    %34 = vector.shape_cast %23 : vector<3x2242xf32> to vector<1x3x2242xf32>
    tpu.vector_store %arg4[%c0_28, %c0_29, %c128_30], %34 {strides = array<i32>} : memref<1x3x2405xf32, #tpu.memory_space<vmem>>, vector<1x3x2242xf32>,
    return
  }
  func.func @transform_0(%arg0: i32) -> (i32, i32, i32) {
    %c0_i32 = arith.constant 0 : i32
    %c0_i32_0 = arith.constant 0 : i32
    %c0_i32_1 = arith.constant 0 : i32
    return %arg0, %c0_i32, %c0_i32_0 : i32, i32, i32
  }
  func.func @transform_1(%arg0: i32) -> (i32, i32) {
    %c0_i32 = arith.constant 0 : i32
    %c0_i32_0 = arith.constant 0 : i32
    %c0_i32_1 = arith.constant 0 : i32
    return %c0_i32, %c0_i32_0 : i32, i32
  }
  func.func @transform_2(%arg0: i32) -> (i32, i32) {
    %c0_i32 = arith.constant 0 : i32
    %c0_i32_0 = arith.constant 0 : i32
    %c0_i32_1 = arith.constant 0 : i32
    return %c0_i32, %c0_i32_0 : i32, i32
  }
  func.func @transform_3(%arg0: i32) -> (i32, i32, i32) {
    %c0_i32 = arith.constant 0 : i32
    %c0_i32_0 = arith.constant 0 : i32
    %c0_i32_1 = arith.constant 0 : i32
    return %arg0, %c0_i32, %c0_i32_0 : i32, i32, i32
  }
}

</mosaic_0001>

<llo_original>
// kernel: edsr_forward.3
$region0: #{edsr_forward.3}
  #allocation0 [shape = 'u32[]', space=smem, size = 0x4, offset = 0x4, fixed_abs, tag = 'smem constant byte address 0x4 - core index']
  #allocation1 [shape = 'u32[72,128]{1,0:T(1,128)}', space=vmem, size = 0x9000, scoped, tag = 'internal scratch']
  #allocation2 [shape = 'bf16[16,317]{1,0:T(8,128)(2,1)}', space=vmem, size = 0x3000, scoped, tag = 'scratch operand']
  #allocation3 [shape = 'f32[16,178]{1,0:T(8,128)}', space=vmem, size = 0x4000, scoped, tag = 'scratch operand']
  #allocation4 [shape = 'f32[16,178]{1,0:T(8,128)}', space=vmem, size = 0x4000, scoped, tag = 'scratch operand']
  %s0 = inlined_call_operand.vmem [shape: bf16[1,16,317], index: 0, kind: input, shape index: {}]
  %s1 = inlined_call_operand.vmem [shape: f32[1,178], index: 1, kind: input, shape index: {}]
  %s2 = inlined_call_operand.vmem [shape: bf16[16,144], index: 2, kind: input, shape index: {}]
  %s3 = inlined_call_operand.vmem [shape: f32[16,1], index: 3, kind: input, shape index: {}]
  %s4 = inlined_call_operand.vmem [shape: bf16[16,144], index: 4, kind: input, shape index: {}]
  %s5 = inlined_call_operand.vmem [shape: f32[16,1], index: 5, kind: input, shape index: {}]
  %s6 = inlined_call_operand.vmem [shape: bf16[16,144], index: 6, kind: input, shape index: {}]
  %s7 = inlined_call_operand.vmem [shape: f32[16,1], index: 7, kind: input, shape index: {}]
  %s8 = inlined_call_operand.vmem [shape: bf16[16,144], index: 8, kind: input, shape index: {}]
  %s9 = inlined_call_operand.vmem [shape: f32[16,1], index: 9, kind: input, shape index: {}]
  %s10 = inlined_call_operand.vmem [shape: bf16[16,144], index: 10, kind: input, shape index: {}]
  %s11 = inlined_call_operand.vmem [shape: f32[16,1], index: 11, kind: input, shape index: {}]
  %s12 = inlined_call_operand.vmem [shape: bf16[16,144], index: 12, kind: input, shape index: {}]
  %s13 = inlined_call_operand.vmem [shape: f32[16,1], index: 13, kind: input, shape index: {}]
  %s14 = inlined_call_operand.vmem [shape: bf16[64,144], index: 14, kind: input, shape index: {}]
  %s15 = inlined_call_operand.vmem [shape: f32[64,1], index: 15, kind: input, shape index: {}]
  %s16 = inlined_call_operand.vmem [shape: bf16[1,64,317], index: 16, kind: output, shape index: {}]
  %s17 = sld [smem:[#allocation0]]
  $region74: #{edsr_forward.3} parent=0
    _
  %s19 = ssub.s32 1, %s17
  %s20 = scalar_select 0, %s19, %s17
  // Predicated region
  $region2: #{edsr_forward.3} parent=0 // pred_check
    _
  $region3: #{edsr_forward.3} parent=0 // pred_check_branch
    %22 = sbr.rel (0) target = $region5
  $region4: #{edsr_forward.3} parent=0 // pred_region
    _
  $region5: #{edsr_forward.3} parent=0 // pred_fallthru
    _
  // Predicated region
  $region6: #{edsr_forward.3} parent=0 // pred_check
    _
  $region7: #{edsr_forward.3} parent=0 // pred_check_branch
    %24 = sbr.rel (0) target = $region9
  $region8: #{edsr_forward.3} parent=0 // pred_region
    _
  $region9: #{edsr_forward.3} parent=0 // pred_fallthru
    _
  // Predicated region
  $region10: #{edsr_forward.3} parent=0 // pred_check
    _
  $region11: #{edsr_forward.3} parent=0 // pred_check_branch
    %26 = sbr.rel (0) target = $region13
  $region12: #{edsr_forward.3} parent=0 // pred_region
    _
  $region13: #{edsr_forward.3} parent=0 // pred_fallthru
    _
  // Predicated region
  $region14: #{edsr_forward.3} parent=0 // pred_check
    _
  $region15: #{edsr_forward.3} parent=0 // pred_check_branch
    %28 = sbr.rel (0) target = $region17
  $region16: #{edsr_forward.3} parent=0 // pred_region
    _
  $region17: #{edsr_forward.3} parent=0 // pred_fallthru
    _
  // Predicated region
  $region18: #{edsr_forward.3} parent=0 // pred_check
    _
  $region19: #{edsr_forward.3} parent=0 // pred_check_branch
    %30 = sbr.rel (0) target = $region21
  $region20: #{edsr_forward.3} parent=0 // pred_region
    _
  $region21: #{edsr_forward.3} parent=0 // pred_fallthru
    _
  // Predicated region
  $region22: #{edsr_forward.3} parent=0 // pred_check
    _
  $region23: #{edsr_forward.3} parent=0 // pred_check_branch
    %32 = sbr.rel (0) target = $region25
  $region24: #{edsr_forward.3} parent=0 // pred_region
    _
  $region25: #{edsr_forward.3} parent=0 // pred_fallthru
    _
  // Predicated region
  $region26: #{edsr_forward.3} parent=0 // pred_check
    _
  $region27: #{edsr_forward.3} parent=0 // pred_check_branch
    %34 = sbr.rel (0) target = $region29
  $region28: #{edsr_forward.3} parent=0 // pred_region
    _
  $region29: #{edsr_forward.3} parent=0 // pred_fallthru
    _
  // Predicated region
  $region30: #{edsr_forward.3} parent=0 // pred_check
    _
  $region31: #{edsr_forward.3} parent=0 // pred_check_branch
    %36 = sbr.rel (0) target = $region33
  $region32: #{edsr_forward.3} parent=0 // pred_region
    _
  $region33: #{edsr_forward.3} parent=0 // pred_fallthru
    _
  // Predicated region
  $region34: #{edsr_forward.3} parent=0 // pred_check
    _
  $region35: #{edsr_forward.3} parent=0 // pred_check_branch
    %38 = sbr.rel (0) target = $region37
  $region36: #{edsr_forward.3} parent=0 // pred_region
    _
  $region37: #{edsr_forward.3} parent=0 // pred_fallthru
    _
  // Predicated region
  $region38: #{edsr_forward.3} parent=0 // pred_check
    _
  $region39: #{edsr_forward.3} parent=0 // pred_check_branch
    %40 = sbr.rel (0) target = $region41
  $region40: #{edsr_forward.3} parent=0 // pred_region
    _
  $region41: #{edsr_forward.3} parent=0 // pred_fallthru
    _
  // Predicated region
  $region42: #{edsr_forward.3} parent=0 // pred_check
    _
  $region43: #{edsr_forward.3} parent=0 // pred_check_branch
    %42 = sbr.rel (0) target = $region45
  $region44: #{edsr_forward.3} parent=0 // pred_region
    _
  $region45: #{edsr_forward.3} parent=0 // pred_fallthru
    _
  // Predicated region
  $region46: #{edsr_forward.3} parent=0 // pred_check
    _
  $region47: #{edsr_forward.3} parent=0 // pred_check_branch
    %44 = sbr.rel (0) target = $region49
  $region48: #{edsr_forward.3} parent=0 // pred_region
    _
  $region49: #{edsr_forward.3} parent=0 // pred_fallthru
    _
  // Predicated region
  $region50: #{edsr_forward.3} parent=0 // pred_check
    _
  $region51: #{edsr_forward.3} parent=0 // pred_check_branch
    %46 = sbr.rel (0) target = $region53
  $region52: #{edsr_forward.3} parent=0 // pred_region
    _
  $region53: #{edsr_forward.3} parent=0 // pred_fallthru
    _
  // Predicated region
  $region54: #{edsr_forward.3} parent=0 // pred_check
    _
  $region55: #{edsr_forward.3} parent=0 // pred_check_branch
    %48 = sbr.rel (0) target = $region57
  $region56: #{edsr_forward.3} parent=0 // pred_region
    _
  $region57: #{edsr_forward.3} parent=0 // pred_fallthru
    _
  // Predicated region
  $region58: #{edsr_forward.3} parent=0 // pred_check
    _
  $region59: #{edsr_forward.3} parent=0 // pred_check_branch
    %50 = sbr.rel (0) target = $region61
  $region60: #{edsr_forward.3} parent=0 // pred_region
    _
  $region61: #{edsr_forward.3} parent=0 // pred_fallthru
    _
  // Predicated region
  $region62: #{edsr_forward.3} parent=0 // pred_check
    _
  $region63: #{edsr_forward.3} parent=0 // pred_check_branch
    %52 = sbr.rel (0) target = $region65
  $region64: #{edsr_forward.3} parent=0 // pred_region
    _
  $region65: #{edsr_forward.3} parent=0 // pred_fallthru
    _
  %v54 = vld [vmem:[%s1] sm:$0x3]
  %55 = vst [vmem:[#allocation2] sm:$0xf] 0
  %56 = vst [vmem:[#allocation2 + $0xc] sm:$0xf] 0
  %vm57 = vcmask 494992
  %58 = vst.msk [vmem:[#allocation2 + $0x8] sm:$0xf] %vm57, 0
  %59 = vst.msk [vmem:[#allocation2 + $0x14] sm:$0xf] %vm57, 0
  %v60 = vld [vmem:[%s0] sm:$0xff]
  %v61 = vld [vmem:[%s0 + $0x8] sm:$0xf]
  %v62 = vld [vmem:[%s0 + $0xc] sm:$0xff]
  %v63 = vld [vmem:[%s0 + $0x14] sm:$0xf]
  %v64 = vld [vmem:[%s0 + $0x4] sm:$0xff]
  %v65 = vld [vmem:[%s0 + $0x10] sm:$0xff]
  %v70 = vunpack.c.l.b16 %v60
  %v71 = vunpack.c.h.b16 %v60
  %v72 = vunpack.c.l.b16 %v61
  %v73 = vunpack.c.l.b16 %v62
  %v74 = vunpack.c.h.b16 %v62
  %v75 = vunpack.c.l.b16 %v63
  %v76 = vpack.c.b16 %v73, %v70
  %v77 = vpack.c.b16 %v74, %v71
  %v78 = vpack.c.b16 %v75, %v72
  %79 = vrot.lane.b32.xlu0 %v76, 127
  %v80 = vpop.permute.xlu0 %79
  %81 = vrot.lane.b32.xlu0 %v77, 127
  %v82 = vpop.permute.xlu0 %81
  %83 = vrot.lane.b32.xlu0 %v78, 127
  %v84 = vpop.permute.xlu0 %83
  %vm85 = vcmask 1039360
  %v86 = vsel %vm85, %v80, %v82
  %v87 = vsel %vm85, %v82, %v84
  %88 = vrot.lane.b32.xlu0 %v76, 126
  %v89 = vpop.permute.xlu0 %88
  %90 = vrot.lane.b32.xlu0 %v77, 126
  %v91 = vpop.permute.xlu0 %90
  %92 = vrot.lane.b32.xlu0 %v78, 126
  %v93 = vpop.permute.xlu0 %92
  %vm94 = vcmask 1031168
  %v95 = vsel %vm94, %v89, %v91
  %v96 = vsel %vm94, %v91, %v93
  %97 = vrot.lane.b32.xlu0 %v76, 118
  %v98 = vpop.permute.xlu0 %97
  %99 = vrot.lane.b32.xlu0 %v77, 118
  %v100 = vpop.permute.xlu0 %99
  %101 = vrot.lane.b32.xlu0 %v78, 118
  %v102 = vpop.permute.xlu0 %101
  %vm103 = vcmask 965632
  %v104 = vsel %vm103, %v98, %v100
  %v105 = vsel %vm103, %v100, %v102
  %v108 = vunpack.c.l.b16 %v64
  %v109 = vunpack.c.h.b16 %v64
  %v110 = vunpack.c.l.b16 %v65
  %v111 = vunpack.c.h.b16 %v65
  %v112 = vpack.c.b16 %v110, %v108
  %v113 = vpack.c.b16 %v111, %v109
  %114 = vrot.lane.b32.xlu0 %v112, 117
  %v115 = vpop.permute.xlu0 %114
  %116 = vrot.lane.b32.xlu0 %v113, 117
  %v117 = vpop.permute.xlu0 %116
  %vm118 = vcmask 957440
  %v119 = vsel %vm118, %v115, %v117
  %120 = vrot.lane.b32.xlu0 %v112, 116
  %v121 = vpop.permute.xlu0 %120
  %122 = vrot.lane.b32.xlu0 %v113, 116
  %v123 = vpop.permute.xlu0 %122
  %vm124 = vcmask 949248
  %v125 = vsel %vm124, %v121, %v123
  %126 = vrot.lane.b32.xlu0 %v112, 108
  %v127 = vpop.permute.xlu0 %126
  %128 = vrot.lane.b32.xlu0 %v113, 108
  %v129 = vpop.permute.xlu0 %128
  %vm130 = vcmask 883712
  %v131 = vsel %vm130, %v127, %v129
  %132 = vrot.lane.b32.xlu0 %v112, 107
  %v133 = vpop.permute.xlu0 %132
  %134 = vrot.lane.b32.xlu0 %v113, 107
  %v135 = vpop.permute.xlu0 %134
  %vm136 = vcmask 875520
  %v137 = vsel %vm136, %v133, %v135
  %138 = vrot.lane.b32.xlu0 %v112, 106
  %v139 = vpop.permute.xlu0 %138
  %140 = vrot.lane.b32.xlu0 %v113, 106
  %v141 = vpop.permute.xlu0 %140
  %vm142 = vcmask 867328
  %v143 = vsel %vm142, %v139, %v141
  %v144 = vld [vmem:[%s2] sm:$0xff]
  %v145 = vld [vmem:[%s2 + $0x8] sm:$0xff]
  %v146 = vld [vmem:[%s3] sm:$0xff]
  %v147 = vld [vmem:[%s3 + $0x8] sm:$0xff]
  %149 = vset.pattern.permute.xlu0 0
  %150 = vperm.xlu0 %149, %v146
  %v151 = vpop.permute.xlu0 %150
  %154 = vset.pattern.permute.xlu0 0
  %155 = vperm.xlu0 %154, %v147
  %v156 = vpop.permute.xlu0 %155
  %v160 = vunpack.c.l.b16 %v144
  %v161 = vunpack.c.h.b16 %v144
  %v162 = vunpack.c.l.b16 %v145
  %v163 = vunpack.c.h.b16 %v145
  %v164 = vpack.c.b16 %v162, %v160
  %v165 = vpack.c.b16 %v163, %v161
  %167 = vrot.lane.b32.xlu0 %v76, 11
  %v168 = vpop.permute.xlu0 %167
  %169 = vrot.lane.b32.xlu0 %v77, 11
  %v170 = vpop.permute.xlu0 %169
  %171 = vrot.lane.b32.xlu0 %v78, 11
  %v172 = vpop.permute.xlu0 %171
  %173 = vrot.lane.b32.xlu0 %v86, 11
  %v174 = vpop.permute.xlu0 %173
  %175 = vrot.lane.b32.xlu0 %v87, 11
  %v176 = vpop.permute.xlu0 %175
  %177 = vrot.lane.b32.xlu0 %v84, 11
  %v178 = vpop.permute.xlu0 %177
  %179 = vrot.lane.b32.xlu0 %v95, 11
  %v180 = vpop.permute.xlu0 %179
  %181 = vrot.lane.b32.xlu0 %v96, 11
  %v182 = vpop.permute.xlu0 %181
  %183 = vrot.lane.b32.xlu0 %v93, 11
  %v184 = vpop.permute.xlu0 %183
  %185 = vrot.lane.b32.xlu0 %v104, 11
  %v186 = vpop.permute.xlu0 %185
  %187 = vrot.lane.b32.xlu0 %v105, 11
  %v188 = vpop.permute.xlu0 %187
  %189 = vrot.lane.b32.xlu0 %v102, 11
  %v190 = vpop.permute.xlu0 %189
  %191 = vrot.lane.b32.xlu0 %v115, 11
  %v192 = vpop.permute.xlu0 %191
  %193 = vrot.lane.b32.xlu0 %v119, 11
  %v194 = vpop.permute.xlu0 %193
  %195 = vrot.lane.b32.xlu0 %v117, 11
  %v196 = vpop.permute.xlu0 %195
  %197 = vrot.lane.b32.xlu0 %v121, 11
  %v198 = vpop.permute.xlu0 %197
  %199 = vrot.lane.b32.xlu0 %v125, 11
  %v200 = vpop.permute.xlu0 %199
  %201 = vrot.lane.b32.xlu0 %v123, 11
  %v202 = vpop.permute.xlu0 %201
  %203 = vrot.lane.b32.xlu0 %v127, 11
  %v204 = vpop.permute.xlu0 %203
  %205 = vrot.lane.b32.xlu0 %v131, 11
  %v206 = vpop.permute.xlu0 %205
  %207 = vrot.lane.b32.xlu0 %v129, 11
  %v208 = vpop.permute.xlu0 %207
  %209 = vrot.lane.b32.xlu0 %v133, 11
  %v210 = vpop.permute.xlu0 %209
  %211 = vrot.lane.b32.xlu0 %v137, 11
  %v212 = vpop.permute.xlu0 %211
  %213 = vrot.lane.b32.xlu0 %v135, 11
  %v214 = vpop.permute.xlu0 %213
  %215 = vrot.lane.b32.xlu0 %v139, 11
  %v216 = vpop.permute.xlu0 %215
  %217 = vrot.lane.b32.xlu0 %v143, 11
  %v218 = vpop.permute.xlu0 %217
  %219 = vrot.lane.b32.xlu0 %v141, 11
  %v220 = vpop.permute.xlu0 %219
  %vm221 = vcmask 89088
  %v222 = vsel %vm221, %v168, %v170
  %v223 = vsel %vm221, %v170, %v172
  %v224 = vsel %vm221, %v174, %v176
  %v225 = vsel %vm221, %v176, %v178
  %v226 = vsel %vm221, %v180, %v182
  %v227 = vsel %vm221, %v182, %v184
  %v228 = vsel %vm221, %v186, %v188
  %v229 = vsel %vm221, %v188, %v190
  %v230 = vsel %vm221, %v192, %v194
  %v231 = vsel %vm221, %v194, %v196
  %v232 = vsel %vm221, %v198, %v200
  %v233 = vsel %vm221, %v200, %v202
  %v234 = vsel %vm221, %v204, %v206
  %v235 = vsel %vm221, %v206, %v208
  %v236 = vsel %vm221, %v210, %v212
  %v237 = vsel %vm221, %v212, %v214
  %v238 = vsel %vm221, %v216, %v218
  %v239 = vsel %vm221, %v218, %v220
  %vm258 = vcmask 130048
  %v260 = vsel %vm258, %v165, 0
  %262 = vmatpush.bf16.msra.mxu0 %v236
  %263 = vmatpush.bf16.msra.mxu0 %v234
  %264 = vmatpush.bf16.msra.mxu0 %v232
  %265 = vmatpush.bf16.msra.mxu0 %v230
  %266 = vmatpush.bf16.msra.mxu0 %v228
  %267 = vmatpush.bf16.msra.mxu0 %v226
  %268 = vmatpush.bf16.msra.mxu0 %v224
  %269 = vmatpush.bf16.msra.mxu0 %v222
  %270 = vmatmul.bf16.gmra.mxu0 %v164
  %v271 = vpop.f32.mrf.mxu0
  %v272 = vadd.f32 %v151, %v271
  %v273 = vpop.f32.mrf.mxu0
  %v274 = vadd.f32 %v156, %v273
  %275 = vdwg.mxu0
  %276 = vmatpush.bf16.msra.mxu0 0
  %277 = vmatpush.bf16.msra.mxu0 0
  %278 = vmatpush.bf16.msra.mxu0 0
  %279 = vmatpush.bf16.msra.mxu0 0
  %280 = vmatpush.bf16.msra.mxu0 0
  %281 = vmatpush.bf16.msra.mxu0 0
  %282 = vmatpush.bf16.msra.mxu0 0
  %283 = vmatpush.bf16.msra.mxu0 %v238
  %284 = vmatmul.bf16.gmra.mxu0 %v260
  %v285 = vpop.f32.mrf.mxu0
  %v286 = vadd.f32 %v272, %v285
  %v287 = vpop.f32.mrf.mxu0
  %v288 = vadd.f32 %v274, %v287
  %289 = vdwg.mxu0
  %290 = vmatpush.bf16.msra.mxu0 %v237
  %291 = vmatpush.bf16.msra.mxu0 %v235
  %292 = vmatpush.bf16.msra.mxu0 %v233
  %293 = vmatpush.bf16.msra.mxu0 %v231
  %294 = vmatpush.bf16.msra.mxu0 %v229
  %295 = vmatpush.bf16.msra.mxu0 %v227
  %296 = vmatpush.bf16.msra.mxu0 %v225
  %297 = vmatpush.bf16.msra.mxu0 %v223
  %298 = vmatmul.bf16.gmra.mxu0 %v164
  %v299 = vpop.f32.mrf.mxu0
  %v300 = vadd.f32 %v151, %v299
  %v301 = vpop.f32.mrf.mxu0
  %v302 = vadd.f32 %v156, %v301
  %303 = vdwg.mxu0
  %304 = vmatpush.bf16.msra.mxu0 0
  %305 = vmatpush.bf16.msra.mxu0 0
  %306 = vmatpush.bf16.msra.mxu0 0
  %307 = vmatpush.bf16.msra.mxu0 0
  %308 = vmatpush.bf16.msra.mxu0 0
  %309 = vmatpush.bf16.msra.mxu0 0
  %310 = vmatpush.bf16.msra.mxu0 0
  %311 = vmatpush.bf16.msra.mxu0 %v239
  %312 = vmatmul.bf16.gmra.mxu0 %v260
  %v313 = vpop.f32.mrf.mxu0
  %v314 = vadd.f32 %v300, %v313
  %v315 = vpop.f32.mrf.mxu0
  %v316 = vadd.f32 %v302, %v315
  %317 = vdwg.mxu0
  %318 = vst [vmem:[#allocation3] sm:$0xff] %v286
  %vm319 = vcmask 408576
  %320 = vst.msk [vmem:[#allocation3 + $0x8] sm:$0xff] %vm319, %v314
  %321 = vst [vmem:[#allocation3 + $0x10] sm:$0xff] %v288
  %322 = vst.msk [vmem:[#allocation3 + $0x18] sm:$0xff] %vm319, %v316
  %323 = vst [vmem:[#allocation4] sm:$0xff] %v286
  %324 = vst.msk [vmem:[#allocation4 + $0x8] sm:$0xff] %vm319, %v314
  %325 = vst [vmem:[#allocation4 + $0x10] sm:$0xff] %v288
  %326 = vst.msk [vmem:[#allocation4 + $0x18] sm:$0xff] %vm319, %v316
  %v327 = vld [vmem:[#allocation4] sm:$0xff]
  %v328 = vld [vmem:[#allocation4 + $0x8] sm:$0xff]
  %v329 = vld [vmem:[#allocation4 + $0x10] sm:$0xff]
  %v330 = vld [vmem:[#allocation4 + $0x18] sm:$0xff]
  %v332 = vperm.slane %v54, 0
  %v333 = vperm.slane %v54, 1
  %v336 = vmul.f32 %v327, %v332
  %v337 = vmul.f32 %v328, %v333
  %v338 = vmul.f32 %v329, %v332
  %v339 = vmul.f32 %v330, %v333
  %v340 = vpack.c.bf16 %v337, %v336
  %v341 = vpack.c.bf16 %v339, %v338
  %vm342 = vcmask 1043456
  %vm343 = vcmask 408580
  %vm344 = vmor %vm343, %vm342
  %345 = vst.msk [vmem:[#allocation2 + $0x4] sm:$0xff] %vm344, %v340
  %346 = vst.msk [vmem:[#allocation2 + $0x10] sm:$0xff] %vm344, %v341
  %v347 = vld [vmem:[#allocation2] sm:$0xff]
  %v348 = vld [vmem:[#allocation2 + $0x8] sm:$0xf]
  %v349 = vld [vmem:[#allocation2 + $0xc] sm:$0xff]
  %v350 = vld [vmem:[#allocation2 + $0x14] sm:$0xf]
  %v351 = vld [vmem:[#allocation2 + $0x4] sm:$0xff]
  %v352 = vld [vmem:[#allocation2 + $0x10] sm:$0xff]
  %v357 = vunpack.c.l.b16 %v347
  %v358 = vunpack.c.h.b16 %v347
  %v359 = vunpack.c.l.b16 %v348
  %v360 = vunpack.c.l.b16 %v349
  %v361 = vunpack.c.h.b16 %v349
  %v362 = vunpack.c.l.b16 %v350
  %v363 = vpack.c.b16 %v360, %v357
  %v364 = vpack.c.b16 %v361, %v358
  %v365 = vpack.c.b16 %v362, %v359
  %366 = vrot.lane.b32.xlu0 %v363, 127
  %v367 = vpop.permute.xlu0 %366
  %368 = vrot.lane.b32.xlu0 %v364, 127
  %v369 = vpop.permute.xlu0 %368
  %370 = vrot.lane.b32.xlu0 %v365, 127
  %v371 = vpop.permute.xlu0 %370
  %v372 = vsel %vm85, %v367, %v369
  %v373 = vsel %vm85, %v369, %v371
  %374 = vrot.lane.b32.xlu0 %v363, 126
  %v375 = vpop.permute.xlu0 %374
  %376 = vrot.lane.b32.xlu0 %v364, 126
  %v377 = vpop.permute.xlu0 %376
  %378 = vrot.lane.b32.xlu0 %v365, 126
  %v379 = vpop.permute.xlu0 %378
  %v380 = vsel %vm94, %v375, %v377
  %v381 = vsel %vm94, %v377, %v379
  %382 = vrot.lane.b32.xlu0 %v363, 118
  %v383 = vpop.permute.xlu0 %382
  %384 = vrot.lane.b32.xlu0 %v364, 118
  %v385 = vpop.permute.xlu0 %384
  %386 = vrot.lane.b32.xlu0 %v365, 118
  %v387 = vpop.permute.xlu0 %386
  %v388 = vsel %vm103, %v383, %v385
  %v389 = vsel %vm103, %v385, %v387
  %v392 = vunpack.c.l.b16 %v351
  %v393 = vunpack.c.h.b16 %v351
  %v394 = vunpack.c.l.b16 %v352
  %v395 = vunpack.c.h.b16 %v352
  %v396 = vpack.c.b16 %v394, %v392
  %v397 = vpack.c.b16 %v395, %v393
  %398 = vrot.lane.b32.xlu0 %v396, 117
  %v399 = vpop.permute.xlu0 %398
  %400 = vrot.lane.b32.xlu0 %v397, 117
  %v401 = vpop.permute.xlu0 %400
  %v402 = vsel %vm118, %v399, %v401
  %403 = vrot.lane.b32.xlu0 %v396, 116
  %v404 = vpop.permute.xlu0 %403
  %405 = vrot.lane.b32.xlu0 %v397, 116
  %v406 = vpop.permute.xlu0 %405
  %v407 = vsel %vm124, %v404, %v406
  %408 = vrot.lane.b32.xlu0 %v396, 108
  %v409 = vpop.permute.xlu0 %408
  %410 = vrot.lane.b32.xlu0 %v397, 108
  %v411 = vpop.permute.xlu0 %410
  %v412 = vsel %vm130, %v409, %v411
  %413 = vrot.lane.b32.xlu0 %v396, 107
  %v414 = vpop.permute.xlu0 %413
  %415 = vrot.lane.b32.xlu0 %v397, 107
  %v416 = vpop.permute.xlu0 %415
  %v417 = vsel %vm136, %v414, %v416
  %418 = vrot.lane.b32.xlu0 %v396, 106
  %v419 = vpop.permute.xlu0 %418
  %420 = vrot.lane.b32.xlu0 %v397, 106
  %v421 = vpop.permute.xlu0 %420
  %v422 = vsel %vm142, %v419, %v421
  %v423 = vld [vmem:[%s4] sm:$0xff]
  %v424 = vld [vmem:[%s4 + $0x8] sm:$0xff]
  %v425 = vld [vmem:[%s5] sm:$0xff]
  %v426 = vld [vmem:[%s5 + $0x8] sm:$0xff]
  %428 = vset.pattern.permute.xlu0 0
  %429 = vperm.xlu0 %428, %v425
  %v430 = vpop.permute.xlu0 %429
  %433 = vset.pattern.permute.xlu0 0
  %434 = vperm.xlu0 %433, %v426
  %v435 = vpop.permute.xlu0 %434
  %v439 = vunpack.c.l.b16 %v423
  %v440 = vunpack.c.h.b16 %v423
  %v441 = vunpack.c.l.b16 %v424
  %v442 = vunpack.c.h.b16 %v424
  %v443 = vpack.c.b16 %v441, %v439
  %v444 = vpack.c.b16 %v442, %v440
  %446 = vrot.lane.b32.xlu0 %v363, 11
  %v447 = vpop.permute.xlu0 %446
  %448 = vrot.lane.b32.xlu0 %v364, 11
  %v449 = vpop.permute.xlu0 %448
  %450 = vrot.lane.b32.xlu0 %v365, 11
  %v451 = vpop.permute.xlu0 %450
  %452 = vrot.lane.b32.xlu0 %v372, 11
  %v453 = vpop.permute.xlu0 %452
  %454 = vrot.lane.b32.xlu0 %v373, 11
  %v455 = vpop.permute.xlu0 %454
  %456 = vrot.lane.b32.xlu0 %v371, 11
  %v457 = vpop.permute.xlu0 %456
  %458 = vrot.lane.b32.xlu0 %v380, 11
  %v459 = vpop.permute.xlu0 %458
  %460 = vrot.lane.b32.xlu0 %v381, 11
  %v461 = vpop.permute.xlu0 %460
  %462 = vrot.lane.b32.xlu0 %v379, 11
  %v463 = vpop.permute.xlu0 %462
  %464 = vrot.lane.b32.xlu0 %v388, 11
  %v465 = vpop.permute.xlu0 %464
  %466 = vrot.lane.b32.xlu0 %v389, 11
  %v467 = vpop.permute.xlu0 %466
  %468 = vrot.lane.b32.xlu0 %v387, 11
  %v469 = vpop.permute.xlu0 %468
  %470 = vrot.lane.b32.xlu0 %v399, 11
  %v471 = vpop.permute.xlu0 %470
  %472 = vrot.lane.b32.xlu0 %v402, 11
  %v473 = vpop.permute.xlu0 %472
  %474 = vrot.lane.b32.xlu0 %v401, 11
  %v475 = vpop.permute.xlu0 %474
  %476 = vrot.lane.b32.xlu0 %v404, 11
  %v477 = vpop.permute.xlu0 %476
  %478 = vrot.lane.b32.xlu0 %v407, 11
  %v479 = vpop.permute.xlu0 %478
  %480 = vrot.lane.b32.xlu0 %v406, 11
  %v481 = vpop.permute.xlu0 %480
  %482 = vrot.lane.b32.xlu0 %v409, 11
  %v483 = vpop.permute.xlu0 %482
  %484 = vrot.lane.b32.xlu0 %v412, 11
  %v485 = vpop.permute.xlu0 %484
  %486 = vrot.lane.b32.xlu0 %v411, 11
  %v487 = vpop.permute.xlu0 %486
  %488 = vrot.lane.b32.xlu0 %v414, 11
  %v489 = vpop.permute.xlu0 %488
  %490 = vrot.lane.b32.xlu0 %v417, 11
  %v491 = vpop.permute.xlu0 %490
  %492 = vrot.lane.b32.xlu0 %v416, 11
  %v493 = vpop.permute.xlu0 %492
  %494 = vrot.lane.b32.xlu0 %v419, 11
  %v495 = vpop.permute.xlu0 %494
  %496 = vrot.lane.b32.xlu0 %v422, 11
  %v497 = vpop.permute.xlu0 %496
  %498 = vrot.lane.b32.xlu0 %v421, 11
  %v499 = vpop.permute.xlu0 %498
  %v500 = vsel %vm221, %v447, %v449
  %v501 = vsel %vm221, %v449, %v451
  %v502 = vsel %vm221, %v453, %v455
  %v503 = vsel %vm221, %v455, %v457
  %v504 = vsel %vm221, %v459, %v461
  %v505 = vsel %vm221, %v461, %v463
  %v506 = vsel %vm221, %v465, %v467
  %v507 = vsel %vm221, %v467, %v469
  %v508 = vsel %vm221, %v471, %v473
  %v509 = vsel %vm221, %v473, %v475
  %v510 = vsel %vm221, %v477, %v479
  %v511 = vsel %vm221, %v479, %v481
  %v512 = vsel %vm221, %v483, %v485
  %v513 = vsel %vm221, %v485, %v487
  %v514 = vsel %vm221, %v489, %v491
  %v515 = vsel %vm221, %v491, %v493
  %v516 = vsel %vm221, %v495, %v497
  %v517 = vsel %vm221, %v497, %v499
  %v537 = vsel %vm258, %v444, 0
  %539 = vmatpush.bf16.msra.mxu0 %v514
  %540 = vmatpush.bf16.msra.mxu0 %v512
  %541 = vmatpush.bf16.msra.mxu0 %v510
  %542 = vmatpush.bf16.msra.mxu0 %v508
  %543 = vmatpush.bf16.msra.mxu0 %v506
  %544 = vmatpush.bf16.msra.mxu0 %v504
  %545 = vmatpush.bf16.msra.mxu0 %v502
  %546 = vmatpush.bf16.msra.mxu0 %v500
  %547 = vmatmul.bf16.gmra.mxu0 %v443
  %v548 = vpop.f32.mrf.mxu0
  %v549 = vadd.f32 %v430, %v548
  %v550 = vpop.f32.mrf.mxu0
  %v551 = vadd.f32 %v435, %v550
  %552 = vdwg.mxu0
  %553 = vmatpush.bf16.msra.mxu0 0
  %554 = vmatpush.bf16.msra.mxu0 0
  %555 = vmatpush.bf16.msra.mxu0 0
  %556 = vmatpush.bf16.msra.mxu0 0
  %557 = vmatpush.bf16.msra.mxu0 0
  %558 = vmatpush.bf16.msra.mxu0 0
  %559 = vmatpush.bf16.msra.mxu0 0
  %560 = vmatpush.bf16.msra.mxu0 %v516
  %561 = vmatmul.bf16.gmra.mxu0 %v537
  %v562 = vpop.f32.mrf.mxu0
  %v563 = vadd.f32 %v549, %v562
  %v564 = vpop.f32.mrf.mxu0
  %v565 = vadd.f32 %v551, %v564
  %566 = vdwg.mxu0
  %567 = vmatpush.bf16.msra.mxu0 %v515
  %568 = vmatpush.bf16.msra.mxu0 %v513
  %569 = vmatpush.bf16.msra.mxu0 %v511
  %570 = vmatpush.bf16.msra.mxu0 %v509
  %571 = vmatpush.bf16.msra.mxu0 %v507
  %572 = vmatpush.bf16.msra.mxu0 %v505
  %573 = vmatpush.bf16.msra.mxu0 %v503
  %574 = vmatpush.bf16.msra.mxu0 %v501
  %575 = vmatmul.bf16.gmra.mxu0 %v443
  %v576 = vpop.f32.mrf.mxu0
  %v577 = vadd.f32 %v430, %v576
  %v578 = vpop.f32.mrf.mxu0
  %v579 = vadd.f32 %v435, %v578
  %580 = vdwg.mxu0
  %581 = vmatpush.bf16.msra.mxu0 0
  %582 = vmatpush.bf16.msra.mxu0 0
  %583 = vmatpush.bf16.msra.mxu0 0
  %584 = vmatpush.bf16.msra.mxu0 0
  %585 = vmatpush.bf16.msra.mxu0 0
  %586 = vmatpush.bf16.msra.mxu0 0
  %587 = vmatpush.bf16.msra.mxu0 0
  %588 = vmatpush.bf16.msra.mxu0 %v517
  %589 = vmatmul.bf16.gmra.mxu0 %v537
  %v590 = vpop.f32.mrf.mxu0
  %v591 = vadd.f32 %v577, %v590
  %v592 = vpop.f32.mrf.mxu0
  %v593 = vadd.f32 %v579, %v592
  %594 = vdwg.mxu0
  %v595 = vmax.f32 %v563, 0.0
  %v596 = vmax.f32 %v591, 0.0
  %v597 = vmax.f32 %v565, 0.0
  %v598 = vmax.f32 %v593, 0.0
  %v599 = vmul.f32 %v595, %v332
  %v600 = vmul.f32 %v596, %v333
  %v601 = vmul.f32 %v597, %v332
  %v602 = vmul.f32 %v598, %v333
  %v603 = vpack.c.bf16 %v600, %v599
  %v604 = vpack.c.bf16 %v602, %v601
  %605 = vst.msk [vmem:[#allocation2 + $0x4] sm:$0xff] %vm344, %v603
  %606 = vst.msk [vmem:[#allocation2 + $0x10] sm:$0xff] %vm344, %v604
  %v607 = vld [vmem:[#allocation2] sm:$0xff]
  %v608 = vld [vmem:[#allocation2 + $0x8] sm:$0xf]
  %v609 = vld [vmem:[#allocation2 + $0xc] sm:$0xff]
  %v610 = vld [vmem:[#allocation2 + $0x14] sm:$0xf]
  %v611 = vld [vmem:[#allocation2 + $0x4] sm:$0xff]
  %v612 = vld [vmem:[#allocation2 + $0x10] sm:$0xff]
  %v617 = vunpack.c.l.b16 %v607
  %v618 = vunpack.c.h.b16 %v607
  %v619 = vunpack.c.l.b16 %v608
  %v620 = vunpack.c.l.b16 %v609
  %v621 = vunpack.c.h.b16 %v609
  %v622 = vunpack.c.l.b16 %v610
  %v623 = vpack.c.b16 %v620, %v617
  %v624 = vpack.c.b16 %v621, %v618
  %v625 = vpack.c.b16 %v622, %v619
  %626 = vrot.lane.b32.xlu0 %v623, 127
  %v627 = vpop.permute.xlu0 %626
  %628 = vrot.lane.b32.xlu0 %v624, 127
  %v629 = vpop.permute.xlu0 %628
  %630 = vrot.lane.b32.xlu0 %v625, 127
  %v631 = vpop.permute.xlu0 %630
  %v632 = vsel %vm85, %v627, %v629
  %v633 = vsel %vm85, %v629, %v631
  %634 = vrot.lane.b32.xlu0 %v623, 126
  %v635 = vpop.permute.xlu0 %634
  %636 = vrot.lane.b32.xlu0 %v624, 126
  %v637 = vpop.permute.xlu0 %636
  %638 = vrot.lane.b32.xlu0 %v625, 126
  %v639 = vpop.permute.xlu0 %638
  %v640 = vsel %vm94, %v635, %v637
  %v641 = vsel %vm94, %v637, %v639
  %642 = vrot.lane.b32.xlu0 %v623, 118
  %v643 = vpop.permute.xlu0 %642
  %644 = vrot.lane.b32.xlu0 %v624, 118
  %v645 = vpop.permute.xlu0 %644
  %646 = vrot.lane.b32.xlu0 %v625, 118
  %v647 = vpop.permute.xlu0 %646
  %v648 = vsel %vm103, %v643, %v645
  %v649 = vsel %vm103, %v645, %v647
  %v652 = vunpack.c.l.b16 %v611
  %v653 = vunpack.c.h.b16 %v611
  %v654 = vunpack.c.l.b16 %v612
  %v655 = vunpack.c.h.b16 %v612
  %v656 = vpack.c.b16 %v654, %v652
  %v657 = vpack.c.b16 %v655, %v653
  %658 = vrot.lane.b32.xlu0 %v656, 117
  %v659 = vpop.permute.xlu0 %658
  %660 = vrot.lane.b32.xlu0 %v657, 117
  %v661 = vpop.permute.xlu0 %660
  %v662 = vsel %vm118, %v659, %v661
  %663 = vrot.lane.b32.xlu0 %v656, 116
  %v664 = vpop.permute.xlu0 %663
  %665 = vrot.lane.b32.xlu0 %v657, 116
  %v666 = vpop.permute.xlu0 %665
  %v667 = vsel %vm124, %v664, %v666
  %668 = vrot.lane.b32.xlu0 %v656, 108
  %v669 = vpop.permute.xlu0 %668
  %670 = vrot.lane.b32.xlu0 %v657, 108
  %v671 = vpop.permute.xlu0 %670
  %v672 = vsel %vm130, %v669, %v671
  %673 = vrot.lane.b32.xlu0 %v656, 107
  %v674 = vpop.permute.xlu0 %673
  %675 = vrot.lane.b32.xlu0 %v657, 107
  %v676 = vpop.permute.xlu0 %675
  %v677 = vsel %vm136, %v674, %v676
  %678 = vrot.lane.b32.xlu0 %v656, 106
  %v679 = vpop.permute.xlu0 %678
  %680 = vrot.lane.b32.xlu0 %v657, 106
  %v681 = vpop.permute.xlu0 %680
  %v682 = vsel %vm142, %v679, %v681
  %v683 = vld [vmem:[%s6] sm:$0xff]
  %v684 = vld [vmem:[%s6 + $0x8] sm:$0xff]
  %v685 = vld [vmem:[%s7] sm:$0xff]
  %v686 = vld [vmem:[%s7 + $0x8] sm:$0xff]
  %688 = vset.pattern.permute.xlu0 0
  %689 = vperm.xlu0 %688, %v685
  %v690 = vpop.permute.xlu0 %689
  %693 = vset.pattern.permute.xlu0 0
  %694 = vperm.xlu0 %693, %v686
  %v695 = vpop.permute.xlu0 %694
  %v699 = vunpack.c.l.b16 %v683
  %v700 = vunpack.c.h.b16 %v683
  %v701 = vunpack.c.l.b16 %v684
  %v702 = vunpack.c.h.b16 %v684
  %v703 = vpack.c.b16 %v701, %v699
  %v704 = vpack.c.b16 %v702, %v700
  %706 = vrot.lane.b32.xlu0 %v623, 11
  %v707 = vpop.permute.xlu0 %706
  %708 = vrot.lane.b32.xlu0 %v624, 11
  %v709 = vpop.permute.xlu0 %708
  %710 = vrot.lane.b32.xlu0 %v625, 11
  %v711 = vpop.permute.xlu0 %710
  %712 = vrot.lane.b32.xlu0 %v632, 11
  %v713 = vpop.permute.xlu0 %712
  %714 = vrot.lane.b32.xlu0 %v633, 11
  %v715 = vpop.permute.xlu0 %714
  %716 = vrot.lane.b32.xlu0 %v631, 11
  %v717 = vpop.permute.xlu0 %716
  %718 = vrot.lane.b32.xlu0 %v640, 11
  %v719 = vpop.permute.xlu0 %718
  %720 = vrot.lane.b32.xlu0 %v641, 11
  %v721 = vpop.permute.xlu0 %720
  %722 = vrot.lane.b32.xlu0 %v639, 11
  %v723 = vpop.permute.xlu0 %722
  %724 = vrot.lane.b32.xlu0 %v648, 11
  %v725 = vpop.permute.xlu0 %724
  %726 = vrot.lane.b32.xlu0 %v649, 11
  %v727 = vpop.permute.xlu0 %726
  %728 = vrot.lane.b32.xlu0 %v647, 11
  %v729 = vpop.permute.xlu0 %728
  %730 = vrot.lane.b32.xlu0 %v659, 11
  %v731 = vpop.permute.xlu0 %730
  %732 = vrot.lane.b32.xlu0 %v662, 11
  %v733 = vpop.permute.xlu0 %732
  %734 = vrot.lane.b32.xlu0 %v661, 11
  %v735 = vpop.permute.xlu0 %734
  %736 = vrot.lane.b32.xlu0 %v664, 11
  %v737 = vpop.permute.xlu0 %736
  %738 = vrot.lane.b32.xlu0 %v667, 11
  %v739 = vpop.permute.xlu0 %738
  %740 = vrot.lane.b32.xlu0 %v666, 11
  %v741 = vpop.permute.xlu0 %740
  %742 = vrot.lane.b32.xlu0 %v669, 11
  %v743 = vpop.permute.xlu0 %742
  %744 = vrot.lane.b32.xlu0 %v672, 11
  %v745 = vpop.permute.xlu0 %744
  %746 = vrot.lane.b32.xlu0 %v671, 11
  %v747 = vpop.permute.xlu0 %746
  %748 = vrot.lane.b32.xlu0 %v674, 11
  %v749 = vpop.permute.xlu0 %748
  %750 = vrot.lane.b32.xlu0 %v677, 11
  %v751 = vpop.permute.xlu0 %750
  %752 = vrot.lane.b32.xlu0 %v676, 11
  %v753 = vpop.permute.xlu0 %752
  %754 = vrot.lane.b32.xlu0 %v679, 11
  %v755 = vpop.permute.xlu0 %754
  %756 = vrot.lane.b32.xlu0 %v682, 11
  %v757 = vpop.permute.xlu0 %756
  %758 = vrot.lane.b32.xlu0 %v681, 11
  %v759 = vpop.permute.xlu0 %758
  %v760 = vsel %vm221, %v707, %v709
  %v761 = vsel %vm221, %v709, %v711
  %v762 = vsel %vm221, %v713, %v715
  %v763 = vsel %vm221, %v715, %v717
  %v764 = vsel %vm221, %v719, %v721
  %v765 = vsel %vm221, %v721, %v723
  %v766 = vsel %vm221, %v725, %v727
  %v767 = vsel %vm221, %v727, %v729
  %v768 = vsel %vm221, %v731, %v733
  %v769 = vsel %vm221, %v733, %v735
  %v770 = vsel %vm221, %v737, %v739
  %v771 = vsel %vm221, %v739, %v741
  %v772 = vsel %vm221, %v743, %v745
  %v773 = vsel %vm221, %v745, %v747
  %v774 = vsel %vm221, %v749, %v751
  %v775 = vsel %vm221, %v751, %v753
  %v776 = vsel %vm221, %v755, %v757
  %v777 = vsel %vm221, %v757, %v759
  %v797 = vsel %vm258, %v704, 0
  %799 = vmatpush.bf16.msra.mxu0 %v774
  %800 = vmatpush.bf16.msra.mxu0 %v772
  %801 = vmatpush.bf16.msra.mxu0 %v770
  %802 = vmatpush.bf16.msra.mxu0 %v768
  %803 = vmatpush.bf16.msra.mxu0 %v766
  %804 = vmatpush.bf16.msra.mxu0 %v764
  %805 = vmatpush.bf16.msra.mxu0 %v762
  %806 = vmatpush.bf16.msra.mxu0 %v760
  %807 = vmatmul.bf16.gmra.mxu0 %v703
  %v808 = vpop.f32.mrf.mxu0
  %v809 = vadd.f32 %v690, %v808
  %v810 = vpop.f32.mrf.mxu0
  %v811 = vadd.f32 %v695, %v810
  %812 = vdwg.mxu0
  %813 = vmatpush.bf16.msra.mxu0 0
  %814 = vmatpush.bf16.msra.mxu0 0
  %815 = vmatpush.bf16.msra.mxu0 0
  %816 = vmatpush.bf16.msra.mxu0 0
  %817 = vmatpush.bf16.msra.mxu0 0
  %818 = vmatpush.bf16.msra.mxu0 0
  %819 = vmatpush.bf16.msra.mxu0 0
  %820 = vmatpush.bf16.msra.mxu0 %v776
  %821 = vmatmul.bf16.gmra.mxu0 %v797
  %v822 = vpop.f32.mrf.mxu0
  %v823 = vadd.f32 %v809, %v822
  %v824 = vpop.f32.mrf.mxu0
  %v825 = vadd.f32 %v811, %v824
  %826 = vdwg.mxu0
  %827 = vmatpush.bf16.msra.mxu0 %v775
  %828 = vmatpush.bf16.msra.mxu0 %v773
  %829 = vmatpush.bf16.msra.mxu0 %v771
  %830 = vmatpush.bf16.msra.mxu0 %v769
  %831 = vmatpush.bf16.msra.mxu0 %v767
  %832 = vmatpush.bf16.msra.mxu0 %v765
  %833 = vmatpush.bf16.msra.mxu0 %v763
  %834 = vmatpush.bf16.msra.mxu0 %v761
  %835 = vmatmul.bf16.gmra.mxu0 %v703
  %v836 = vpop.f32.mrf.mxu0
  %v837 = vadd.f32 %v690, %v836
  %v838 = vpop.f32.mrf.mxu0
  %v839 = vadd.f32 %v695, %v838
  %840 = vdwg.mxu0
  %841 = vmatpush.bf16.msra.mxu0 0
  %842 = vmatpush.bf16.msra.mxu0 0
  %843 = vmatpush.bf16.msra.mxu0 0
  %844 = vmatpush.bf16.msra.mxu0 0
  %845 = vmatpush.bf16.msra.mxu0 0
  %846 = vmatpush.bf16.msra.mxu0 0
  %847 = vmatpush.bf16.msra.mxu0 0
  %848 = vmatpush.bf16.msra.mxu0 %v777
  %849 = vmatmul.bf16.gmra.mxu0 %v797
  %v850 = vpop.f32.mrf.mxu0
  %v851 = vadd.f32 %v837, %v850
  %v852 = vpop.f32.mrf.mxu0
  %v853 = vadd.f32 %v839, %v852
  %854 = vdwg.mxu0
  %v855 = vld [vmem:[#allocation4] sm:$0xff]
  %v856 = vld [vmem:[#allocation4 + $0x8] sm:$0xff]
  %v857 = vld [vmem:[#allocation4 + $0x10] sm:$0xff]
  %v858 = vld [vmem:[#allocation4 + $0x18] sm:$0xff]
  %v859 = vadd.f32 %v823, %v855
  %v860 = vadd.f32 %v851, %v856
  %v861 = vadd.f32 %v825, %v857
  %v862 = vadd.f32 %v853, %v858
  %863 = vst [vmem:[#allocation4] sm:$0xff] %v859
  %864 = vst.msk [vmem:[#allocation4 + $0x8] sm:$0xff] %vm319, %v860
  %865 = vst [vmem:[#allocation4 + $0x10] sm:$0xff] %v861
  %866 = vst.msk [vmem:[#allocation4 + $0x18] sm:$0xff] %vm319, %v862
  %v867 = vld [vmem:[#allocation4] sm:$0xff]
  %v868 = vld [vmem:[#allocation4 + $0x8] sm:$0xff]
  %v869 = vld [vmem:[#allocation4 + $0x10] sm:$0xff]
  %v870 = vld [vmem:[#allocation4 + $0x18] sm:$0xff]
  %v871 = vmul.f32 %v867, %v332
  %v872 = vmul.f32 %v868, %v333
  %v873 = vmul.f32 %v869, %v332
  %v874 = vmul.f32 %v870, %v333
  %v875 = vpack.c.bf16 %v872, %v871
  %v876 = vpack.c.bf16 %v874, %v873
  %877 = vst.msk [vmem:[#allocation2 + $0x4] sm:$0xff] %vm344, %v875
  %878 = vst.msk [vmem:[#allocation2 + $0x10] sm:$0xff] %vm344, %v876
  %v879 = vld [vmem:[#allocation2] sm:$0xff]
  %v880 = vld [vmem:[#allocation2 + $0x8] sm:$0xf]
  %v881 = vld [vmem:[#allocation2 + $0xc] sm:$0xff]
  %v882 = vld [vmem:[#allocation2 + $0x14] sm:$0xf]
  %v883 = vld [vmem:[#allocation2 + $0x4] sm:$0xff]
  %v884 = vld [vmem:[#allocation2 + $0x10] sm:$0xff]
  %v889 = vunpack.c.l.b16 %v879
  %v890 = vunpack.c.h.b16 %v879
  %v891 = vunpack.c.l.b16 %v880
  %v892 = vunpack.c.l.b16 %v881
  %v893 = vunpack.c.h.b16 %v881
  %v894 = vunpack.c.l.b16 %v882
  %v895 = vpack.c.b16 %v892, %v889
  %v896 = vpack.c.b16 %v893, %v890
  %v897 = vpack.c.b16 %v894, %v891
  %898 = vrot.lane.b32.xlu0 %v895, 127
  %v899 = vpop.permute.xlu0 %898
  %900 = vrot.lane.b32.xlu0 %v896, 127
  %v901 = vpop.permute.xlu0 %900
  %902 = vrot.lane.b32.xlu0 %v897, 127
  %v903 = vpop.permute.xlu0 %902
  %v904 = vsel %vm85, %v899, %v901
  %v905 = vsel %vm85, %v901, %v903
  %906 = vrot.lane.b32.xlu0 %v895, 126
  %v907 = vpop.permute.xlu0 %906
  %908 = vrot.lane.b32.xlu0 %v896, 126
  %v909 = vpop.permute.xlu0 %908
  %910 = vrot.lane.b32.xlu0 %v897, 126
  %v911 = vpop.permute.xlu0 %910
  %v912 = vsel %vm94, %v907, %v909
  %v913 = vsel %vm94, %v909, %v911
  %914 = vrot.lane.b32.xlu0 %v895, 118
  %v915 = vpop.permute.xlu0 %914
  %916 = vrot.lane.b32.xlu0 %v896, 118
  %v917 = vpop.permute.xlu0 %916
  %918 = vrot.lane.b32.xlu0 %v897, 118
  %v919 = vpop.permute.xlu0 %918
  %v920 = vsel %vm103, %v915, %v917
  %v921 = vsel %vm103, %v917, %v919
  %v924 = vunpack.c.l.b16 %v883
  %v925 = vunpack.c.h.b16 %v883
  %v926 = vunpack.c.l.b16 %v884
  %v927 = vunpack.c.h.b16 %v884
  %v928 = vpack.c.b16 %v926, %v924
  %v929 = vpack.c.b16 %v927, %v925
  %930 = vrot.lane.b32.xlu0 %v928, 117
  %v931 = vpop.permute.xlu0 %930
  %932 = vrot.lane.b32.xlu0 %v929, 117
  %v933 = vpop.permute.xlu0 %932
  %v934 = vsel %vm118, %v931, %v933
  %935 = vrot.lane.b32.xlu0 %v928, 116
  %v936 = vpop.permute.xlu0 %935
  %937 = vrot.lane.b32.xlu0 %v929, 116
  %v938 = vpop.permute.xlu0 %937
  %v939 = vsel %vm124, %v936, %v938
  %940 = vrot.lane.b32.xlu0 %v928, 108
  %v941 = vpop.permute.xlu0 %940
  %942 = vrot.lane.b32.xlu0 %v929, 108
  %v943 = vpop.permute.xlu0 %942
  %v944 = vsel %vm130, %v941, %v943
  %945 = vrot.lane.b32.xlu0 %v928, 107
  %v946 = vpop.permute.xlu0 %945
  %947 = vrot.lane.b32.xlu0 %v929, 107
  %v948 = vpop.permute.xlu0 %947
  %v949 = vsel %vm136, %v946, %v948
  %950 = vrot.lane.b32.xlu0 %v928, 106
  %v951 = vpop.permute.xlu0 %950
  %952 = vrot.lane.b32.xlu0 %v929, 106
  %v953 = vpop.permute.xlu0 %952
  %v954 = vsel %vm142, %v951, %v953
  %v955 = vld [vmem:[%s8] sm:$0xff]
  %v956 = vld [vmem:[%s8 + $0x8] sm:$0xff]
  %v957 = vld [vmem:[%s9] sm:$0xff]
  %v958 = vld [vmem:[%s9 + $0x8] sm:$0xff]
  %960 = vset.pattern.permute.xlu0 0
  %961 = vperm.xlu0 %960, %v957
  %v962 = vpop.permute.xlu0 %961
  %965 = vset.pattern.permute.xlu0 0
  %966 = vperm.xlu0 %965, %v958
  %v967 = vpop.permute.xlu0 %966
  %v971 = vunpack.c.l.b16 %v955
  %v972 = vunpack.c.h.b16 %v955
  %v973 = vunpack.c.l.b16 %v956
  %v974 = vunpack.c.h.b16 %v956
  %v975 = vpack.c.b16 %v973, %v971
  %v976 = vpack.c.b16 %v974, %v972
  %978 = vrot.lane.b32.xlu0 %v895, 11
  %v979 = vpop.permute.xlu0 %978
  %980 = vrot.lane.b32.xlu0 %v896, 11
  %v981 = vpop.permute.xlu0 %980
  %982 = vrot.lane.b32.xlu0 %v897, 11
  %v983 = vpop.permute.xlu0 %982
  %984 = vrot.lane.b32.xlu0 %v904, 11
  %v985 = vpop.permute.xlu0 %984
  %986 = vrot.lane.b32.xlu0 %v905, 11
  %v987 = vpop.permute.xlu0 %986
  %988 = vrot.lane.b32.xlu0 %v903, 11
  %v989 = vpop.permute.xlu0 %988
  %990 = vrot.lane.b32.xlu0 %v912, 11
  %v991 = vpop.permute.xlu0 %990
  %992 = vrot.lane.b32.xlu0 %v913, 11
  %v993 = vpop.permute.xlu0 %992
  %994 = vrot.lane.b32.xlu0 %v911, 11
  %v995 = vpop.permute.xlu0 %994
  %996 = vrot.lane.b32.xlu0 %v920, 11
  %v997 = vpop.permute.xlu0 %996
  %998 = vrot.lane.b32.xlu0 %v921, 11
  %v999 = vpop.permute.xlu0 %998
  %1000 = vrot.lane.b32.xlu0 %v919, 11
  %v1001 = vpop.permute.xlu0 %1000
  %1002 = vrot.lane.b32.xlu0 %v931, 11
  %v1003 = vpop.permute.xlu0 %1002
  %1004 = vrot.lane.b32.xlu0 %v934, 11
  %v1005 = vpop.permute.xlu0 %1004
  %1006 = vrot.lane.b32.xlu0 %v933, 11
  %v1007 = vpop.permute.xlu0 %1006
  %1008 = vrot.lane.b32.xlu0 %v936, 11
  %v1009 = vpop.permute.xlu0 %1008
  %1010 = vrot.lane.b32.xlu0 %v939, 11
  %v1011 = vpop.permute.xlu0 %1010
  %1012 = vrot.lane.b32.xlu0 %v938, 11
  %v1013 = vpop.permute.xlu0 %1012
  %1014 = vrot.lane.b32.xlu0 %v941, 11
  %v1015 = vpop.permute.xlu0 %1014
  %1016 = vrot.lane.b32.xlu0 %v944, 11
  %v1017 = vpop.permute.xlu0 %1016
  %1018 = vrot.lane.b32.xlu0 %v943, 11
  %v1019 = vpop.permute.xlu0 %1018
  %1020 = vrot.lane.b32.xlu0 %v946, 11
  %v1021 = vpop.permute.xlu0 %1020
  %1022 = vrot.lane.b32.xlu0 %v949, 11
  %v1023 = vpop.permute.xlu0 %1022
  %1024 = vrot.lane.b32.xlu0 %v948, 11
  %v1025 = vpop.permute.xlu0 %1024
  %1026 = vrot.lane.b32.xlu0 %v951, 11
  %v1027 = vpop.permute.xlu0 %1026
  %1028 = vrot.lane.b32.xlu0 %v954, 11
  %v1029 = vpop.permute.xlu0 %1028
  %1030 = vrot.lane.b32.xlu0 %v953, 11
  %v1031 = vpop.permute.xlu0 %1030
  %v1032 = vsel %vm221, %v979, %v981
  %v1033 = vsel %vm221, %v981, %v983
  %v1034 = vsel %vm221, %v985, %v987
  %v1035 = vsel %vm221, %v987, %v989
  %v1036 = vsel %vm221, %v991, %v993
  %v1037 = vsel %vm221, %v993, %v995
  %v1038 = vsel %vm221, %v997, %v999
  %v1039 = vsel %vm221, %v999, %v1001
  %v1040 = vsel %vm221, %v1003, %v1005
  %v1041 = vsel %vm221, %v1005, %v1007
  %v1042 = vsel %vm221, %v1009, %v1011
  %v1043 = vsel %vm221, %v1011, %v1013
  %v1044 = vsel %vm221, %v1015, %v1017
  %v1045 = vsel %vm221, %v1017, %v1019
  %v1046 = vsel %vm221, %v1021, %v1023
  %v1047 = vsel %vm221, %v1023, %v1025
  %v1048 = vsel %vm221, %v1027, %v1029
  %v1049 = vsel %vm221, %v1029, %v1031
  %v1069 = vsel %vm258, %v976, 0
  %1071 = vmatpush.bf16.msra.mxu0 %v1046
  %1072 = vmatpush.bf16.msra.mxu0 %v1044
  %1073 = vmatpush.bf16.msra.mxu0 %v1042
  %1074 = vmatpush.bf16.msra.mxu0 %v1040
  %1075 = vmatpush.bf16.msra.mxu0 %v1038
  %1076 = vmatpush.bf16.msra.mxu0 %v1036
  %1077 = vmatpush.bf16.msra.mxu0 %v1034
  %1078 = vmatpush.bf16.msra.mxu0 %v1032
  %1079 = vmatmul.bf16.gmra.mxu0 %v975
  %v1080 = vpop.f32.mrf.mxu0
  %v1081 = vadd.f32 %v962, %v1080
  %v1082 = vpop.f32.mrf.mxu0
  %v1083 = vadd.f32 %v967, %v1082
  %1084 = vdwg.mxu0
  %1085 = vmatpush.bf16.msra.mxu0 0
  %1086 = vmatpush.bf16.msra.mxu0 0
  %1087 = vmatpush.bf16.msra.mxu0 0
  %1088 = vmatpush.bf16.msra.mxu0 0
  %1089 = vmatpush.bf16.msra.mxu0 0
  %1090 = vmatpush.bf16.msra.mxu0 0
  %1091 = vmatpush.bf16.msra.mxu0 0
  %1092 = vmatpush.bf16.msra.mxu0 %v1048
  %1093 = vmatmul.bf16.gmra.mxu0 %v1069
  %v1094 = vpop.f32.mrf.mxu0
  %v1095 = vadd.f32 %v1081, %v1094
  %v1096 = vpop.f32.mrf.mxu0
  %v1097 = vadd.f32 %v1083, %v1096
  %1098 = vdwg.mxu0
  %1099 = vmatpush.bf16.msra.mxu0 %v1047
  %1100 = vmatpush.bf16.msra.mxu0 %v1045
  %1101 = vmatpush.bf16.msra.mxu0 %v1043
  %1102 = vmatpush.bf16.msra.mxu0 %v1041
  %1103 = vmatpush.bf16.msra.mxu0 %v1039
  %1104 = vmatpush.bf16.msra.mxu0 %v1037
  %1105 = vmatpush.bf16.msra.mxu0 %v1035
  %1106 = vmatpush.bf16.msra.mxu0 %v1033
  %1107 = vmatmul.bf16.gmra.mxu0 %v975
  %v1108 = vpop.f32.mrf.mxu0
  %v1109 = vadd.f32 %v962, %v1108
  %v1110 = vpop.f32.mrf.mxu0
  %v1111 = vadd.f32 %v967, %v1110
  %1112 = vdwg.mxu0
  %1113 = vmatpush.bf16.msra.mxu0 0
  %1114 = vmatpush.bf16.msra.mxu0 0
  %1115 = vmatpush.bf16.msra.mxu0 0
  %1116 = vmatpush.bf16.msra.mxu0 0
  %1117 = vmatpush.bf16.msra.mxu0 0
  %1118 = vmatpush.bf16.msra.mxu0 0
  %1119 = vmatpush.bf16.msra.mxu0 0
  %1120 = vmatpush.bf16.msra.mxu0 %v1049
  %1121 = vmatmul.bf16.gmra.mxu0 %v1069
  %v1122 = vpop.f32.mrf.mxu0
  %v1123 = vadd.f32 %v1109, %v1122
  %v1124 = vpop.f32.mrf.mxu0
  %v1125 = vadd.f32 %v1111, %v1124
  %1126 = vdwg.mxu0
  %v1127 = vmax.f32 %v1095, 0.0
  %v1128 = vmax.f32 %v1123, 0.0
  %v1129 = vmax.f32 %v1097, 0.0
  %v1130 = vmax.f32 %v1125, 0.0
  %v1131 = vmul.f32 %v1127, %v332
  %v1132 = vmul.f32 %v1128, %v333
  %v1133 = vmul.f32 %v1129, %v332
  %v1134 = vmul.f32 %v1130, %v333
  %v1135 = vpack.c.bf16 %v1132, %v1131
  %v1136 = vpack.c.bf16 %v1134, %v1133
  %1137 = vst.msk [vmem:[#allocation2 + $0x4] sm:$0xff] %vm344, %v1135
  %1138 = vst.msk [vmem:[#allocation2 + $0x10] sm:$0xff] %vm344, %v1136
  %v1139 = vld [vmem:[#allocation2] sm:$0xff]
  %v1140 = vld [vmem:[#allocation2 + $0x8] sm:$0xf]
  %v1141 = vld [vmem:[#allocation2 + $0xc] sm:$0xff]
  %v1142 = vld [vmem:[#allocation2 + $0x14] sm:$0xf]
  %v1143 = vld [vmem:[#allocation2 + $0x4] sm:$0xff]
  %v1144 = vld [vmem:[#allocation2 + $0x10] sm:$0xff]
  %v1149 = vunpack.c.l.b16 %v1139
  %v1150 = vunpack.c.h.b16 %v1139
  %v1151 = vunpack.c.l.b16 %v1140
  %v1152 = vunpack.c.l.b16 %v1141
  %v1153 = vunpack.c.h.b16 %v1141
  %v1154 = vunpack.c.l.b16 %v1142
  %v1155 = vpack.c.b16 %v1152, %v1149
  %v1156 = vpack.c.b16 %v1153, %v1150
  %v1157 = vpack.c.b16 %v1154, %v1151
  %1158 = vrot.lane.b32.xlu0 %v1155, 127
  %v1159 = vpop.permute.xlu0 %1158
  %1160 = vrot.lane.b32.xlu0 %v1156, 127
  %v1161 = vpop.permute.xlu0 %1160
  %1162 = vrot.lane.b32.xlu0 %v1157, 127
  %v1163 = vpop.permute.xlu0 %1162
  %v1164 = vsel %vm85, %v1159, %v1161
  %v1165 = vsel %vm85, %v1161, %v1163
  %1166 = vrot.lane.b32.xlu0 %v1155, 126
  %v1167 = vpop.permute.xlu0 %1166
  %1168 = vrot.lane.b32.xlu0 %v1156, 126
  %v1169 = vpop.permute.xlu0 %1168
  %1170 = vrot.lane.b32.xlu0 %v1157, 126
  %v1171 = vpop.permute.xlu0 %1170
  %v1172 = vsel %vm94, %v1167, %v1169
  %v1173 = vsel %vm94, %v1169, %v1171
  %1174 = vrot.lane.b32.xlu0 %v1155, 118
  %v1175 = vpop.permute.xlu0 %1174
  %1176 = vrot.lane.b32.xlu0 %v1156, 118
  %v1177 = vpop.permute.xlu0 %1176
  %1178 = vrot.lane.b32.xlu0 %v1157, 118
  %v1179 = vpop.permute.xlu0 %1178
  %v1180 = vsel %vm103, %v1175, %v1177
  %v1181 = vsel %vm103, %v1177, %v1179
  %v1184 = vunpack.c.l.b16 %v1143
  %v1185 = vunpack.c.h.b16 %v1143
  %v1186 = vunpack.c.l.b16 %v1144
  %v1187 = vunpack.c.h.b16 %v1144
  %v1188 = vpack.c.b16 %v1186, %v1184
  %v1189 = vpack.c.b16 %v1187, %v1185
  %1190 = vrot.lane.b32.xlu0 %v1188, 117
  %v1191 = vpop.permute.xlu0 %1190
  %1192 = vrot.lane.b32.xlu0 %v1189, 117
  %v1193 = vpop.permute.xlu0 %1192
  %v1194 = vsel %vm118, %v1191, %v1193
  %1195 = vrot.lane.b32.xlu0 %v1188, 116
  %v1196 = vpop.permute.xlu0 %1195
  %1197 = vrot.lane.b32.xlu0 %v1189, 116
  %v1198 = vpop.permute.xlu0 %1197
  %v1199 = vsel %vm124, %v1196, %v1198
  %1200 = vrot.lane.b32.xlu0 %v1188, 108
  %v1201 = vpop.permute.xlu0 %1200
  %1202 = vrot.lane.b32.xlu0 %v1189, 108
  %v1203 = vpop.permute.xlu0 %1202
  %v1204 = vsel %vm130, %v1201, %v1203
  %1205 = vrot.lane.b32.xlu0 %v1188, 107
  %v1206 = vpop.permute.xlu0 %1205
  %1207 = vrot.lane.b32.xlu0 %v1189, 107
  %v1208 = vpop.permute.xlu0 %1207
  %v1209 = vsel %vm136, %v1206, %v1208
  %1210 = vrot.lane.b32.xlu0 %v1188, 106
  %v1211 = vpop.permute.xlu0 %1210
  %1212 = vrot.lane.b32.xlu0 %v1189, 106
  %v1213 = vpop.permute.xlu0 %1212
  %v1214 = vsel %vm142, %v1211, %v1213
  %v1215 = vld [vmem:[%s10] sm:$0xff]
  %v1216 = vld [vmem:[%s10 + $0x8] sm:$0xff]
  %v1217 = vld [vmem:[%s11] sm:$0xff]
  %v1218 = vld [vmem:[%s11 + $0x8] sm:$0xff]
  %1220 = vset.pattern.permute.xlu0 0
  %1221 = vperm.xlu0 %1220, %v1217
  %v1222 = vpop.permute.xlu0 %1221
  %1225 = vset.pattern.permute.xlu0 0
  %1226 = vperm.xlu0 %1225, %v1218
  %v1227 = vpop.permute.xlu0 %1226
  %v1231 = vunpack.c.l.b16 %v1215
  %v1232 = vunpack.c.h.b16 %v1215
  %v1233 = vunpack.c.l.b16 %v1216
  %v1234 = vunpack.c.h.b16 %v1216
  %v1235 = vpack.c.b16 %v1233, %v1231
  %v1236 = vpack.c.b16 %v1234, %v1232
  %1238 = vrot.lane.b32.xlu0 %v1155, 11
  %v1239 = vpop.permute.xlu0 %1238
  %1240 = vrot.lane.b32.xlu0 %v1156, 11
  %v1241 = vpop.permute.xlu0 %1240
  %1242 = vrot.lane.b32.xlu0 %v1157, 11
  %v1243 = vpop.permute.xlu0 %1242
  %1244 = vrot.lane.b32.xlu0 %v1164, 11
  %v1245 = vpop.permute.xlu0 %1244
  %1246 = vrot.lane.b32.xlu0 %v1165, 11
  %v1247 = vpop.permute.xlu0 %1246
  %1248 = vrot.lane.b32.xlu0 %v1163, 11
  %v1249 = vpop.permute.xlu0 %1248
  %1250 = vrot.lane.b32.xlu0 %v1172, 11
  %v1251 = vpop.permute.xlu0 %1250
  %1252 = vrot.lane.b32.xlu0 %v1173, 11
  %v1253 = vpop.permute.xlu0 %1252
  %1254 = vrot.lane.b32.xlu0 %v1171, 11
  %v1255 = vpop.permute.xlu0 %1254
  %1256 = vrot.lane.b32.xlu0 %v1180, 11
  %v1257 = vpop.permute.xlu0 %1256
  %1258 = vrot.lane.b32.xlu0 %v1181, 11
  %v1259 = vpop.permute.xlu0 %1258
  %1260 = vrot.lane.b32.xlu0 %v1179, 11
  %v1261 = vpop.permute.xlu0 %1260
  %1262 = vrot.lane.b32.xlu0 %v1191, 11
  %v1263 = vpop.permute.xlu0 %1262
  %1264 = vrot.lane.b32.xlu0 %v1194, 11
  %v1265 = vpop.permute.xlu0 %1264
  %1266 = vrot.lane.b32.xlu0 %v1193, 11
  %v1267 = vpop.permute.xlu0 %1266
  %1268 = vrot.lane.b32.xlu0 %v1196, 11
  %v1269 = vpop.permute.xlu0 %1268
  %1270 = vrot.lane.b32.xlu0 %v1199, 11
  %v1271 = vpop.permute.xlu0 %1270
  %1272 = vrot.lane.b32.xlu0 %v1198, 11
  %v1273 = vpop.permute.xlu0 %1272
  %1274 = vrot.lane.b32.xlu0 %v1201, 11
  %v1275 = vpop.permute.xlu0 %1274
  %1276 = vrot.lane.b32.xlu0 %v1204, 11
  %v1277 = vpop.permute.xlu0 %1276
  %1278 = vrot.lane.b32.xlu0 %v1203, 11
  %v1279 = vpop.permute.xlu0 %1278
  %1280 = vrot.lane.b32.xlu0 %v1206, 11
  %v1281 = vpop.permute.xlu0 %1280
  %1282 = vrot.lane.b32.xlu0 %v1209, 11
  %v1283 = vpop.permute.xlu0 %1282
  %1284 = vrot.lane.b32.xlu0 %v1208, 11
  %v1285 = vpop.permute.xlu0 %1284
  %1286 = vrot.lane.b32.xlu0 %v1211, 11
  %v1287 = vpop.permute.xlu0 %1286
  %1288 = vrot.lane.b32.xlu0 %v1214, 11
  %v1289 = vpop.permute.xlu0 %1288
  %1290 = vrot.lane.b32.xlu0 %v1213, 11
  %v1291 = vpop.permute.xlu0 %1290
  %v1292 = vsel %vm221, %v1239, %v1241
  %v1293 = vsel %vm221, %v1241, %v1243
  %v1294 = vsel %vm221, %v1245, %v1247
  %v1295 = vsel %vm221, %v1247, %v1249
  %v1296 = vsel %vm221, %v1251, %v1253
  %v1297 = vsel %vm221, %v1253, %v1255
  %v1298 = vsel %vm221, %v1257, %v1259
  %v1299 = vsel %vm221, %v1259, %v1261
  %v1300 = vsel %vm221, %v1263, %v1265
  %v1301 = vsel %vm221, %v1265, %v1267
  %v1302 = vsel %vm221, %v1269, %v1271
  %v1303 = vsel %vm221, %v1271, %v1273
  %v1304 = vsel %vm221, %v1275, %v1277
  %v1305 = vsel %vm221, %v1277, %v1279
  %v1306 = vsel %vm221, %v1281, %v1283
  %v1307 = vsel %vm221, %v1283, %v1285
  %v1308 = vsel %vm221, %v1287, %v1289
  %v1309 = vsel %vm221, %v1289, %v1291
  %v1329 = vsel %vm258, %v1236, 0
  %1331 = vmatpush.bf16.msra.mxu0 %v1306
  %1332 = vmatpush.bf16.msra.mxu0 %v1304
  %1333 = vmatpush.bf16.msra.mxu0 %v1302
  %1334 = vmatpush.bf16.msra.mxu0 %v1300
  %1335 = vmatpush.bf16.msra.mxu0 %v1298
  %1336 = vmatpush.bf16.msra.mxu0 %v1296
  %1337 = vmatpush.bf16.msra.mxu0 %v1294
  %1338 = vmatpush.bf16.msra.mxu0 %v1292
  %1339 = vmatmul.bf16.gmra.mxu0 %v1235
  %v1340 = vpop.f32.mrf.mxu0
  %v1341 = vadd.f32 %v1222, %v1340
  %v1342 = vpop.f32.mrf.mxu0
  %v1343 = vadd.f32 %v1227, %v1342
  %1344 = vdwg.mxu0
  %1345 = vmatpush.bf16.msra.mxu0 0
  %1346 = vmatpush.bf16.msra.mxu0 0
  %1347 = vmatpush.bf16.msra.mxu0 0
  %1348 = vmatpush.bf16.msra.mxu0 0
  %1349 = vmatpush.bf16.msra.mxu0 0
  %1350 = vmatpush.bf16.msra.mxu0 0
  %1351 = vmatpush.bf16.msra.mxu0 0
  %1352 = vmatpush.bf16.msra.mxu0 %v1308
  %1353 = vmatmul.bf16.gmra.mxu0 %v1329
  %v1354 = vpop.f32.mrf.mxu0
  %v1355 = vadd.f32 %v1341, %v1354
  %v1356 = vpop.f32.mrf.mxu0
  %v1357 = vadd.f32 %v1343, %v1356
  %1358 = vdwg.mxu0
  %1359 = vmatpush.bf16.msra.mxu0 %v1307
  %1360 = vmatpush.bf16.msra.mxu0 %v1305
  %1361 = vmatpush.bf16.msra.mxu0 %v1303
  %1362 = vmatpush.bf16.msra.mxu0 %v1301
  %1363 = vmatpush.bf16.msra.mxu0 %v1299
  %1364 = vmatpush.bf16.msra.mxu0 %v1297
  %1365 = vmatpush.bf16.msra.mxu0 %v1295
  %1366 = vmatpush.bf16.msra.mxu0 %v1293
  %1367 = vmatmul.bf16.gmra.mxu0 %v1235
  %v1368 = vpop.f32.mrf.mxu0
  %v1369 = vadd.f32 %v1222, %v1368
  %v1370 = vpop.f32.mrf.mxu0
  %v1371 = vadd.f32 %v1227, %v1370
  %1372 = vdwg.mxu0
  %1373 = vmatpush.bf16.msra.mxu0 0
  %1374 = vmatpush.bf16.msra.mxu0 0
  %1375 = vmatpush.bf16.msra.mxu0 0
  %1376 = vmatpush.bf16.msra.mxu0 0
  %1377 = vmatpush.bf16.msra.mxu0 0
  %1378 = vmatpush.bf16.msra.mxu0 0
  %1379 = vmatpush.bf16.msra.mxu0 0
  %1380 = vmatpush.bf16.msra.mxu0 %v1309
  %1381 = vmatmul.bf16.gmra.mxu0 %v1329
  %v1382 = vpop.f32.mrf.mxu0
  %v1383 = vadd.f32 %v1369, %v1382
  %v1384 = vpop.f32.mrf.mxu0
  %v1385 = vadd.f32 %v1371, %v1384
  %1386 = vdwg.mxu0
  %v1387 = vld [vmem:[#allocation4] sm:$0xff]
  %v1388 = vld [vmem:[#allocation4 + $0x8] sm:$0xff]
  %v1389 = vld [vmem:[#allocation4 + $0x10] sm:$0xff]
  %v1390 = vld [vmem:[#allocation4 + $0x18] sm:$0xff]
  %v1391 = vadd.f32 %v1355, %v1387
  %v1392 = vadd.f32 %v1383, %v1388
  %v1393 = vadd.f32 %v1357, %v1389
  %v1394 = vadd.f32 %v1385, %v1390
  %1395 = vst [vmem:[#allocation4] sm:$0xff] %v1391
  %1396 = vst.msk [vmem:[#allocation4 + $0x8] sm:$0xff] %vm319, %v1392
  %1397 = vst [vmem:[#allocation4 + $0x10] sm:$0xff] %v1393
  %1398 = vst.msk [vmem:[#allocation4 + $0x18] sm:$0xff] %vm319, %v1394
  %v1399 = vld [vmem:[#allocation4] sm:$0xff]
  %v1400 = vld [vmem:[#allocation4 + $0x8] sm:$0xff]
  %v1401 = vld [vmem:[#allocation4 + $0x10] sm:$0xff]
  %v1402 = vld [vmem:[#allocation4 + $0x18] sm:$0xff]
  %v1403 = vmul.f32 %v1399, %v332
  %v1404 = vmul.f32 %v1400, %v333
  %v1405 = vmul.f32 %v1401, %v332
  %v1406 = vmul.f32 %v1402, %v333
  %v1407 = vpack.c.bf16 %v1404, %v1403
  %v1408 = vpack.c.bf16 %v1406, %v1405
  %1409 = vst.msk [vmem:[#allocation2 + $0x4] sm:$0xff] %vm344, %v1407
  %1410 = vst.msk [vmem:[#allocation2 + $0x10] sm:$0xff] %vm344, %v1408
  %v1411 = vld [vmem:[#allocation2] sm:$0xff]
  %v1412 = vld [vmem:[#allocation2 + $0x8] sm:$0xf]
  %v1413 = vld [vmem:[#allocation2 + $0xc] sm:$0xff]
  %v1414 = vld [vmem:[#allocation2 + $0x14] sm:$0xf]
  %v1415 = vld [vmem:[#allocation2 + $0x4] sm:$0xff]
  %v1416 = vld [vmem:[#allocation2 + $0x10] sm:$0xff]
  %v1421 = vunpack.c.l.b16 %v1411
  %v1422 = vunpack.c.h.b16 %v1411
  %v1423 = vunpack.c.l.b16 %v1412
  %v1424 = vunpack.c.l.b16 %v1413
  %v1425 = vunpack.c.h.b16 %v1413
  %v1426 = vunpack.c.l.b16 %v1414
  %v1427 = vpack.c.b16 %v1424, %v1421
  %v1428 = vpack.c.b16 %v1425, %v1422
  %v1429 = vpack.c.b16 %v1426, %v1423
  %1430 = vrot.lane.b32.xlu0 %v1427, 127
  %v1431 = vpop.permute.xlu0 %1430
  %1432 = vrot.lane.b32.xlu0 %v1428, 127
  %v1433 = vpop.permute.xlu0 %1432
  %1434 = vrot.lane.b32.xlu0 %v1429, 127
  %v1435 = vpop.permute.xlu0 %1434
  %v1436 = vsel %vm85, %v1431, %v1433
  %v1437 = vsel %vm85, %v1433, %v1435
  %1438 = vrot.lane.b32.xlu0 %v1427, 126
  %v1439 = vpop.permute.xlu0 %1438
  %1440 = vrot.lane.b32.xlu0 %v1428, 126
  %v1441 = vpop.permute.xlu0 %1440
  %1442 = vrot.lane.b32.xlu0 %v1429, 126
  %v1443 = vpop.permute.xlu0 %1442
  %v1444 = vsel %vm94, %v1439, %v1441
  %v1445 = vsel %vm94, %v1441, %v1443
  %1446 = vrot.lane.b32.xlu0 %v1427, 118
  %v1447 = vpop.permute.xlu0 %1446
  %1448 = vrot.lane.b32.xlu0 %v1428, 118
  %v1449 = vpop.permute.xlu0 %1448
  %1450 = vrot.lane.b32.xlu0 %v1429, 118
  %v1451 = vpop.permute.xlu0 %1450
  %v1452 = vsel %vm103, %v1447, %v1449
  %v1453 = vsel %vm103, %v1449, %v1451
  %v1456 = vunpack.c.l.b16 %v1415
  %v1457 = vunpack.c.h.b16 %v1415
  %v1458 = vunpack.c.l.b16 %v1416
  %v1459 = vunpack.c.h.b16 %v1416
  %v1460 = vpack.c.b16 %v1458, %v1456
  %v1461 = vpack.c.b16 %v1459, %v1457
  %1462 = vrot.lane.b32.xlu0 %v1460, 117
  %v1463 = vpop.permute.xlu0 %1462
  %1464 = vrot.lane.b32.xlu0 %v1461, 117
  %v1465 = vpop.permute.xlu0 %1464
  %v1466 = vsel %vm118, %v1463, %v1465
  %1467 = vrot.lane.b32.xlu0 %v1460, 116
  %v1468 = vpop.permute.xlu0 %1467
  %1469 = vrot.lane.b32.xlu0 %v1461, 116
  %v1470 = vpop.permute.xlu0 %1469
  %v1471 = vsel %vm124, %v1468, %v1470
  %1472 = vrot.lane.b32.xlu0 %v1460, 108
  %v1473 = vpop.permute.xlu0 %1472
  %1474 = vrot.lane.b32.xlu0 %v1461, 108
  %v1475 = vpop.permute.xlu0 %1474
  %v1476 = vsel %vm130, %v1473, %v1475
  %1477 = vrot.lane.b32.xlu0 %v1460, 107
  %v1478 = vpop.permute.xlu0 %1477
  %1479 = vrot.lane.b32.xlu0 %v1461, 107
  %v1480 = vpop.permute.xlu0 %1479
  %v1481 = vsel %vm136, %v1478, %v1480
  %1482 = vrot.lane.b32.xlu0 %v1460, 106
  %v1483 = vpop.permute.xlu0 %1482
  %1484 = vrot.lane.b32.xlu0 %v1461, 106
  %v1485 = vpop.permute.xlu0 %1484
  %v1486 = vsel %vm142, %v1483, %v1485
  %v1487 = vld [vmem:[%s12] sm:$0xff]
  %v1488 = vld [vmem:[%s12 + $0x8] sm:$0xff]
  %v1489 = vld [vmem:[%s13] sm:$0xff]
  %v1490 = vld [vmem:[%s13 + $0x8] sm:$0xff]
  %1492 = vset.pattern.permute.xlu0 0
  %1493 = vperm.xlu0 %1492, %v1489
  %v1494 = vpop.permute.xlu0 %1493
  %1497 = vset.pattern.permute.xlu0 0
  %1498 = vperm.xlu0 %1497, %v1490
  %v1499 = vpop.permute.xlu0 %1498
  %v1503 = vunpack.c.l.b16 %v1487
  %v1504 = vunpack.c.h.b16 %v1487
  %v1505 = vunpack.c.l.b16 %v1488
  %v1506 = vunpack.c.h.b16 %v1488
  %v1507 = vpack.c.b16 %v1505, %v1503
  %v1508 = vpack.c.b16 %v1506, %v1504
  %1510 = vrot.lane.b32.xlu0 %v1427, 11
  %v1511 = vpop.permute.xlu0 %1510
  %1512 = vrot.lane.b32.xlu0 %v1428, 11
  %v1513 = vpop.permute.xlu0 %1512
  %1514 = vrot.lane.b32.xlu0 %v1429, 11
  %v1515 = vpop.permute.xlu0 %1514
  %1516 = vrot.lane.b32.xlu0 %v1436, 11
  %v1517 = vpop.permute.xlu0 %1516
  %1518 = vrot.lane.b32.xlu0 %v1437, 11
  %v1519 = vpop.permute.xlu0 %1518
  %1520 = vrot.lane.b32.xlu0 %v1435, 11
  %v1521 = vpop.permute.xlu0 %1520
  %1522 = vrot.lane.b32.xlu0 %v1444, 11
  %v1523 = vpop.permute.xlu0 %1522
  %1524 = vrot.lane.b32.xlu0 %v1445, 11
  %v1525 = vpop.permute.xlu0 %1524
  %1526 = vrot.lane.b32.xlu0 %v1443, 11
  %v1527 = vpop.permute.xlu0 %1526
  %1528 = vrot.lane.b32.xlu0 %v1452, 11
  %v1529 = vpop.permute.xlu0 %1528
  %1530 = vrot.lane.b32.xlu0 %v1453, 11
  %v1531 = vpop.permute.xlu0 %1530
  %1532 = vrot.lane.b32.xlu0 %v1451, 11
  %v1533 = vpop.permute.xlu0 %1532
  %1534 = vrot.lane.b32.xlu0 %v1463, 11
  %v1535 = vpop.permute.xlu0 %1534
  %1536 = vrot.lane.b32.xlu0 %v1466, 11
  %v1537 = vpop.permute.xlu0 %1536
  %1538 = vrot.lane.b32.xlu0 %v1465, 11
  %v1539 = vpop.permute.xlu0 %1538
  %1540 = vrot.lane.b32.xlu0 %v1468, 11
  %v1541 = vpop.permute.xlu0 %1540
  %1542 = vrot.lane.b32.xlu0 %v1471, 11
  %v1543 = vpop.permute.xlu0 %1542
  %1544 = vrot.lane.b32.xlu0 %v1470, 11
  %v1545 = vpop.permute.xlu0 %1544
  %1546 = vrot.lane.b32.xlu0 %v1473, 11
  %v1547 = vpop.permute.xlu0 %1546
  %1548 = vrot.lane.b32.xlu0 %v1476, 11
  %v1549 = vpop.permute.xlu0 %1548
  %1550 = vrot.lane.b32.xlu0 %v1475, 11
  %v1551 = vpop.permute.xlu0 %1550
  %1552 = vrot.lane.b32.xlu0 %v1478, 11
  %v1553 = vpop.permute.xlu0 %1552
  %1554 = vrot.lane.b32.xlu0 %v1481, 11
  %v1555 = vpop.permute.xlu0 %1554
  %1556 = vrot.lane.b32.xlu0 %v1480, 11
  %v1557 = vpop.permute.xlu0 %1556
  %1558 = vrot.lane.b32.xlu0 %v1483, 11
  %v1559 = vpop.permute.xlu0 %1558
  %1560 = vrot.lane.b32.xlu0 %v1486, 11
  %v1561 = vpop.permute.xlu0 %1560
  %1562 = vrot.lane.b32.xlu0 %v1485, 11
  %v1563 = vpop.permute.xlu0 %1562
  %v1564 = vsel %vm221, %v1511, %v1513
  %v1565 = vsel %vm221, %v1513, %v1515
  %v1566 = vsel %vm221, %v1517, %v1519
  %v1567 = vsel %vm221, %v1519, %v1521
  %v1568 = vsel %vm221, %v1523, %v1525
  %v1569 = vsel %vm221, %v1525, %v1527
  %v1570 = vsel %vm221, %v1529, %v1531
  %v1571 = vsel %vm221, %v1531, %v1533
  %v1572 = vsel %vm221, %v1535, %v1537
  %v1573 = vsel %vm221, %v1537, %v1539
  %v1574 = vsel %vm221, %v1541, %v1543
  %v1575 = vsel %vm221, %v1543, %v1545
  %v1576 = vsel %vm221, %v1547, %v1549
  %v1577 = vsel %vm221, %v1549, %v1551
  %v1578 = vsel %vm221, %v1553, %v1555
  %v1579 = vsel %vm221, %v1555, %v1557
  %v1580 = vsel %vm221, %v1559, %v1561
  %v1581 = vsel %vm221, %v1561, %v1563
  %v1601 = vsel %vm258, %v1508, 0
  %1603 = vmatpush.bf16.msra.mxu0 %v1578
  %1604 = vmatpush.bf16.msra.mxu0 %v1576
  %1605 = vmatpush.bf16.msra.mxu0 %v1574
  %1606 = vmatpush.bf16.msra.mxu0 %v1572
  %1607 = vmatpush.bf16.msra.mxu0 %v1570
  %1608 = vmatpush.bf16.msra.mxu0 %v1568
  %1609 = vmatpush.bf16.msra.mxu0 %v1566
  %1610 = vmatpush.bf16.msra.mxu0 %v1564
  %1611 = vmatmul.bf16.gmra.mxu0 %v1507
  %v1612 = vpop.f32.mrf.mxu0
  %v1613 = vadd.f32 %v1494, %v1612
  %v1614 = vpop.f32.mrf.mxu0
  %v1615 = vadd.f32 %v1499, %v1614
  %1616 = vdwg.mxu0
  %1617 = vmatpush.bf16.msra.mxu0 0
  %1618 = vmatpush.bf16.msra.mxu0 0
  %1619 = vmatpush.bf16.msra.mxu0 0
  %1620 = vmatpush.bf16.msra.mxu0 0
  %1621 = vmatpush.bf16.msra.mxu0 0
  %1622 = vmatpush.bf16.msra.mxu0 0
  %1623 = vmatpush.bf16.msra.mxu0 0
  %1624 = vmatpush.bf16.msra.mxu0 %v1580
  %1625 = vmatmul.bf16.gmra.mxu0 %v1601
  %v1626 = vpop.f32.mrf.mxu0
  %v1627 = vadd.f32 %v1613, %v1626
  %v1628 = vpop.f32.mrf.mxu0
  %v1629 = vadd.f32 %v1615, %v1628
  %1630 = vdwg.mxu0
  %1631 = vmatpush.bf16.msra.mxu0 %v1579
  %1632 = vmatpush.bf16.msra.mxu0 %v1577
  %1633 = vmatpush.bf16.msra.mxu0 %v1575
  %1634 = vmatpush.bf16.msra.mxu0 %v1573
  %1635 = vmatpush.bf16.msra.mxu0 %v1571
  %1636 = vmatpush.bf16.msra.mxu0 %v1569
  %1637 = vmatpush.bf16.msra.mxu0 %v1567
  %1638 = vmatpush.bf16.msra.mxu0 %v1565
  %1639 = vmatmul.bf16.gmra.mxu0 %v1507
  %v1640 = vpop.f32.mrf.mxu0
  %v1641 = vadd.f32 %v1494, %v1640
  %v1642 = vpop.f32.mrf.mxu0
  %v1643 = vadd.f32 %v1499, %v1642
  %1644 = vdwg.mxu0
  %1645 = vmatpush.bf16.msra.mxu0 0
  %1646 = vmatpush.bf16.msra.mxu0 0
  %1647 = vmatpush.bf16.msra.mxu0 0
  %1648 = vmatpush.bf16.msra.mxu0 0
  %1649 = vmatpush.bf16.msra.mxu0 0
  %1650 = vmatpush.bf16.msra.mxu0 0
  %1651 = vmatpush.bf16.msra.mxu0 0
  %1652 = vmatpush.bf16.msra.mxu0 %v1581
  %1653 = vmatmul.bf16.gmra.mxu0 %v1601
  %v1654 = vpop.f32.mrf.mxu0
  %v1655 = vadd.f32 %v1641, %v1654
  %v1656 = vpop.f32.mrf.mxu0
  %v1657 = vadd.f32 %v1643, %v1656
  %1658 = vdwg.mxu0
  %v1659 = vld [vmem:[#allocation3] sm:$0xff]
  %v1660 = vld [vmem:[#allocation3 + $0x8] sm:$0xff]
  %v1661 = vld [vmem:[#allocation3 + $0x10] sm:$0xff]
  %v1662 = vld [vmem:[#allocation3 + $0x18] sm:$0xff]
  %v1663 = vadd.f32 %v1627, %v1659
  %v1664 = vadd.f32 %v1655, %v1660
  %v1665 = vadd.f32 %v1629, %v1661
  %v1666 = vadd.f32 %v1657, %v1662
  %1667 = vst [vmem:[#allocation4] sm:$0xff] %v1663
  %1668 = vst.msk [vmem:[#allocation4 + $0x8] sm:$0xff] %vm319, %v1664
  %1669 = vst [vmem:[#allocation4 + $0x10] sm:$0xff] %v1665
  %1670 = vst.msk [vmem:[#allocation4 + $0x18] sm:$0xff] %vm319, %v1666
  %v1671 = vld [vmem:[#allocation4] sm:$0xff]
  %v1672 = vld [vmem:[#allocation4 + $0x8] sm:$0xff]
  %v1673 = vld [vmem:[#allocation4 + $0x10] sm:$0xff]
  %v1674 = vld [vmem:[#allocation4 + $0x18] sm:$0xff]
  %v1675 = vmul.f32 %v1671, %v332
  %v1676 = vmul.f32 %v1672, %v333
  %v1677 = vmul.f32 %v1673, %v332
  %v1678 = vmul.f32 %v1674, %v333
  %v1679 = vpack.c.bf16 %v1676, %v1675
  %v1680 = vpack.c.bf16 %v1678, %v1677
  %1681 = vst.msk [vmem:[#allocation2 + $0x4] sm:$0xff] %vm344, %v1679
  %1682 = vst.msk [vmem:[#allocation2 + $0x10] sm:$0xff] %vm344, %v1680
  %v1683 = vld [vmem:[#allocation2] sm:$0xff]
  %v1684 = vld [vmem:[#allocation2 + $0x8] sm:$0xf]
  %v1685 = vld [vmem:[#allocation2 + $0xc] sm:$0xff]
  %v1686 = vld [vmem:[#allocation2 + $0x14] sm:$0xf]
  %v1687 = vld [vmem:[#allocation2 + $0x4] sm:$0xff]
  %v1688 = vld [vmem:[#allocation2 + $0x10] sm:$0xff]
  %v1693 = vunpack.c.l.b16 %v1683
  %v1694 = vunpack.c.h.b16 %v1683
  %v1695 = vunpack.c.l.b16 %v1684
  %v1696 = vunpack.c.l.b16 %v1685
  %v1697 = vunpack.c.h.b16 %v1685
  %v1698 = vunpack.c.l.b16 %v1686
  %v1699 = vpack.c.b16 %v1696, %v1693
  %v1700 = vpack.c.b16 %v1697, %v1694
  %v1701 = vpack.c.b16 %v1698, %v1695
  %1702 = vrot.lane.b32.xlu0 %v1699, 127
  %v1703 = vpop.permute.xlu0 %1702
  %1704 = vrot.lane.b32.xlu0 %v1700, 127
  %v1705 = vpop.permute.xlu0 %1704
  %1706 = vrot.lane.b32.xlu0 %v1701, 127
  %v1707 = vpop.permute.xlu0 %1706
  %v1708 = vsel %vm85, %v1703, %v1705
  %v1709 = vsel %vm85, %v1705, %v1707
  %1710 = vrot.lane.b32.xlu0 %v1699, 126
  %v1711 = vpop.permute.xlu0 %1710
  %1712 = vrot.lane.b32.xlu0 %v1700, 126
  %v1713 = vpop.permute.xlu0 %1712
  %1714 = vrot.lane.b32.xlu0 %v1701, 126
  %v1715 = vpop.permute.xlu0 %1714
  %v1716 = vsel %vm94, %v1711, %v1713
  %v1717 = vsel %vm94, %v1713, %v1715
  %1718 = vrot.lane.b32.xlu0 %v1699, 118
  %v1719 = vpop.permute.xlu0 %1718
  %1720 = vrot.lane.b32.xlu0 %v1700, 118
  %v1721 = vpop.permute.xlu0 %1720
  %1722 = vrot.lane.b32.xlu0 %v1701, 118
  %v1723 = vpop.permute.xlu0 %1722
  %v1724 = vsel %vm103, %v1719, %v1721
  %v1725 = vsel %vm103, %v1721, %v1723
  %v1728 = vunpack.c.l.b16 %v1687
  %v1729 = vunpack.c.h.b16 %v1687
  %v1730 = vunpack.c.l.b16 %v1688
  %v1731 = vunpack.c.h.b16 %v1688
  %v1732 = vpack.c.b16 %v1730, %v1728
  %v1733 = vpack.c.b16 %v1731, %v1729
  %1734 = vrot.lane.b32.xlu0 %v1732, 117
  %v1735 = vpop.permute.xlu0 %1734
  %1736 = vrot.lane.b32.xlu0 %v1733, 117
  %v1737 = vpop.permute.xlu0 %1736
  %v1738 = vsel %vm118, %v1735, %v1737
  %1739 = vrot.lane.b32.xlu0 %v1732, 116
  %v1740 = vpop.permute.xlu0 %1739
  %1741 = vrot.lane.b32.xlu0 %v1733, 116
  %v1742 = vpop.permute.xlu0 %1741
  %v1743 = vsel %vm124, %v1740, %v1742
  %1744 = vrot.lane.b32.xlu0 %v1732, 108
  %v1745 = vpop.permute.xlu0 %1744
  %1746 = vrot.lane.b32.xlu0 %v1733, 108
  %v1747 = vpop.permute.xlu0 %1746
  %v1748 = vsel %vm130, %v1745, %v1747
  %1749 = vrot.lane.b32.xlu0 %v1732, 107
  %v1750 = vpop.permute.xlu0 %1749
  %1751 = vrot.lane.b32.xlu0 %v1733, 107
  %v1752 = vpop.permute.xlu0 %1751
  %v1753 = vsel %vm136, %v1750, %v1752
  %1754 = vrot.lane.b32.xlu0 %v1732, 106
  %v1755 = vpop.permute.xlu0 %1754
  %1756 = vrot.lane.b32.xlu0 %v1733, 106
  %v1757 = vpop.permute.xlu0 %1756
  %v1758 = vsel %vm142, %v1755, %v1757
  %v1759 = vld [vmem:[%s14] sm:$0xff]
  %v1760 = vld [vmem:[%s14 + $0x8] sm:$0xff]
  %v1761 = vld [vmem:[%s14 + $0x10] sm:$0xff]
  %v1762 = vld [vmem:[%s14 + $0x18] sm:$0xff]
  %v1763 = vld [vmem:[%s14 + $0x20] sm:$0xff]
  %v1764 = vld [vmem:[%s14 + $0x28] sm:$0xff]
  %v1765 = vld [vmem:[%s14 + $0x30] sm:$0xff]
  %v1766 = vld [vmem:[%s14 + $0x38] sm:$0xff]
  %v1767 = vld [vmem:[%s15] sm:$0xff]
  %v1768 = vld [vmem:[%s15 + $0x8] sm:$0xff]
  %v1769 = vld [vmem:[%s15 + $0x10] sm:$0xff]
  %v1770 = vld [vmem:[%s15 + $0x18] sm:$0xff]
  %v1771 = vld [vmem:[%s15 + $0x20] sm:$0xff]
  %v1772 = vld [vmem:[%s15 + $0x28] sm:$0xff]
  %v1773 = vld [vmem:[%s15 + $0x30] sm:$0xff]
  %v1774 = vld [vmem:[%s15 + $0x38] sm:$0xff]
  %1776 = vset.pattern.permute.xlu0 0
  %1777 = vperm.xlu0 %1776, %v1767
  %v1778 = vpop.permute.xlu0 %1777
  %1781 = vset.pattern.permute.xlu0 0
  %1782 = vperm.xlu0 %1781, %v1768
  %v1783 = vpop.permute.xlu0 %1782
  %1786 = vset.pattern.permute.xlu0 0
  %1787 = vperm.xlu0 %1786, %v1769
  %v1788 = vpop.permute.xlu0 %1787
  %1791 = vset.pattern.permute.xlu0 0
  %1792 = vperm.xlu0 %1791, %v1770
  %v1793 = vpop.permute.xlu0 %1792
  %1796 = vset.pattern.permute.xlu0 0
  %1797 = vperm.xlu0 %1796, %v1771
  %v1798 = vpop.permute.xlu0 %1797
  %1801 = vset.pattern.permute.xlu0 0
  %1802 = vperm.xlu0 %1801, %v1772
  %v1803 = vpop.permute.xlu0 %1802
  %1806 = vset.pattern.permute.xlu0 0
  %1807 = vperm.xlu0 %1806, %v1773
  %v1808 = vpop.permute.xlu0 %1807
  %1811 = vset.pattern.permute.xlu0 0
  %1812 = vperm.xlu0 %1811, %v1774
  %v1813 = vpop.permute.xlu0 %1812
  %v1823 = vunpack.c.l.b16 %v1759
  %v1824 = vunpack.c.h.b16 %v1759
  %v1825 = vunpack.c.l.b16 %v1760
  %v1826 = vunpack.c.h.b16 %v1760
  %v1827 = vunpack.c.l.b16 %v1761
  %v1828 = vunpack.c.h.b16 %v1761
  %v1829 = vunpack.c.l.b16 %v1762
  %v1830 = vunpack.c.h.b16 %v1762
  %v1831 = vunpack.c.l.b16 %v1763
  %v1832 = vunpack.c.h.b16 %v1763
  %v1833 = vunpack.c.l.b16 %v1764
  %v1834 = vunpack.c.h.b16 %v1764
  %v1835 = vunpack.c.l.b16 %v1765
  %v1836 = vunpack.c.h.b16 %v1765
  %v1837 = vunpack.c.l.b16 %v1766
  %v1838 = vunpack.c.h.b16 %v1766
  %v1839 = vpack.c.b16 %v1825, %v1823
  %v1840 = vpack.c.b16 %v1826, %v1824
  %v1841 = vpack.c.b16 %v1829, %v1827
  %v1842 = vpack.c.b16 %v1830, %v1828
  %v1843 = vpack.c.b16 %v1833, %v1831
  %v1844 = vpack.c.b16 %v1834, %v1832
  %v1845 = vpack.c.b16 %v1837, %v1835
  %v1846 = vpack.c.b16 %v1838, %v1836
  %1851 = vrot.lane.b32.xlu0 %v1699, 11
  %v1852 = vpop.permute.xlu0 %1851
  %1853 = vrot.lane.b32.xlu0 %v1700, 11
  %v1854 = vpop.permute.xlu0 %1853
  %1855 = vrot.lane.b32.xlu0 %v1701, 11
  %v1856 = vpop.permute.xlu0 %1855
  %1857 = vrot.lane.b32.xlu0 %v1708, 11
  %v1858 = vpop.permute.xlu0 %1857
  %1859 = vrot.lane.b32.xlu0 %v1709, 11
  %v1860 = vpop.permute.xlu0 %1859
  %1861 = vrot.lane.b32.xlu0 %v1707, 11
  %v1862 = vpop.permute.xlu0 %1861
  %1863 = vrot.lane.b32.xlu0 %v1716, 11
  %v1864 = vpop.permute.xlu0 %1863
  %1865 = vrot.lane.b32.xlu0 %v1717, 11
  %v1866 = vpop.permute.xlu0 %1865
  %1867 = vrot.lane.b32.xlu0 %v1715, 11
  %v1868 = vpop.permute.xlu0 %1867
  %1869 = vrot.lane.b32.xlu0 %v1724, 11
  %v1870 = vpop.permute.xlu0 %1869
  %1871 = vrot.lane.b32.xlu0 %v1725, 11
  %v1872 = vpop.permute.xlu0 %1871
  %1873 = vrot.lane.b32.xlu0 %v1723, 11
  %v1874 = vpop.permute.xlu0 %1873
  %1875 = vrot.lane.b32.xlu0 %v1735, 11
  %v1876 = vpop.permute.xlu0 %1875
  %1877 = vrot.lane.b32.xlu0 %v1738, 11
  %v1878 = vpop.permute.xlu0 %1877
  %1879 = vrot.lane.b32.xlu0 %v1737, 11
  %v1880 = vpop.permute.xlu0 %1879
  %1881 = vrot.lane.b32.xlu0 %v1740, 11
  %v1882 = vpop.permute.xlu0 %1881
  %1883 = vrot.lane.b32.xlu0 %v1743, 11
  %v1884 = vpop.permute.xlu0 %1883
  %1885 = vrot.lane.b32.xlu0 %v1742, 11
  %v1886 = vpop.permute.xlu0 %1885
  %1887 = vrot.lane.b32.xlu0 %v1745, 11
  %v1888 = vpop.permute.xlu0 %1887
  %1889 = vrot.lane.b32.xlu0 %v1748, 11
  %v1890 = vpop.permute.xlu0 %1889
  %1891 = vrot.lane.b32.xlu0 %v1747, 11
  %v1892 = vpop.permute.xlu0 %1891
  %1893 = vrot.lane.b32.xlu0 %v1750, 11
  %v1894 = vpop.permute.xlu0 %1893
  %1895 = vrot.lane.b32.xlu0 %v1753, 11
  %v1896 = vpop.permute.xlu0 %1895
  %1897 = vrot.lane.b32.xlu0 %v1752, 11
  %v1898 = vpop.permute.xlu0 %1897
  %1899 = vrot.lane.b32.xlu0 %v1755, 11
  %v1900 = vpop.permute.xlu0 %1899
  %1901 = vrot.lane.b32.xlu0 %v1758, 11
  %v1902 = vpop.permute.xlu0 %1901
  %1903 = vrot.lane.b32.xlu0 %v1757, 11
  %v1904 = vpop.permute.xlu0 %1903
  %v1905 = vsel %vm221, %v1852, %v1854
  %v1906 = vsel %vm221, %v1854, %v1856
  %v1907 = vsel %vm221, %v1858, %v1860
  %v1908 = vsel %vm221, %v1860, %v1862
  %v1909 = vsel %vm221, %v1864, %v1866
  %v1910 = vsel %vm221, %v1866, %v1868
  %v1911 = vsel %vm221, %v1870, %v1872
  %v1912 = vsel %vm221, %v1872, %v1874
  %v1913 = vsel %vm221, %v1876, %v1878
  %v1914 = vsel %vm221, %v1878, %v1880
  %v1915 = vsel %vm221, %v1882, %v1884
  %v1916 = vsel %vm221, %v1884, %v1886
  %v1917 = vsel %vm221, %v1888, %v1890
  %v1918 = vsel %vm221, %v1890, %v1892
  %v1919 = vsel %vm221, %v1894, %v1896
  %v1920 = vsel %vm221, %v1896, %v1898
  %v1921 = vsel %vm221, %v1900, %v1902
  %v1922 = vsel %vm221, %v1902, %v1904
  %v1942 = vsel %vm258, %v1840, 0
  %v1945 = vsel %vm258, %v1842, 0
  %v1948 = vsel %vm258, %v1844, 0
  %v1951 = vsel %vm258, %v1846, 0
  %1953 = vmatpush.bf16.msra.mxu0 %v1919
  %1954 = vmatpush.bf16.msra.mxu0 %v1917
  %1955 = vmatpush.bf16.msra.mxu0 %v1915
  %1956 = vmatpush.bf16.msra.mxu0 %v1913
  %1957 = vmatpush.bf16.msra.mxu0 %v1911
  %1958 = vmatpush.bf16.msra.mxu0 %v1909
  %1959 = vmatpush.bf16.msra.mxu0 %v1907
  %1960 = vmatpush.bf16.msra.mxu0 %v1905
  %1961 = vmatmul.bf16.gmra.mxu0 %v1839
  %v1962 = vpop.f32.mrf.mxu0
  %v1963 = vadd.f32 %v1778, %v1962
  %v1964 = vpop.f32.mrf.mxu0
  %v1965 = vadd.f32 %v1783, %v1964
  %1966 = vmatmul.bf16.gmra.mxu0 %v1841
  %v1967 = vpop.f32.mrf.mxu0
  %v1968 = vadd.f32 %v1788, %v1967
  %v1969 = vpop.f32.mrf.mxu0
  %v1970 = vadd.f32 %v1793, %v1969
  %1971 = vmatmul.bf16.gmra.mxu0 %v1843
  %v1972 = vpop.f32.mrf.mxu0
  %v1973 = vadd.f32 %v1798, %v1972
  %v1974 = vpop.f32.mrf.mxu0
  %v1975 = vadd.f32 %v1803, %v1974
  %1976 = vmatmul.bf16.gmra.mxu0 %v1845
  %v1977 = vpop.f32.mrf.mxu0
  %v1978 = vadd.f32 %v1808, %v1977
  %v1979 = vpop.f32.mrf.mxu0
  %v1980 = vadd.f32 %v1813, %v1979
  %1981 = vdwg.mxu0
  %1982 = vmatpush.bf16.msra.mxu0 0
  %1983 = vmatpush.bf16.msra.mxu0 0
  %1984 = vmatpush.bf16.msra.mxu0 0
  %1985 = vmatpush.bf16.msra.mxu0 0
  %1986 = vmatpush.bf16.msra.mxu0 0
  %1987 = vmatpush.bf16.msra.mxu0 0
  %1988 = vmatpush.bf16.msra.mxu0 0
  %1989 = vmatpush.bf16.msra.mxu0 %v1921
  %1990 = vmatmul.bf16.gmra.mxu0 %v1942
  %v1991 = vpop.f32.mrf.mxu0
  %v1992 = vadd.f32 %v1963, %v1991
  %v1993 = vpop.f32.mrf.mxu0
  %v1994 = vadd.f32 %v1965, %v1993
  %1995 = vmatmul.bf16.gmra.mxu0 %v1945
  %v1996 = vpop.f32.mrf.mxu0
  %v1997 = vadd.f32 %v1968, %v1996
  %v1998 = vpop.f32.mrf.mxu0
  %v1999 = vadd.f32 %v1970, %v1998
  %2000 = vmatmul.bf16.gmra.mxu0 %v1948
  %v2001 = vpop.f32.mrf.mxu0
  %v2002 = vadd.f32 %v1973, %v2001
  %v2003 = vpop.f32.mrf.mxu0
  %v2004 = vadd.f32 %v1975, %v2003
  %2005 = vmatmul.bf16.gmra.mxu0 %v1951
  %v2006 = vpop.f32.mrf.mxu0
  %v2007 = vadd.f32 %v1978, %v2006
  %v2008 = vpop.f32.mrf.mxu0
  %v2009 = vadd.f32 %v1980, %v2008
  %2010 = vdwg.mxu0
  %2011 = vmatpush.bf16.msra.mxu0 %v1920
  %2012 = vmatpush.bf16.msra.mxu0 %v1918
  %2013 = vmatpush.bf16.msra.mxu0 %v1916
  %2014 = vmatpush.bf16.msra.mxu0 %v1914
  %2015 = vmatpush.bf16.msra.mxu0 %v1912
  %2016 = vmatpush.bf16.msra.mxu0 %v1910
  %2017 = vmatpush.bf16.msra.mxu0 %v1908
  %2018 = vmatpush.bf16.msra.mxu0 %v1906
  %2019 = vmatmul.bf16.gmra.mxu0 %v1839
  %v2020 = vpop.f32.mrf.mxu0
  %v2021 = vadd.f32 %v1778, %v2020
  %v2022 = vpop.f32.mrf.mxu0
  %v2023 = vadd.f32 %v1783, %v2022
  %2024 = vmatmul.bf16.gmra.mxu0 %v1841
  %v2025 = vpop.f32.mrf.mxu0
  %v2026 = vadd.f32 %v1788, %v2025
  %v2027 = vpop.f32.mrf.mxu0
  %v2028 = vadd.f32 %v1793, %v2027
  %2029 = vmatmul.bf16.gmra.mxu0 %v1843
  %v2030 = vpop.f32.mrf.mxu0
  %v2031 = vadd.f32 %v1798, %v2030
  %v2032 = vpop.f32.mrf.mxu0
  %v2033 = vadd.f32 %v1803, %v2032
  %2034 = vmatmul.bf16.gmra.mxu0 %v1845
  %v2035 = vpop.f32.mrf.mxu0
  %v2036 = vadd.f32 %v1808, %v2035
  %v2037 = vpop.f32.mrf.mxu0
  %v2038 = vadd.f32 %v1813, %v2037
  %2039 = vdwg.mxu0
  %2040 = vmatpush.bf16.msra.mxu0 0
  %2041 = vmatpush.bf16.msra.mxu0 0
  %2042 = vmatpush.bf16.msra.mxu0 0
  %2043 = vmatpush.bf16.msra.mxu0 0
  %2044 = vmatpush.bf16.msra.mxu0 0
  %2045 = vmatpush.bf16.msra.mxu0 0
  %2046 = vmatpush.bf16.msra.mxu0 0
  %2047 = vmatpush.bf16.msra.mxu0 %v1922
  %2048 = vmatmul.bf16.gmra.mxu0 %v1942
  %v2049 = vpop.f32.mrf.mxu0
  %v2050 = vadd.f32 %v2021, %v2049
  %v2051 = vpop.f32.mrf.mxu0
  %v2052 = vadd.f32 %v2023, %v2051
  %2053 = vmatmul.bf16.gmra.mxu0 %v1945
  %v2054 = vpop.f32.mrf.mxu0
  %v2055 = vadd.f32 %v2026, %v2054
  %v2056 = vpop.f32.mrf.mxu0
  %v2057 = vadd.f32 %v2028, %v2056
  %2058 = vmatmul.bf16.gmra.mxu0 %v1948
  %v2059 = vpop.f32.mrf.mxu0
  %v2060 = vadd.f32 %v2031, %v2059
  %v2061 = vpop.f32.mrf.mxu0
  %v2062 = vadd.f32 %v2033, %v2061
  %2063 = vmatmul.bf16.gmra.mxu0 %v1951
  %v2064 = vpop.f32.mrf.mxu0
  %v2065 = vadd.f32 %v2036, %v2064
  %v2066 = vpop.f32.mrf.mxu0
  %v2067 = vadd.f32 %v2038, %v2066
  %2068 = vdwg.mxu0
  %2069 = vst [vmem:[%s16] sm:$0xf] 0
  %2070 = vst [vmem:[%s16 + $0xc] sm:$0xf] 0
  %2071 = vst [vmem:[%s16 + $0x18] sm:$0xf] 0
  %2072 = vst [vmem:[%s16 + $0x24] sm:$0xf] 0
  %2073 = vst [vmem:[%s16 + $0x30] sm:$0xf] 0
  %2074 = vst [vmem:[%s16 + $0x3c] sm:$0xf] 0
  %2075 = vst [vmem:[%s16 + $0x48] sm:$0xf] 0
  %2076 = vst [vmem:[%s16 + $0x54] sm:$0xf] 0
  %2077 = vst.msk [vmem:[%s16 + $0x8] sm:$0xf] %vm57, 0
  %2078 = vst.msk [vmem:[%s16 + $0x14] sm:$0xf] %vm57, 0
  %2079 = vst.msk [vmem:[%s16 + $0x20] sm:$0xf] %vm57, 0
  %2080 = vst.msk [vmem:[%s16 + $0x2c] sm:$0xf] %vm57, 0
  %2081 = vst.msk [vmem:[%s16 + $0x38] sm:$0xf] %vm57, 0
  %2082 = vst.msk [vmem:[%s16 + $0x44] sm:$0xf] %vm57, 0
  %2083 = vst.msk [vmem:[%s16 + $0x50] sm:$0xf] %vm57, 0
  %2084 = vst.msk [vmem:[%s16 + $0x5c] sm:$0xf] %vm57, 0
  %v2085 = vpack.c.bf16 %v2050, %v1992
  %v2086 = vpack.c.bf16 %v2052, %v1994
  %v2087 = vpack.c.bf16 %v2055, %v1997
  %v2088 = vpack.c.bf16 %v2057, %v1999
  %v2089 = vpack.c.bf16 %v2060, %v2002
  %v2090 = vpack.c.bf16 %v2062, %v2004
  %v2091 = vpack.c.bf16 %v2065, %v2007
  %v2092 = vpack.c.bf16 %v2067, %v2009
  %2093 = vst.msk [vmem:[%s16 + $0x4] sm:$0xff] %vm344, %v2085
  %2094 = vst.msk [vmem:[%s16 + $0x10] sm:$0xff] %vm344, %v2086
  %2095 = vst.msk [vmem:[%s16 + $0x1c] sm:$0xff] %vm344, %v2087
  %2096 = vst.msk [vmem:[%s16 + $0x28] sm:$0xff] %vm344, %v2088
  %2097 = vst.msk [vmem:[%s16 + $0x34] sm:$0xff] %vm344, %v2089
  %2098 = vst.msk [vmem:[%s16 + $0x40] sm:$0xff] %vm344, %v2090
  %2099 = vst.msk [vmem:[%s16 + $0x4c] sm:$0xff] %vm344, %v2091
  %2100 = vst.msk [vmem:[%s16 + $0x58] sm:$0xff] %vm344, %v2092
  // Predicated region
  $region66: #{edsr_forward.3} parent=0 // pred_check
    _
  $region67: #{edsr_forward.3} parent=0 // pred_check_branch
    %2102 = sbr.rel (0) target = $region69
  $region68: #{edsr_forward.3} parent=0 // pred_region
    _
  $region69: #{edsr_forward.3} parent=0 // pred_fallthru
    _
  // Predicated region
  $region70: #{edsr_forward.3} parent=0 // pred_check
    _
  $region71: #{edsr_forward.3} parent=0 // pred_check_branch
    %2104 = sbr.rel (0) target = $region73
  $region72: #{edsr_forward.3} parent=0 // pred_region
    _
  $region73: #{edsr_forward.3} parent=0 // pred_fallthru
    _

// kernel: edsr_forward.4
$region0: #{edsr_forward.4}
  #allocation0 [shape = 'u32[]', space=smem, size = 0x4, offset = 0x4, fixed_abs, tag = 'smem constant byte address 0x4 - core index']
  #allocation1 [shape = 'u32[72,128]{1,0:T(1,128)}', space=vmem, size = 0x9000, scoped, tag = 'internal scratch']
  %s0 = inlined_call_operand.vmem [shape: bf16[1,16,757], index: 0, kind: input, shape index: {}]
  %s1 = inlined_call_operand.vmem [shape: bf16[64,144], index: 1, kind: input, shape index: {}]
  %s2 = inlined_call_operand.vmem [shape: f32[64,1], index: 2, kind: input, shape index: {}]
  %s3 = inlined_call_operand.vmem [shape: bf16[1,64,757], index: 3, kind: output, shape index: {}]
  %s4 = sld [smem:[#allocation0]]
  $region22: #{edsr_forward.4} parent=0
    _
  %s6 = ssub.s32 1, %s4
  %s7 = scalar_select 0, %s6, %s4
  // Predicated region
  $region2: #{edsr_forward.4} parent=0 // pred_check
    _
  $region3: #{edsr_forward.4} parent=0 // pred_check_branch
    %9 = sbr.rel (0) target = $region5
  $region4: #{edsr_forward.4} parent=0 // pred_region
    _
  $region5: #{edsr_forward.4} parent=0 // pred_fallthru
    _
  // Predicated region
  $region6: #{edsr_forward.4} parent=0 // pred_check
    _
  $region7: #{edsr_forward.4} parent=0 // pred_check_branch
    %11 = sbr.rel (0) target = $region9
  $region8: #{edsr_forward.4} parent=0 // pred_region
    _
  $region9: #{edsr_forward.4} parent=0 // pred_fallthru
    _
  // Predicated region
  $region10: #{edsr_forward.4} parent=0 // pred_check
    _
  $region11: #{edsr_forward.4} parent=0 // pred_check_branch
    %13 = sbr.rel (0) target = $region13
  $region12: #{edsr_forward.4} parent=0 // pred_region
    _
  $region13: #{edsr_forward.4} parent=0 // pred_fallthru
    _
  %v15 = vld [vmem:[%s0] sm:$0xff]
  %v16 = vld [vmem:[%s0 + $0x8] sm:$0xff]
  %v17 = vld [vmem:[%s0 + $0x10] sm:$0xff]
  %v18 = vld [vmem:[%s0 + $0x18] sm:$0xff]
  %v19 = vld [vmem:[%s0 + $0x20] sm:$0xff]
  %v20 = vld [vmem:[%s0 + $0x28] sm:$0xff]
  %v21 = vld [vmem:[%s0 + $0x4] sm:$0xff]
  %v22 = vld [vmem:[%s0 + $0xc] sm:$0xff]
  %v23 = vld [vmem:[%s0 + $0x14] sm:$0xf]
  %v24 = vld [vmem:[%s0 + $0x1c] sm:$0xff]
  %v25 = vld [vmem:[%s0 + $0x24] sm:$0xff]
  %v26 = vld [vmem:[%s0 + $0x2c] sm:$0xf]
  %v33 = vunpack.c.l.b16 %v15
  %v34 = vunpack.c.h.b16 %v15
  %v35 = vunpack.c.l.b16 %v16
  %v36 = vunpack.c.h.b16 %v16
  %v37 = vunpack.c.l.b16 %v17
  %v38 = vunpack.c.h.b16 %v17
  %v39 = vunpack.c.l.b16 %v18
  %v40 = vunpack.c.h.b16 %v18
  %v41 = vunpack.c.l.b16 %v19
  %v42 = vunpack.c.h.b16 %v19
  %v43 = vunpack.c.l.b16 %v20
  %v44 = vunpack.c.h.b16 %v20
  %v45 = vpack.c.b16 %v39, %v33
  %v46 = vpack.c.b16 %v40, %v34
  %v47 = vpack.c.b16 %v41, %v35
  %v48 = vpack.c.b16 %v42, %v36
  %v49 = vpack.c.b16 %v43, %v37
  %v50 = vpack.c.b16 %v44, %v38
  %51 = vrot.lane.b32.xlu0 %v45, 127
  %v52 = vpop.permute.xlu0 %51
  %53 = vrot.lane.b32.xlu0 %v46, 127
  %v54 = vpop.permute.xlu0 %53
  %55 = vrot.lane.b32.xlu0 %v47, 127
  %v56 = vpop.permute.xlu0 %55
  %57 = vrot.lane.b32.xlu0 %v48, 127
  %v58 = vpop.permute.xlu0 %57
  %59 = vrot.lane.b32.xlu0 %v49, 127
  %v60 = vpop.permute.xlu0 %59
  %61 = vrot.lane.b32.xlu0 %v50, 127
  %v62 = vpop.permute.xlu0 %61
  %vm63 = vcmask 1039360
  %v64 = vsel %vm63, %v52, %v54
  %v65 = vsel %vm63, %v54, %v56
  %v66 = vsel %vm63, %v56, %v58
  %v67 = vsel %vm63, %v58, %v60
  %v68 = vsel %vm63, %v60, %v62
  %69 = vrot.lane.b32.xlu0 %v45, 126
  %v70 = vpop.permute.xlu0 %69
  %71 = vrot.lane.b32.xlu0 %v46, 126
  %v72 = vpop.permute.xlu0 %71
  %73 = vrot.lane.b32.xlu0 %v47, 126
  %v74 = vpop.permute.xlu0 %73
  %75 = vrot.lane.b32.xlu0 %v48, 126
  %v76 = vpop.permute.xlu0 %75
  %77 = vrot.lane.b32.xlu0 %v49, 126
  %v78 = vpop.permute.xlu0 %77
  %79 = vrot.lane.b32.xlu0 %v50, 126
  %v80 = vpop.permute.xlu0 %79
  %vm81 = vcmask 1031168
  %v82 = vsel %vm81, %v70, %v72
  %v83 = vsel %vm81, %v72, %v74
  %v84 = vsel %vm81, %v74, %v76
  %v85 = vsel %vm81, %v76, %v78
  %v86 = vsel %vm81, %v78, %v80
  %87 = vrot.lane.b32.xlu0 %v45, 110
  %v88 = vpop.permute.xlu0 %87
  %89 = vrot.lane.b32.xlu0 %v46, 110
  %v90 = vpop.permute.xlu0 %89
  %91 = vrot.lane.b32.xlu0 %v47, 110
  %v92 = vpop.permute.xlu0 %91
  %93 = vrot.lane.b32.xlu0 %v48, 110
  %v94 = vpop.permute.xlu0 %93
  %95 = vrot.lane.b32.xlu0 %v49, 110
  %v96 = vpop.permute.xlu0 %95
  %97 = vrot.lane.b32.xlu0 %v50, 110
  %v98 = vpop.permute.xlu0 %97
  %vm99 = vcmask 900096
  %v100 = vsel %vm99, %v88, %v90
  %v101 = vsel %vm99, %v90, %v92
  %v102 = vsel %vm99, %v92, %v94
  %v103 = vsel %vm99, %v94, %v96
  %v104 = vsel %vm99, %v96, %v98
  %v111 = vunpack.c.l.b16 %v21
  %v112 = vunpack.c.h.b16 %v21
  %v113 = vunpack.c.l.b16 %v22
  %v114 = vunpack.c.h.b16 %v22
  %v115 = vunpack.c.l.b16 %v23
  %v116 = vunpack.c.l.b16 %v24
  %v117 = vunpack.c.h.b16 %v24
  %v118 = vunpack.c.l.b16 %v25
  %v119 = vunpack.c.h.b16 %v25
  %v120 = vunpack.c.l.b16 %v26
  %v121 = vpack.c.b16 %v116, %v111
  %v122 = vpack.c.b16 %v117, %v112
  %v123 = vpack.c.b16 %v118, %v113
  %v124 = vpack.c.b16 %v119, %v114
  %v125 = vpack.c.b16 %v120, %v115
  %126 = vrot.lane.b32.xlu0 %v121, 109
  %v127 = vpop.permute.xlu0 %126
  %128 = vrot.lane.b32.xlu0 %v122, 109
  %v129 = vpop.permute.xlu0 %128
  %130 = vrot.lane.b32.xlu0 %v123, 109
  %v131 = vpop.permute.xlu0 %130
  %132 = vrot.lane.b32.xlu0 %v124, 109
  %v133 = vpop.permute.xlu0 %132
  %134 = vrot.lane.b32.xlu0 %v125, 109
  %v135 = vpop.permute.xlu0 %134
  %vm136 = vcmask 891904
  %v137 = vsel %vm136, %v127, %v129
  %v138 = vsel %vm136, %v129, %v131
  %v139 = vsel %vm136, %v131, %v133
  %v140 = vsel %vm136, %v133, %v135
  %141 = vrot.lane.b32.xlu0 %v121, 108
  %v142 = vpop.permute.xlu0 %141
  %143 = vrot.lane.b32.xlu0 %v122, 108
  %v144 = vpop.permute.xlu0 %143
  %145 = vrot.lane.b32.xlu0 %v123, 108
  %v146 = vpop.permute.xlu0 %145
  %147 = vrot.lane.b32.xlu0 %v124, 108
  %v148 = vpop.permute.xlu0 %147
  %149 = vrot.lane.b32.xlu0 %v125, 108
  %v150 = vpop.permute.xlu0 %149
  %vm151 = vcmask 883712
  %v152 = vsel %vm151, %v142, %v144
  %v153 = vsel %vm151, %v144, %v146
  %v154 = vsel %vm151, %v146, %v148
  %v155 = vsel %vm151, %v148, %v150
  %156 = vrot.lane.b32.xlu0 %v121, 92
  %v157 = vpop.permute.xlu0 %156
  %158 = vrot.lane.b32.xlu0 %v122, 92
  %v159 = vpop.permute.xlu0 %158
  %160 = vrot.lane.b32.xlu0 %v123, 92
  %v161 = vpop.permute.xlu0 %160
  %162 = vrot.lane.b32.xlu0 %v124, 92
  %v163 = vpop.permute.xlu0 %162
  %164 = vrot.lane.b32.xlu0 %v125, 92
  %v165 = vpop.permute.xlu0 %164
  %vm166 = vcmask 752640
  %v167 = vsel %vm166, %v157, %v159
  %v168 = vsel %vm166, %v159, %v161
  %v169 = vsel %vm166, %v161, %v163
  %v170 = vsel %vm166, %v163, %v165
  %171 = vrot.lane.b32.xlu0 %v121, 91
  %v172 = vpop.permute.xlu0 %171
  %173 = vrot.lane.b32.xlu0 %v122, 91
  %v174 = vpop.permute.xlu0 %173
  %175 = vrot.lane.b32.xlu0 %v123, 91
  %v176 = vpop.permute.xlu0 %175
  %177 = vrot.lane.b32.xlu0 %v124, 91
  %v178 = vpop.permute.xlu0 %177
  %179 = vrot.lane.b32.xlu0 %v125, 91
  %v180 = vpop.permute.xlu0 %179
  %vm181 = vcmask 744448
  %v182 = vsel %vm181, %v172, %v174
  %v183 = vsel %vm181, %v174, %v176
  %v184 = vsel %vm181, %v176, %v178
  %v185 = vsel %vm181, %v178, %v180
  %186 = vrot.lane.b32.xlu0 %v121, 90
  %v187 = vpop.permute.xlu0 %186
  %188 = vrot.lane.b32.xlu0 %v122, 90
  %v189 = vpop.permute.xlu0 %188
  %190 = vrot.lane.b32.xlu0 %v123, 90
  %v191 = vpop.permute.xlu0 %190
  %192 = vrot.lane.b32.xlu0 %v124, 90
  %v193 = vpop.permute.xlu0 %192
  %194 = vrot.lane.b32.xlu0 %v125, 90
  %v195 = vpop.permute.xlu0 %194
  %vm196 = vcmask 736256
  %v197 = vsel %vm196, %v187, %v189
  %v198 = vsel %vm196, %v189, %v191
  %v199 = vsel %vm196, %v191, %v193
  %v200 = vsel %vm196, %v193, %v195
  %v201 = vld [vmem:[%s1] sm:$0xff]
  %v202 = vld [vmem:[%s1 + $0x8] sm:$0xff]
  %v203 = vld [vmem:[%s1 + $0x10] sm:$0xff]
  %v204 = vld [vmem:[%s1 + $0x18] sm:$0xff]
  %v205 = vld [vmem:[%s1 + $0x20] sm:$0xff]
  %v206 = vld [vmem:[%s1 + $0x28] sm:$0xff]
  %v207 = vld [vmem:[%s1 + $0x30] sm:$0xff]
  %v208 = vld [vmem:[%s1 + $0x38] sm:$0xff]
  %v209 = vld [vmem:[%s2] sm:$0xff]
  %v210 = vld [vmem:[%s2 + $0x8] sm:$0xff]
  %v211 = vld [vmem:[%s2 + $0x10] sm:$0xff]
  %v212 = vld [vmem:[%s2 + $0x18] sm:$0xff]
  %v213 = vld [vmem:[%s2 + $0x20] sm:$0xff]
  %v214 = vld [vmem:[%s2 + $0x28] sm:$0xff]
  %v215 = vld [vmem:[%s2 + $0x30] sm:$0xff]
  %v216 = vld [vmem:[%s2 + $0x38] sm:$0xff]
  %218 = vset.pattern.permute.xlu0 0
  %219 = vperm.xlu0 %218, %v209
  %v220 = vpop.permute.xlu0 %219
  %223 = vset.pattern.permute.xlu0 0
  %224 = vperm.xlu0 %223, %v210
  %v225 = vpop.permute.xlu0 %224
  %228 = vset.pattern.permute.xlu0 0
  %229 = vperm.xlu0 %228, %v211
  %v230 = vpop.permute.xlu0 %229
  %233 = vset.pattern.permute.xlu0 0
  %234 = vperm.xlu0 %233, %v212
  %v235 = vpop.permute.xlu0 %234
  %238 = vset.pattern.permute.xlu0 0
  %239 = vperm.xlu0 %238, %v213
  %v240 = vpop.permute.xlu0 %239
  %243 = vset.pattern.permute.xlu0 0
  %244 = vperm.xlu0 %243, %v214
  %v245 = vpop.permute.xlu0 %244
  %248 = vset.pattern.permute.xlu0 0
  %249 = vperm.xlu0 %248, %v215
  %v250 = vpop.permute.xlu0 %249
  %253 = vset.pattern.permute.xlu0 0
  %254 = vperm.xlu0 %253, %v216
  %v255 = vpop.permute.xlu0 %254
  %v265 = vunpack.c.l.b16 %v201
  %v266 = vunpack.c.h.b16 %v201
  %v267 = vunpack.c.l.b16 %v202
  %v268 = vunpack.c.h.b16 %v202
  %v269 = vunpack.c.l.b16 %v203
  %v270 = vunpack.c.h.b16 %v203
  %v271 = vunpack.c.l.b16 %v204
  %v272 = vunpack.c.h.b16 %v204
  %v273 = vunpack.c.l.b16 %v205
  %v274 = vunpack.c.h.b16 %v205
  %v275 = vunpack.c.l.b16 %v206
  %v276 = vunpack.c.h.b16 %v206
  %v277 = vunpack.c.l.b16 %v207
  %v278 = vunpack.c.h.b16 %v207
  %v279 = vunpack.c.l.b16 %v208
  %v280 = vunpack.c.h.b16 %v208
  %v281 = vpack.c.b16 %v267, %v265
  %v282 = vpack.c.b16 %v268, %v266
  %v283 = vpack.c.b16 %v271, %v269
  %v284 = vpack.c.b16 %v272, %v270
  %v285 = vpack.c.b16 %v275, %v273
  %v286 = vpack.c.b16 %v276, %v274
  %v287 = vpack.c.b16 %v279, %v277
  %v288 = vpack.c.b16 %v280, %v278
  %293 = vrot.lane.b32.xlu0 %v45, 19
  %v294 = vpop.permute.xlu0 %293
  %295 = vrot.lane.b32.xlu0 %v46, 19
  %v296 = vpop.permute.xlu0 %295
  %297 = vrot.lane.b32.xlu0 %v47, 19
  %v298 = vpop.permute.xlu0 %297
  %299 = vrot.lane.b32.xlu0 %v48, 19
  %v300 = vpop.permute.xlu0 %299
  %301 = vrot.lane.b32.xlu0 %v49, 19
  %v302 = vpop.permute.xlu0 %301
  %303 = vrot.lane.b32.xlu0 %v50, 19
  %v304 = vpop.permute.xlu0 %303
  %305 = vrot.lane.b32.xlu0 %v64, 19
  %v306 = vpop.permute.xlu0 %305
  %307 = vrot.lane.b32.xlu0 %v65, 19
  %v308 = vpop.permute.xlu0 %307
  %309 = vrot.lane.b32.xlu0 %v66, 19
  %v310 = vpop.permute.xlu0 %309
  %311 = vrot.lane.b32.xlu0 %v67, 19
  %v312 = vpop.permute.xlu0 %311
  %313 = vrot.lane.b32.xlu0 %v68, 19
  %v314 = vpop.permute.xlu0 %313
  %315 = vrot.lane.b32.xlu0 %v62, 19
  %v316 = vpop.permute.xlu0 %315
  %317 = vrot.lane.b32.xlu0 %v82, 19
  %v318 = vpop.permute.xlu0 %317
  %319 = vrot.lane.b32.xlu0 %v83, 19
  %v320 = vpop.permute.xlu0 %319
  %321 = vrot.lane.b32.xlu0 %v84, 19
  %v322 = vpop.permute.xlu0 %321
  %323 = vrot.lane.b32.xlu0 %v85, 19
  %v324 = vpop.permute.xlu0 %323
  %325 = vrot.lane.b32.xlu0 %v86, 19
  %v326 = vpop.permute.xlu0 %325
  %327 = vrot.lane.b32.xlu0 %v80, 19
  %v328 = vpop.permute.xlu0 %327
  %329 = vrot.lane.b32.xlu0 %v100, 19
  %v330 = vpop.permute.xlu0 %329
  %331 = vrot.lane.b32.xlu0 %v101, 19
  %v332 = vpop.permute.xlu0 %331
  %333 = vrot.lane.b32.xlu0 %v102, 19
  %v334 = vpop.permute.xlu0 %333
  %335 = vrot.lane.b32.xlu0 %v103, 19
  %v336 = vpop.permute.xlu0 %335
  %337 = vrot.lane.b32.xlu0 %v104, 19
  %v338 = vpop.permute.xlu0 %337
  %339 = vrot.lane.b32.xlu0 %v98, 19
  %v340 = vpop.permute.xlu0 %339
  %341 = vrot.lane.b32.xlu0 %v127, 19
  %v342 = vpop.permute.xlu0 %341
  %343 = vrot.lane.b32.xlu0 %v137, 19
  %v344 = vpop.permute.xlu0 %343
  %345 = vrot.lane.b32.xlu0 %v138, 19
  %v346 = vpop.permute.xlu0 %345
  %347 = vrot.lane.b32.xlu0 %v139, 19
  %v348 = vpop.permute.xlu0 %347
  %349 = vrot.lane.b32.xlu0 %v140, 19
  %v350 = vpop.permute.xlu0 %349
  %351 = vrot.lane.b32.xlu0 %v135, 19
  %v352 = vpop.permute.xlu0 %351
  %353 = vrot.lane.b32.xlu0 %v142, 19
  %v354 = vpop.permute.xlu0 %353
  %355 = vrot.lane.b32.xlu0 %v152, 19
  %v356 = vpop.permute.xlu0 %355
  %357 = vrot.lane.b32.xlu0 %v153, 19
  %v358 = vpop.permute.xlu0 %357
  %359 = vrot.lane.b32.xlu0 %v154, 19
  %v360 = vpop.permute.xlu0 %359
  %361 = vrot.lane.b32.xlu0 %v155, 19
  %v362 = vpop.permute.xlu0 %361
  %363 = vrot.lane.b32.xlu0 %v150, 19
  %v364 = vpop.permute.xlu0 %363
  %365 = vrot.lane.b32.xlu0 %v157, 19
  %v366 = vpop.permute.xlu0 %365
  %367 = vrot.lane.b32.xlu0 %v167, 19
  %v368 = vpop.permute.xlu0 %367
  %369 = vrot.lane.b32.xlu0 %v168, 19
  %v370 = vpop.permute.xlu0 %369
  %371 = vrot.lane.b32.xlu0 %v169, 19
  %v372 = vpop.permute.xlu0 %371
  %373 = vrot.lane.b32.xlu0 %v170, 19
  %v374 = vpop.permute.xlu0 %373
  %375 = vrot.lane.b32.xlu0 %v165, 19
  %v376 = vpop.permute.xlu0 %375
  %377 = vrot.lane.b32.xlu0 %v172, 19
  %v378 = vpop.permute.xlu0 %377
  %379 = vrot.lane.b32.xlu0 %v182, 19
  %v380 = vpop.permute.xlu0 %379
  %381 = vrot.lane.b32.xlu0 %v183, 19
  %v382 = vpop.permute.xlu0 %381
  %383 = vrot.lane.b32.xlu0 %v184, 19
  %v384 = vpop.permute.xlu0 %383
  %385 = vrot.lane.b32.xlu0 %v185, 19
  %v386 = vpop.permute.xlu0 %385
  %387 = vrot.lane.b32.xlu0 %v180, 19
  %v388 = vpop.permute.xlu0 %387
  %389 = vrot.lane.b32.xlu0 %v187, 19
  %v390 = vpop.permute.xlu0 %389
  %391 = vrot.lane.b32.xlu0 %v197, 19
  %v392 = vpop.permute.xlu0 %391
  %393 = vrot.lane.b32.xlu0 %v198, 19
  %v394 = vpop.permute.xlu0 %393
  %395 = vrot.lane.b32.xlu0 %v199, 19
  %v396 = vpop.permute.xlu0 %395
  %397 = vrot.lane.b32.xlu0 %v200, 19
  %v398 = vpop.permute.xlu0 %397
  %399 = vrot.lane.b32.xlu0 %v195, 19
  %v400 = vpop.permute.xlu0 %399
  %vm401 = vcmask 154624
  %v402 = vsel %vm401, %v294, %v296
  %v403 = vsel %vm401, %v296, %v298
  %v404 = vsel %vm401, %v298, %v300
  %v405 = vsel %vm401, %v300, %v302
  %v406 = vsel %vm401, %v302, %v304
  %v407 = vsel %vm401, %v306, %v308
  %v408 = vsel %vm401, %v308, %v310
  %v409 = vsel %vm401, %v310, %v312
  %v410 = vsel %vm401, %v312, %v314
  %v411 = vsel %vm401, %v314, %v316
  %v412 = vsel %vm401, %v318, %v320
  %v413 = vsel %vm401, %v320, %v322
  %v414 = vsel %vm401, %v322, %v324
  %v415 = vsel %vm401, %v324, %v326
  %v416 = vsel %vm401, %v326, %v328
  %v417 = vsel %vm401, %v330, %v332
  %v418 = vsel %vm401, %v332, %v334
  %v419 = vsel %vm401, %v334, %v336
  %v420 = vsel %vm401, %v336, %v338
  %v421 = vsel %vm401, %v338, %v340
  %v422 = vsel %vm401, %v342, %v344
  %v423 = vsel %vm401, %v344, %v346
  %v424 = vsel %vm401, %v346, %v348
  %v425 = vsel %vm401, %v348, %v350
  %v426 = vsel %vm401, %v350, %v352
  %v427 = vsel %vm401, %v354, %v356
  %v428 = vsel %vm401, %v356, %v358
  %v429 = vsel %vm401, %v358, %v360
  %v430 = vsel %vm401, %v360, %v362
  %v431 = vsel %vm401, %v362, %v364
  %v432 = vsel %vm401, %v366, %v368
  %v433 = vsel %vm401, %v368, %v370
  %v434 = vsel %vm401, %v370, %v372
  %v435 = vsel %vm401, %v372, %v374
  %v436 = vsel %vm401, %v374, %v376
  %v437 = vsel %vm401, %v378, %v380
  %v438 = vsel %vm401, %v380, %v382
  %v439 = vsel %vm401, %v382, %v384
  %v440 = vsel %vm401, %v384, %v386
  %v441 = vsel %vm401, %v386, %v388
  %v442 = vsel %vm401, %v390, %v392
  %v443 = vsel %vm401, %v392, %v394
  %v444 = vsel %vm401, %v394, %v396
  %v445 = vsel %vm401, %v396, %v398
  %v446 = vsel %vm401, %v398, %v400
  %vm492 = vcmask 130048
  %v494 = vsel %vm492, %v282, 0
  %v497 = vsel %vm492, %v284, 0
  %v500 = vsel %vm492, %v286, 0
  %v503 = vsel %vm492, %v288, 0
  %505 = vmatpush.bf16.msra.mxu0 %v437
  %506 = vmatpush.bf16.msra.mxu0 %v432
  %507 = vmatpush.bf16.msra.mxu0 %v427
  %508 = vmatpush.bf16.msra.mxu0 %v422
  %509 = vmatpush.bf16.msra.mxu0 %v417
  %510 = vmatpush.bf16.msra.mxu0 %v412
  %511 = vmatpush.bf16.msra.mxu0 %v407
  %512 = vmatpush.bf16.msra.mxu0 %v402
  %513 = vmatmul.bf16.gmra.mxu0 %v281
  %v514 = vpop.f32.mrf.mxu0
  %v515 = vadd.f32 %v220, %v514
  %v516 = vpop.f32.mrf.mxu0
  %v517 = vadd.f32 %v225, %v516
  %518 = vmatmul.bf16.gmra.mxu0 %v283
  %v519 = vpop.f32.mrf.mxu0
  %v520 = vadd.f32 %v230, %v519
  %v521 = vpop.f32.mrf.mxu0
  %v522 = vadd.f32 %v235, %v521
  %523 = vmatmul.bf16.gmra.mxu0 %v285
  %v524 = vpop.f32.mrf.mxu0
  %v525 = vadd.f32 %v240, %v524
  %v526 = vpop.f32.mrf.mxu0
  %v527 = vadd.f32 %v245, %v526
  %528 = vmatmul.bf16.gmra.mxu0 %v287
  %v529 = vpop.f32.mrf.mxu0
  %v530 = vadd.f32 %v250, %v529
  %v531 = vpop.f32.mrf.mxu0
  %v532 = vadd.f32 %v255, %v531
  %533 = vdwg.mxu0
  %534 = vmatpush.bf16.msra.mxu0 0
  %535 = vmatpush.bf16.msra.mxu0 0
  %536 = vmatpush.bf16.msra.mxu0 0
  %537 = vmatpush.bf16.msra.mxu0 0
  %538 = vmatpush.bf16.msra.mxu0 0
  %539 = vmatpush.bf16.msra.mxu0 0
  %540 = vmatpush.bf16.msra.mxu0 0
  %541 = vmatpush.bf16.msra.mxu0 %v442
  %542 = vmatmul.bf16.gmra.mxu0 %v494
  %v543 = vpop.f32.mrf.mxu0
  %v544 = vadd.f32 %v515, %v543
  %v545 = vpop.f32.mrf.mxu0
  %v546 = vadd.f32 %v517, %v545
  %547 = vmatmul.bf16.gmra.mxu0 %v497
  %v548 = vpop.f32.mrf.mxu0
  %v549 = vadd.f32 %v520, %v548
  %v550 = vpop.f32.mrf.mxu0
  %v551 = vadd.f32 %v522, %v550
  %552 = vmatmul.bf16.gmra.mxu0 %v500
  %v553 = vpop.f32.mrf.mxu0
  %v554 = vadd.f32 %v525, %v553
  %v555 = vpop.f32.mrf.mxu0
  %v556 = vadd.f32 %v527, %v555
  %557 = vmatmul.bf16.gmra.mxu0 %v503
  %v558 = vpop.f32.mrf.mxu0
  %v559 = vadd.f32 %v530, %v558
  %v560 = vpop.f32.mrf.mxu0
  %v561 = vadd.f32 %v532, %v560
  %562 = vdwg.mxu0
  %563 = vmatpush.bf16.msra.mxu0 %v438
  %564 = vmatpush.bf16.msra.mxu0 %v433
  %565 = vmatpush.bf16.msra.mxu0 %v428
  %566 = vmatpush.bf16.msra.mxu0 %v423
  %567 = vmatpush.bf16.msra.mxu0 %v418
  %568 = vmatpush.bf16.msra.mxu0 %v413
  %569 = vmatpush.bf16.msra.mxu0 %v408
  %570 = vmatpush.bf16.msra.mxu0 %v403
  %571 = vmatmul.bf16.gmra.mxu0 %v281
  %v572 = vpop.f32.mrf.mxu0
  %v573 = vadd.f32 %v220, %v572
  %v574 = vpop.f32.mrf.mxu0
  %v575 = vadd.f32 %v225, %v574
  %576 = vmatmul.bf16.gmra.mxu0 %v283
  %v577 = vpop.f32.mrf.mxu0
  %v578 = vadd.f32 %v230, %v577
  %v579 = vpop.f32.mrf.mxu0
  %v580 = vadd.f32 %v235, %v579
  %581 = vmatmul.bf16.gmra.mxu0 %v285
  %v582 = vpop.f32.mrf.mxu0
  %v583 = vadd.f32 %v240, %v582
  %v584 = vpop.f32.mrf.mxu0
  %v585 = vadd.f32 %v245, %v584
  %586 = vmatmul.bf16.gmra.mxu0 %v287
  %v587 = vpop.f32.mrf.mxu0
  %v588 = vadd.f32 %v250, %v587
  %v589 = vpop.f32.mrf.mxu0
  %v590 = vadd.f32 %v255, %v589
  %591 = vdwg.mxu0
  %592 = vmatpush.bf16.msra.mxu0 0
  %593 = vmatpush.bf16.msra.mxu0 0
  %594 = vmatpush.bf16.msra.mxu0 0
  %595 = vmatpush.bf16.msra.mxu0 0
  %596 = vmatpush.bf16.msra.mxu0 0
  %597 = vmatpush.bf16.msra.mxu0 0
  %598 = vmatpush.bf16.msra.mxu0 0
  %599 = vmatpush.bf16.msra.mxu0 %v443
  %600 = vmatmul.bf16.gmra.mxu0 %v494
  %v601 = vpop.f32.mrf.mxu0
  %v602 = vadd.f32 %v573, %v601
  %v603 = vpop.f32.mrf.mxu0
  %v604 = vadd.f32 %v575, %v603
  %605 = vmatmul.bf16.gmra.mxu0 %v497
  %v606 = vpop.f32.mrf.mxu0
  %v607 = vadd.f32 %v578, %v606
  %v608 = vpop.f32.mrf.mxu0
  %v609 = vadd.f32 %v580, %v608
  %610 = vmatmul.bf16.gmra.mxu0 %v500
  %v611 = vpop.f32.mrf.mxu0
  %v612 = vadd.f32 %v583, %v611
  %v613 = vpop.f32.mrf.mxu0
  %v614 = vadd.f32 %v585, %v613
  %615 = vmatmul.bf16.gmra.mxu0 %v503
  %v616 = vpop.f32.mrf.mxu0
  %v617 = vadd.f32 %v588, %v616
  %v618 = vpop.f32.mrf.mxu0
  %v619 = vadd.f32 %v590, %v618
  %620 = vdwg.mxu0
  %621 = vmatpush.bf16.msra.mxu0 %v439
  %622 = vmatpush.bf16.msra.mxu0 %v434
  %623 = vmatpush.bf16.msra.mxu0 %v429
  %624 = vmatpush.bf16.msra.mxu0 %v424
  %625 = vmatpush.bf16.msra.mxu0 %v419
  %626 = vmatpush.bf16.msra.mxu0 %v414
  %627 = vmatpush.bf16.msra.mxu0 %v409
  %628 = vmatpush.bf16.msra.mxu0 %v404
  %629 = vmatmul.bf16.gmra.mxu0 %v281
  %v630 = vpop.f32.mrf.mxu0
  %v631 = vadd.f32 %v220, %v630
  %v632 = vpop.f32.mrf.mxu0
  %v633 = vadd.f32 %v225, %v632
  %634 = vmatmul.bf16.gmra.mxu0 %v283
  %v635 = vpop.f32.mrf.mxu0
  %v636 = vadd.f32 %v230, %v635
  %v637 = vpop.f32.mrf.mxu0
  %v638 = vadd.f32 %v235, %v637
  %639 = vmatmul.bf16.gmra.mxu0 %v285
  %v640 = vpop.f32.mrf.mxu0
  %v641 = vadd.f32 %v240, %v640
  %v642 = vpop.f32.mrf.mxu0
  %v643 = vadd.f32 %v245, %v642
  %644 = vmatmul.bf16.gmra.mxu0 %v287
  %v645 = vpop.f32.mrf.mxu0
  %v646 = vadd.f32 %v250, %v645
  %v647 = vpop.f32.mrf.mxu0
  %v648 = vadd.f32 %v255, %v647
  %649 = vdwg.mxu0
  %650 = vmatpush.bf16.msra.mxu0 0
  %651 = vmatpush.bf16.msra.mxu0 0
  %652 = vmatpush.bf16.msra.mxu0 0
  %653 = vmatpush.bf16.msra.mxu0 0
  %654 = vmatpush.bf16.msra.mxu0 0
  %655 = vmatpush.bf16.msra.mxu0 0
  %656 = vmatpush.bf16.msra.mxu0 0
  %657 = vmatpush.bf16.msra.mxu0 %v444
  %658 = vmatmul.bf16.gmra.mxu0 %v494
  %v659 = vpop.f32.mrf.mxu0
  %v660 = vadd.f32 %v631, %v659
  %v661 = vpop.f32.mrf.mxu0
  %v662 = vadd.f32 %v633, %v661
  %663 = vmatmul.bf16.gmra.mxu0 %v497
  %v664 = vpop.f32.mrf.mxu0
  %v665 = vadd.f32 %v636, %v664
  %v666 = vpop.f32.mrf.mxu0
  %v667 = vadd.f32 %v638, %v666
  %668 = vmatmul.bf16.gmra.mxu0 %v500
  %v669 = vpop.f32.mrf.mxu0
  %v670 = vadd.f32 %v641, %v669
  %v671 = vpop.f32.mrf.mxu0
  %v672 = vadd.f32 %v643, %v671
  %673 = vmatmul.bf16.gmra.mxu0 %v503
  %v674 = vpop.f32.mrf.mxu0
  %v675 = vadd.f32 %v646, %v674
  %v676 = vpop.f32.mrf.mxu0
  %v677 = vadd.f32 %v648, %v676
  %678 = vdwg.mxu0
  %679 = vmatpush.bf16.msra.mxu0 %v440
  %680 = vmatpush.bf16.msra.mxu0 %v435
  %681 = vmatpush.bf16.msra.mxu0 %v430
  %682 = vmatpush.bf16.msra.mxu0 %v425
  %683 = vmatpush.bf16.msra.mxu0 %v420
  %684 = vmatpush.bf16.msra.mxu0 %v415
  %685 = vmatpush.bf16.msra.mxu0 %v410
  %686 = vmatpush.bf16.msra.mxu0 %v405
  %687 = vmatmul.bf16.gmra.mxu0 %v281
  %v688 = vpop.f32.mrf.mxu0
  %v689 = vadd.f32 %v220, %v688
  %v690 = vpop.f32.mrf.mxu0
  %v691 = vadd.f32 %v225, %v690
  %692 = vmatmul.bf16.gmra.mxu0 %v283
  %v693 = vpop.f32.mrf.mxu0
  %v694 = vadd.f32 %v230, %v693
  %v695 = vpop.f32.mrf.mxu0
  %v696 = vadd.f32 %v235, %v695
  %697 = vmatmul.bf16.gmra.mxu0 %v285
  %v698 = vpop.f32.mrf.mxu0
  %v699 = vadd.f32 %v240, %v698
  %v700 = vpop.f32.mrf.mxu0
  %v701 = vadd.f32 %v245, %v700
  %702 = vmatmul.bf16.gmra.mxu0 %v287
  %v703 = vpop.f32.mrf.mxu0
  %v704 = vadd.f32 %v250, %v703
  %v705 = vpop.f32.mrf.mxu0
  %v706 = vadd.f32 %v255, %v705
  %707 = vdwg.mxu0
  %708 = vmatpush.bf16.msra.mxu0 0
  %709 = vmatpush.bf16.msra.mxu0 0
  %710 = vmatpush.bf16.msra.mxu0 0
  %711 = vmatpush.bf16.msra.mxu0 0
  %712 = vmatpush.bf16.msra.mxu0 0
  %713 = vmatpush.bf16.msra.mxu0 0
  %714 = vmatpush.bf16.msra.mxu0 0
  %715 = vmatpush.bf16.msra.mxu0 %v445
  %716 = vmatmul.bf16.gmra.mxu0 %v494
  %v717 = vpop.f32.mrf.mxu0
  %v718 = vadd.f32 %v689, %v717
  %v719 = vpop.f32.mrf.mxu0
  %v720 = vadd.f32 %v691, %v719
  %721 = vmatmul.bf16.gmra.mxu0 %v497
  %v722 = vpop.f32.mrf.mxu0
  %v723 = vadd.f32 %v694, %v722
  %v724 = vpop.f32.mrf.mxu0
  %v725 = vadd.f32 %v696, %v724
  %726 = vmatmul.bf16.gmra.mxu0 %v500
  %v727 = vpop.f32.mrf.mxu0
  %v728 = vadd.f32 %v699, %v727
  %v729 = vpop.f32.mrf.mxu0
  %v730 = vadd.f32 %v701, %v729
  %731 = vmatmul.bf16.gmra.mxu0 %v503
  %v732 = vpop.f32.mrf.mxu0
  %v733 = vadd.f32 %v704, %v732
  %v734 = vpop.f32.mrf.mxu0
  %v735 = vadd.f32 %v706, %v734
  %736 = vdwg.mxu0
  %737 = vmatpush.bf16.msra.mxu0 %v441
  %738 = vmatpush.bf16.msra.mxu0 %v436
  %739 = vmatpush.bf16.msra.mxu0 %v431
  %740 = vmatpush.bf16.msra.mxu0 %v426
  %741 = vmatpush.bf16.msra.mxu0 %v421
  %742 = vmatpush.bf16.msra.mxu0 %v416
  %743 = vmatpush.bf16.msra.mxu0 %v411
  %744 = vmatpush.bf16.msra.mxu0 %v406
  %745 = vmatmul.bf16.gmra.mxu0 %v281
  %v746 = vpop.f32.mrf.mxu0
  %v747 = vadd.f32 %v220, %v746
  %v748 = vpop.f32.mrf.mxu0
  %v749 = vadd.f32 %v225, %v748
  %750 = vmatmul.bf16.gmra.mxu0 %v283
  %v751 = vpop.f32.mrf.mxu0
  %v752 = vadd.f32 %v230, %v751
  %v753 = vpop.f32.mrf.mxu0
  %v754 = vadd.f32 %v235, %v753
  %755 = vmatmul.bf16.gmra.mxu0 %v285
  %v756 = vpop.f32.mrf.mxu0
  %v757 = vadd.f32 %v240, %v756
  %v758 = vpop.f32.mrf.mxu0
  %v759 = vadd.f32 %v245, %v758
  %760 = vmatmul.bf16.gmra.mxu0 %v287
  %v761 = vpop.f32.mrf.mxu0
  %v762 = vadd.f32 %v250, %v761
  %v763 = vpop.f32.mrf.mxu0
  %v764 = vadd.f32 %v255, %v763
  %765 = vdwg.mxu0
  %766 = vmatpush.bf16.msra.mxu0 0
  %767 = vmatpush.bf16.msra.mxu0 0
  %768 = vmatpush.bf16.msra.mxu0 0
  %769 = vmatpush.bf16.msra.mxu0 0
  %770 = vmatpush.bf16.msra.mxu0 0
  %771 = vmatpush.bf16.msra.mxu0 0
  %772 = vmatpush.bf16.msra.mxu0 0
  %773 = vmatpush.bf16.msra.mxu0 %v446
  %774 = vmatmul.bf16.gmra.mxu0 %v494
  %v775 = vpop.f32.mrf.mxu0
  %v776 = vadd.f32 %v747, %v775
  %v777 = vpop.f32.mrf.mxu0
  %v778 = vadd.f32 %v749, %v777
  %779 = vmatmul.bf16.gmra.mxu0 %v497
  %v780 = vpop.f32.mrf.mxu0
  %v781 = vadd.f32 %v752, %v780
  %v782 = vpop.f32.mrf.mxu0
  %v783 = vadd.f32 %v754, %v782
  %784 = vmatmul.bf16.gmra.mxu0 %v500
  %v785 = vpop.f32.mrf.mxu0
  %v786 = vadd.f32 %v757, %v785
  %v787 = vpop.f32.mrf.mxu0
  %v788 = vadd.f32 %v759, %v787
  %789 = vmatmul.bf16.gmra.mxu0 %v503
  %v790 = vpop.f32.mrf.mxu0
  %v791 = vadd.f32 %v762, %v790
  %v792 = vpop.f32.mrf.mxu0
  %v793 = vadd.f32 %v764, %v792
  %794 = vdwg.mxu0
  %795 = vst [vmem:[%s3] sm:$0xf] 0
  %796 = vst [vmem:[%s3 + $0x18] sm:$0xf] 0
  %797 = vst [vmem:[%s3 + $0x30] sm:$0xf] 0
  %798 = vst [vmem:[%s3 + $0x48] sm:$0xf] 0
  %799 = vst [vmem:[%s3 + $0x60] sm:$0xf] 0
  %800 = vst [vmem:[%s3 + $0x78] sm:$0xf] 0
  %801 = vst [vmem:[%s3 + $0x90] sm:$0xf] 0
  %802 = vst [vmem:[%s3 + $0xa8] sm:$0xf] 0
  %vm803 = vcmask 954128
  %804 = vst.msk [vmem:[%s3 + $0x14] sm:$0xf] %vm803, 0
  %805 = vst.msk [vmem:[%s3 + $0x2c] sm:$0xf] %vm803, 0
  %806 = vst.msk [vmem:[%s3 + $0x44] sm:$0xf] %vm803, 0
  %807 = vst.msk [vmem:[%s3 + $0x5c] sm:$0xf] %vm803, 0
  %808 = vst.msk [vmem:[%s3 + $0x74] sm:$0xf] %vm803, 0
  %809 = vst.msk [vmem:[%s3 + $0x8c] sm:$0xf] %vm803, 0
  %810 = vst.msk [vmem:[%s3 + $0xa4] sm:$0xf] %vm803, 0
  %811 = vst.msk [vmem:[%s3 + $0xbc] sm:$0xf] %vm803, 0
  %v812 = vpack.c.bf16 %v602, %v544
  %v813 = vpack.c.bf16 %v718, %v660
  %v814 = vpack.c.bf16 %v776, %v776
  %v815 = vpack.c.bf16 %v604, %v546
  %v816 = vpack.c.bf16 %v720, %v662
  %v817 = vpack.c.bf16 %v778, %v778
  %v818 = vpack.c.bf16 %v607, %v549
  %v819 = vpack.c.bf16 %v723, %v665
  %v820 = vpack.c.bf16 %v781, %v781
  %v821 = vpack.c.bf16 %v609, %v551
  %v822 = vpack.c.bf16 %v725, %v667
  %v823 = vpack.c.bf16 %v783, %v783
  %v824 = vpack.c.bf16 %v612, %v554
  %v825 = vpack.c.bf16 %v728, %v670
  %v826 = vpack.c.bf16 %v786, %v786
  %v827 = vpack.c.bf16 %v614, %v556
  %v828 = vpack.c.bf16 %v730, %v672
  %v829 = vpack.c.bf16 %v788, %v788
  %v830 = vpack.c.bf16 %v617, %v559
  %v831 = vpack.c.bf16 %v733, %v675
  %v832 = vpack.c.bf16 %v791, %v791
  %v833 = vpack.c.bf16 %v619, %v561
  %v834 = vpack.c.bf16 %v735, %v677
  %v835 = vpack.c.bf16 %v793, %v793
  %836 = vst [vmem:[%s3 + $0x4] sm:$0xff] %v812
  %837 = vst [vmem:[%s3 + $0xc] sm:$0xff] %v813
  %vm838 = vcmask 797696
  %839 = vst.msk [vmem:[%s3 + $0x14] sm:$0xf] %vm838, %v814
  %840 = vst [vmem:[%s3 + $0x1c] sm:$0xff] %v815
  %841 = vst [vmem:[%s3 + $0x24] sm:$0xff] %v816
  %842 = vst.msk [vmem:[%s3 + $0x2c] sm:$0xf] %vm838, %v817
  %843 = vst [vmem:[%s3 + $0x34] sm:$0xff] %v818
  %844 = vst [vmem:[%s3 + $0x3c] sm:$0xff] %v819
  %845 = vst.msk [vmem:[%s3 + $0x44] sm:$0xf] %vm838, %v820
  %846 = vst [vmem:[%s3 + $0x4c] sm:$0xff] %v821
  %847 = vst [vmem:[%s3 + $0x54] sm:$0xff] %v822
  %848 = vst.msk [vmem:[%s3 + $0x5c] sm:$0xf] %vm838, %v823
  %849 = vst [vmem:[%s3 + $0x64] sm:$0xff] %v824
  %850 = vst [vmem:[%s3 + $0x6c] sm:$0xff] %v825
  %851 = vst.msk [vmem:[%s3 + $0x74] sm:$0xf] %vm838, %v826
  %852 = vst [vmem:[%s3 + $0x7c] sm:$0xff] %v827
  %853 = vst [vmem:[%s3 + $0x84] sm:$0xff] %v828
  %854 = vst.msk [vmem:[%s3 + $0x8c] sm:$0xf] %vm838, %v829
  %855 = vst [vmem:[%s3 + $0x94] sm:$0xff] %v830
  %856 = vst [vmem:[%s3 + $0x9c] sm:$0xff] %v831
  %857 = vst.msk [vmem:[%s3 + $0xa4] sm:$0xf] %vm838, %v832
  %858 = vst [vmem:[%s3 + $0xac] sm:$0xff] %v833
  %859 = vst [vmem:[%s3 + $0xb4] sm:$0xff] %v834
  %860 = vst.msk [vmem:[%s3 + $0xbc] sm:$0xf] %vm838, %v835
  // Predicated region
  $region14: #{edsr_forward.4} parent=0 // pred_check
    _
  $region15: #{edsr_forward.4} parent=0 // pred_check_branch
    %862 = sbr.rel (0) target = $region17
  $region16: #{edsr_forward.4} parent=0 // pred_region
    _
  $region17: #{edsr_forward.4} parent=0 // pred_fallthru
    _
  // Predicated region
  $region18: #{edsr_forward.4} parent=0 // pred_check
    _
  $region19: #{edsr_forward.4} parent=0 // pred_check_branch
    %864 = sbr.rel (0) target = $region21
  $region20: #{edsr_forward.4} parent=0 // pred_region
    _
  $region21: #{edsr_forward.4} parent=0 // pred_fallthru
    _

// kernel: edsr_forward.5
$region0: #{edsr_forward.5}
  #allocation0 [shape = 'u32[]', space=smem, size = 0x4, offset = 0x4, fixed_abs, tag = 'smem constant byte address 0x4 - core index']
  #allocation1 [shape = 'u32[72,128]{1,0:T(1,128)}', space=vmem, size = 0x9000, scoped, tag = 'internal scratch']
  %s0 = inlined_call_operand.vmem [shape: bf16[1,16,2405], index: 0, kind: input, shape index: {}]
  %s1 = inlined_call_operand.vmem [shape: bf16[3,144], index: 1, kind: input, shape index: {}]
  %s2 = inlined_call_operand.vmem [shape: f32[3,1], index: 2, kind: input, shape index: {}]
  %s3 = inlined_call_operand.vmem [shape: f32[1,3,2405], index: 3, kind: output, shape index: {}]
  %s4 = sld [smem:[#allocation0]]
  $region22: #{edsr_forward.5} parent=0
    _
  %s6 = ssub.s32 1, %s4
  %s7 = scalar_select 0, %s6, %s4
  // Predicated region
  $region2: #{edsr_forward.5} parent=0 // pred_check
    _
  $region3: #{edsr_forward.5} parent=0 // pred_check_branch
    %9 = sbr.rel (0) target = $region5
  $region4: #{edsr_forward.5} parent=0 // pred_region
    _
  $region5: #{edsr_forward.5} parent=0 // pred_fallthru
    _
  // Predicated region
  $region6: #{edsr_forward.5} parent=0 // pred_check
    _
  $region7: #{edsr_forward.5} parent=0 // pred_check_branch
    %11 = sbr.rel (0) target = $region9
  $region8: #{edsr_forward.5} parent=0 // pred_region
    _
  $region9: #{edsr_forward.5} parent=0 // pred_fallthru
    _
  // Predicated region
  $region10: #{edsr_forward.5} parent=0 // pred_check
    _
  $region11: #{edsr_forward.5} parent=0 // pred_check_branch
    %13 = sbr.rel (0) target = $region13
  $region12: #{edsr_forward.5} parent=0 // pred_region
    _
  $region13: #{edsr_forward.5} parent=0 // pred_fallthru
    _
  %v15 = vld [vmem:[%s0] sm:$0xff]
  %v16 = vld [vmem:[%s0 + $0x8] sm:$0xff]
  %v17 = vld [vmem:[%s0 + $0x10] sm:$0xff]
  %v18 = vld [vmem:[%s0 + $0x18] sm:$0xff]
  %v19 = vld [vmem:[%s0 + $0x20] sm:$0xff]
  %v20 = vld [vmem:[%s0 + $0x28] sm:$0xff]
  %v21 = vld [vmem:[%s0 + $0x30] sm:$0xff]
  %v22 = vld [vmem:[%s0 + $0x38] sm:$0xff]
  %v23 = vld [vmem:[%s0 + $0x40] sm:$0xff]
  %v24 = vld [vmem:[%s0 + $0x48] sm:$0xf]
  %v25 = vld [vmem:[%s0 + $0x4c] sm:$0xff]
  %v26 = vld [vmem:[%s0 + $0x54] sm:$0xff]
  %v27 = vld [vmem:[%s0 + $0x5c] sm:$0xff]
  %v28 = vld [vmem:[%s0 + $0x64] sm:$0xff]
  %v29 = vld [vmem:[%s0 + $0x6c] sm:$0xff]
  %v30 = vld [vmem:[%s0 + $0x74] sm:$0xff]
  %v31 = vld [vmem:[%s0 + $0x7c] sm:$0xff]
  %v32 = vld [vmem:[%s0 + $0x84] sm:$0xff]
  %v33 = vld [vmem:[%s0 + $0x8c] sm:$0xff]
  %v34 = vld [vmem:[%s0 + $0x94] sm:$0xf]
  %v35 = vld [vmem:[%s0 + $0x4] sm:$0xff]
  %v36 = vld [vmem:[%s0 + $0xc] sm:$0xff]
  %v37 = vld [vmem:[%s0 + $0x14] sm:$0xff]
  %v38 = vld [vmem:[%s0 + $0x1c] sm:$0xff]
  %v39 = vld [vmem:[%s0 + $0x24] sm:$0xff]
  %v40 = vld [vmem:[%s0 + $0x2c] sm:$0xff]
  %v41 = vld [vmem:[%s0 + $0x34] sm:$0xff]
  %v42 = vld [vmem:[%s0 + $0x3c] sm:$0xff]
  %v43 = vld [vmem:[%s0 + $0x44] sm:$0xff]
  %v44 = vld [vmem:[%s0 + $0x50] sm:$0xff]
  %v45 = vld [vmem:[%s0 + $0x58] sm:$0xff]
  %v46 = vld [vmem:[%s0 + $0x60] sm:$0xff]
  %v47 = vld [vmem:[%s0 + $0x68] sm:$0xff]
  %v48 = vld [vmem:[%s0 + $0x70] sm:$0xff]
  %v49 = vld [vmem:[%s0 + $0x78] sm:$0xff]
  %v50 = vld [vmem:[%s0 + $0x80] sm:$0xff]
  %v51 = vld [vmem:[%s0 + $0x88] sm:$0xff]
  %v52 = vld [vmem:[%s0 + $0x90] sm:$0xff]
  %v73 = vunpack.c.l.b16 %v15
  %v74 = vunpack.c.h.b16 %v15
  %v75 = vunpack.c.l.b16 %v16
  %v76 = vunpack.c.h.b16 %v16
  %v77 = vunpack.c.l.b16 %v17
  %v78 = vunpack.c.h.b16 %v17
  %v79 = vunpack.c.l.b16 %v18
  %v80 = vunpack.c.h.b16 %v18
  %v81 = vunpack.c.l.b16 %v19
  %v82 = vunpack.c.h.b16 %v19
  %v83 = vunpack.c.l.b16 %v20
  %v84 = vunpack.c.h.b16 %v20
  %v85 = vunpack.c.l.b16 %v21
  %v86 = vunpack.c.h.b16 %v21
  %v87 = vunpack.c.l.b16 %v22
  %v88 = vunpack.c.h.b16 %v22
  %v89 = vunpack.c.l.b16 %v23
  %v90 = vunpack.c.h.b16 %v23
  %v91 = vunpack.c.l.b16 %v24
  %v92 = vunpack.c.l.b16 %v25
  %v93 = vunpack.c.h.b16 %v25
  %v94 = vunpack.c.l.b16 %v26
  %v95 = vunpack.c.h.b16 %v26
  %v96 = vunpack.c.l.b16 %v27
  %v97 = vunpack.c.h.b16 %v27
  %v98 = vunpack.c.l.b16 %v28
  %v99 = vunpack.c.h.b16 %v28
  %v100 = vunpack.c.l.b16 %v29
  %v101 = vunpack.c.h.b16 %v29
  %v102 = vunpack.c.l.b16 %v30
  %v103 = vunpack.c.h.b16 %v30
  %v104 = vunpack.c.l.b16 %v31
  %v105 = vunpack.c.h.b16 %v31
  %v106 = vunpack.c.l.b16 %v32
  %v107 = vunpack.c.h.b16 %v32
  %v108 = vunpack.c.l.b16 %v33
  %v109 = vunpack.c.h.b16 %v33
  %v110 = vunpack.c.l.b16 %v34
  %v111 = vpack.c.b16 %v92, %v73
  %v112 = vpack.c.b16 %v93, %v74
  %v113 = vpack.c.b16 %v94, %v75
  %v114 = vpack.c.b16 %v95, %v76
  %v115 = vpack.c.b16 %v96, %v77
  %v116 = vpack.c.b16 %v97, %v78
  %v117 = vpack.c.b16 %v98, %v79
  %v118 = vpack.c.b16 %v99, %v80
  %v119 = vpack.c.b16 %v100, %v81
  %v120 = vpack.c.b16 %v101, %v82
  %v121 = vpack.c.b16 %v102, %v83
  %v122 = vpack.c.b16 %v103, %v84
  %v123 = vpack.c.b16 %v104, %v85
  %v124 = vpack.c.b16 %v105, %v86
  %v125 = vpack.c.b16 %v106, %v87
  %v126 = vpack.c.b16 %v107, %v88
  %v127 = vpack.c.b16 %v108, %v89
  %v128 = vpack.c.b16 %v109, %v90
  %v129 = vpack.c.b16 %v110, %v91
  %130 = vrot.lane.b32.xlu0 %v111, 127
  %v131 = vpop.permute.xlu0 %130
  %132 = vrot.lane.b32.xlu0 %v112, 127
  %v133 = vpop.permute.xlu0 %132
  %134 = vrot.lane.b32.xlu0 %v113, 127
  %v135 = vpop.permute.xlu0 %134
  %136 = vrot.lane.b32.xlu0 %v114, 127
  %v137 = vpop.permute.xlu0 %136
  %138 = vrot.lane.b32.xlu0 %v115, 127
  %v139 = vpop.permute.xlu0 %138
  %140 = vrot.lane.b32.xlu0 %v116, 127
  %v141 = vpop.permute.xlu0 %140
  %142 = vrot.lane.b32.xlu0 %v117, 127
  %v143 = vpop.permute.xlu0 %142
  %144 = vrot.lane.b32.xlu0 %v118, 127
  %v145 = vpop.permute.xlu0 %144
  %146 = vrot.lane.b32.xlu0 %v119, 127
  %v147 = vpop.permute.xlu0 %146
  %148 = vrot.lane.b32.xlu0 %v120, 127
  %v149 = vpop.permute.xlu0 %148
  %150 = vrot.lane.b32.xlu0 %v121, 127
  %v151 = vpop.permute.xlu0 %150
  %152 = vrot.lane.b32.xlu0 %v122, 127
  %v153 = vpop.permute.xlu0 %152
  %154 = vrot.lane.b32.xlu0 %v123, 127
  %v155 = vpop.permute.xlu0 %154
  %156 = vrot.lane.b32.xlu0 %v124, 127
  %v157 = vpop.permute.xlu0 %156
  %158 = vrot.lane.b32.xlu0 %v125, 127
  %v159 = vpop.permute.xlu0 %158
  %160 = vrot.lane.b32.xlu0 %v126, 127
  %v161 = vpop.permute.xlu0 %160
  %162 = vrot.lane.b32.xlu0 %v127, 127
  %v163 = vpop.permute.xlu0 %162
  %164 = vrot.lane.b32.xlu0 %v128, 127
  %v165 = vpop.permute.xlu0 %164
  %166 = vrot.lane.b32.xlu0 %v129, 127
  %v167 = vpop.permute.xlu0 %166
  %vm168 = vcmask 1039360
  %v169 = vsel %vm168, %v131, %v133
  %v170 = vsel %vm168, %v133, %v135
  %v171 = vsel %vm168, %v135, %v137
  %v172 = vsel %vm168, %v137, %v139
  %v173 = vsel %vm168, %v139, %v141
  %v174 = vsel %vm168, %v141, %v143
  %v175 = vsel %vm168, %v143, %v145
  %v176 = vsel %vm168, %v145, %v147
  %v177 = vsel %vm168, %v147, %v149
  %v178 = vsel %vm168, %v149, %v151
  %v179 = vsel %vm168, %v151, %v153
  %v180 = vsel %vm168, %v153, %v155
  %v181 = vsel %vm168, %v155, %v157
  %v182 = vsel %vm168, %v157, %v159
  %v183 = vsel %vm168, %v159, %v161
  %v184 = vsel %vm168, %v161, %v163
  %v185 = vsel %vm168, %v163, %v165
  %v186 = vsel %vm168, %v165, %v167
  %187 = vrot.lane.b32.xlu0 %v111, 126
  %v188 = vpop.permute.xlu0 %187
  %189 = vrot.lane.b32.xlu0 %v112, 126
  %v190 = vpop.permute.xlu0 %189
  %191 = vrot.lane.b32.xlu0 %v113, 126
  %v192 = vpop.permute.xlu0 %191
  %193 = vrot.lane.b32.xlu0 %v114, 126
  %v194 = vpop.permute.xlu0 %193
  %195 = vrot.lane.b32.xlu0 %v115, 126
  %v196 = vpop.permute.xlu0 %195
  %197 = vrot.lane.b32.xlu0 %v116, 126
  %v198 = vpop.permute.xlu0 %197
  %199 = vrot.lane.b32.xlu0 %v117, 126
  %v200 = vpop.permute.xlu0 %199
  %201 = vrot.lane.b32.xlu0 %v118, 126
  %v202 = vpop.permute.xlu0 %201
  %203 = vrot.lane.b32.xlu0 %v119, 126
  %v204 = vpop.permute.xlu0 %203
  %205 = vrot.lane.b32.xlu0 %v120, 126
  %v206 = vpop.permute.xlu0 %205
  %207 = vrot.lane.b32.xlu0 %v121, 126
  %v208 = vpop.permute.xlu0 %207
  %209 = vrot.lane.b32.xlu0 %v122, 126
  %v210 = vpop.permute.xlu0 %209
  %211 = vrot.lane.b32.xlu0 %v123, 126
  %v212 = vpop.permute.xlu0 %211
  %213 = vrot.lane.b32.xlu0 %v124, 126
  %v214 = vpop.permute.xlu0 %213
  %215 = vrot.lane.b32.xlu0 %v125, 126
  %v216 = vpop.permute.xlu0 %215
  %217 = vrot.lane.b32.xlu0 %v126, 126
  %v218 = vpop.permute.xlu0 %217
  %219 = vrot.lane.b32.xlu0 %v127, 126
  %v220 = vpop.permute.xlu0 %219
  %221 = vrot.lane.b32.xlu0 %v128, 126
  %v222 = vpop.permute.xlu0 %221
  %223 = vrot.lane.b32.xlu0 %v129, 126
  %v224 = vpop.permute.xlu0 %223
  %vm225 = vcmask 1031168
  %v226 = vsel %vm225, %v188, %v190
  %v227 = vsel %vm225, %v190, %v192
  %v228 = vsel %vm225, %v192, %v194
  %v229 = vsel %vm225, %v194, %v196
  %v230 = vsel %vm225, %v196, %v198
  %v231 = vsel %vm225, %v198, %v200
  %v232 = vsel %vm225, %v200, %v202
  %v233 = vsel %vm225, %v202, %v204
  %v234 = vsel %vm225, %v204, %v206
  %v235 = vsel %vm225, %v206, %v208
  %v236 = vsel %vm225, %v208, %v210
  %v237 = vsel %vm225, %v210, %v212
  %v238 = vsel %vm225, %v212, %v214
  %v239 = vsel %vm225, %v214, %v216
  %v240 = vsel %vm225, %v216, %v218
  %v241 = vsel %vm225, %v218, %v220
  %v242 = vsel %vm225, %v220, %v222
  %v243 = vsel %vm225, %v222, %v224
  %244 = vrot.lane.b32.xlu0 %v111, 94
  %v245 = vpop.permute.xlu0 %244
  %246 = vrot.lane.b32.xlu0 %v112, 94
  %v247 = vpop.permute.xlu0 %246
  %248 = vrot.lane.b32.xlu0 %v113, 94
  %v249 = vpop.permute.xlu0 %248
  %250 = vrot.lane.b32.xlu0 %v114, 94
  %v251 = vpop.permute.xlu0 %250
  %252 = vrot.lane.b32.xlu0 %v115, 94
  %v253 = vpop.permute.xlu0 %252
  %254 = vrot.lane.b32.xlu0 %v116, 94
  %v255 = vpop.permute.xlu0 %254
  %256 = vrot.lane.b32.xlu0 %v117, 94
  %v257 = vpop.permute.xlu0 %256
  %258 = vrot.lane.b32.xlu0 %v118, 94
  %v259 = vpop.permute.xlu0 %258
  %260 = vrot.lane.b32.xlu0 %v119, 94
  %v261 = vpop.permute.xlu0 %260
  %262 = vrot.lane.b32.xlu0 %v120, 94
  %v263 = vpop.permute.xlu0 %262
  %264 = vrot.lane.b32.xlu0 %v121, 94
  %v265 = vpop.permute.xlu0 %264
  %266 = vrot.lane.b32.xlu0 %v122, 94
  %v267 = vpop.permute.xlu0 %266
  %268 = vrot.lane.b32.xlu0 %v123, 94
  %v269 = vpop.permute.xlu0 %268
  %270 = vrot.lane.b32.xlu0 %v124, 94
  %v271 = vpop.permute.xlu0 %270
  %272 = vrot.lane.b32.xlu0 %v125, 94
  %v273 = vpop.permute.xlu0 %272
  %274 = vrot.lane.b32.xlu0 %v126, 94
  %v275 = vpop.permute.xlu0 %274
  %276 = vrot.lane.b32.xlu0 %v127, 94
  %v277 = vpop.permute.xlu0 %276
  %278 = vrot.lane.b32.xlu0 %v128, 94
  %v279 = vpop.permute.xlu0 %278
  %280 = vrot.lane.b32.xlu0 %v129, 94
  %v281 = vpop.permute.xlu0 %280
  %vm282 = vcmask 769024
  %v283 = vsel %vm282, %v245, %v247
  %v284 = vsel %vm282, %v247, %v249
  %v285 = vsel %vm282, %v249, %v251
  %v286 = vsel %vm282, %v251, %v253
  %v287 = vsel %vm282, %v253, %v255
  %v288 = vsel %vm282, %v255, %v257
  %v289 = vsel %vm282, %v257, %v259
  %v290 = vsel %vm282, %v259, %v261
  %v291 = vsel %vm282, %v261, %v263
  %v292 = vsel %vm282, %v263, %v265
  %v293 = vsel %vm282, %v265, %v267
  %v294 = vsel %vm282, %v267, %v269
  %v295 = vsel %vm282, %v269, %v271
  %v296 = vsel %vm282, %v271, %v273
  %v297 = vsel %vm282, %v273, %v275
  %v298 = vsel %vm282, %v275, %v277
  %v299 = vsel %vm282, %v277, %v279
  %v300 = vsel %vm282, %v279, %v281
  %v319 = vunpack.c.l.b16 %v35
  %v320 = vunpack.c.h.b16 %v35
  %v321 = vunpack.c.l.b16 %v36
  %v322 = vunpack.c.h.b16 %v36
  %v323 = vunpack.c.l.b16 %v37
  %v324 = vunpack.c.h.b16 %v37
  %v325 = vunpack.c.l.b16 %v38
  %v326 = vunpack.c.h.b16 %v38
  %v327 = vunpack.c.l.b16 %v39
  %v328 = vunpack.c.h.b16 %v39
  %v329 = vunpack.c.l.b16 %v40
  %v330 = vunpack.c.h.b16 %v40
  %v331 = vunpack.c.l.b16 %v41
  %v332 = vunpack.c.h.b16 %v41
  %v333 = vunpack.c.l.b16 %v42
  %v334 = vunpack.c.h.b16 %v42
  %v335 = vunpack.c.l.b16 %v43
  %v336 = vunpack.c.h.b16 %v43
  %v337 = vunpack.c.l.b16 %v44
  %v338 = vunpack.c.h.b16 %v44
  %v339 = vunpack.c.l.b16 %v45
  %v340 = vunpack.c.h.b16 %v45
  %v341 = vunpack.c.l.b16 %v46
  %v342 = vunpack.c.h.b16 %v46
  %v343 = vunpack.c.l.b16 %v47
  %v344 = vunpack.c.h.b16 %v47
  %v345 = vunpack.c.l.b16 %v48
  %v346 = vunpack.c.h.b16 %v48
  %v347 = vunpack.c.l.b16 %v49
  %v348 = vunpack.c.h.b16 %v49
  %v349 = vunpack.c.l.b16 %v50
  %v350 = vunpack.c.h.b16 %v50
  %v351 = vunpack.c.l.b16 %v51
  %v352 = vunpack.c.h.b16 %v51
  %v353 = vunpack.c.l.b16 %v52
  %v354 = vunpack.c.h.b16 %v52
  %v355 = vpack.c.b16 %v337, %v319
  %v356 = vpack.c.b16 %v338, %v320
  %v357 = vpack.c.b16 %v339, %v321
  %v358 = vpack.c.b16 %v340, %v322
  %v359 = vpack.c.b16 %v341, %v323
  %v360 = vpack.c.b16 %v342, %v324
  %v361 = vpack.c.b16 %v343, %v325
  %v362 = vpack.c.b16 %v344, %v326
  %v363 = vpack.c.b16 %v345, %v327
  %v364 = vpack.c.b16 %v346, %v328
  %v365 = vpack.c.b16 %v347, %v329
  %v366 = vpack.c.b16 %v348, %v330
  %v367 = vpack.c.b16 %v349, %v331
  %v368 = vpack.c.b16 %v350, %v332
  %v369 = vpack.c.b16 %v351, %v333
  %v370 = vpack.c.b16 %v352, %v334
  %v371 = vpack.c.b16 %v353, %v335
  %v372 = vpack.c.b16 %v354, %v336
  %373 = vrot.lane.b32.xlu0 %v355, 93
  %v374 = vpop.permute.xlu0 %373
  %375 = vrot.lane.b32.xlu0 %v356, 93
  %v376 = vpop.permute.xlu0 %375
  %377 = vrot.lane.b32.xlu0 %v357, 93
  %v378 = vpop.permute.xlu0 %377
  %379 = vrot.lane.b32.xlu0 %v358, 93
  %v380 = vpop.permute.xlu0 %379
  %381 = vrot.lane.b32.xlu0 %v359, 93
  %v382 = vpop.permute.xlu0 %381
  %383 = vrot.lane.b32.xlu0 %v360, 93
  %v384 = vpop.permute.xlu0 %383
  %385 = vrot.lane.b32.xlu0 %v361, 93
  %v386 = vpop.permute.xlu0 %385
  %387 = vrot.lane.b32.xlu0 %v362, 93
  %v388 = vpop.permute.xlu0 %387
  %389 = vrot.lane.b32.xlu0 %v363, 93
  %v390 = vpop.permute.xlu0 %389
  %391 = vrot.lane.b32.xlu0 %v364, 93
  %v392 = vpop.permute.xlu0 %391
  %393 = vrot.lane.b32.xlu0 %v365, 93
  %v394 = vpop.permute.xlu0 %393
  %395 = vrot.lane.b32.xlu0 %v366, 93
  %v396 = vpop.permute.xlu0 %395
  %397 = vrot.lane.b32.xlu0 %v367, 93
  %v398 = vpop.permute.xlu0 %397
  %399 = vrot.lane.b32.xlu0 %v368, 93
  %v400 = vpop.permute.xlu0 %399
  %401 = vrot.lane.b32.xlu0 %v369, 93
  %v402 = vpop.permute.xlu0 %401
  %403 = vrot.lane.b32.xlu0 %v370, 93
  %v404 = vpop.permute.xlu0 %403
  %405 = vrot.lane.b32.xlu0 %v371, 93
  %v406 = vpop.permute.xlu0 %405
  %407 = vrot.lane.b32.xlu0 %v372, 93
  %v408 = vpop.permute.xlu0 %407
  %vm409 = vcmask 760832
  %v410 = vsel %vm409, %v374, %v376
  %v411 = vsel %vm409, %v376, %v378
  %v412 = vsel %vm409, %v378, %v380
  %v413 = vsel %vm409, %v380, %v382
  %v414 = vsel %vm409, %v382, %v384
  %v415 = vsel %vm409, %v384, %v386
  %v416 = vsel %vm409, %v386, %v388
  %v417 = vsel %vm409, %v388, %v390
  %v418 = vsel %vm409, %v390, %v392
  %v419 = vsel %vm409, %v392, %v394
  %v420 = vsel %vm409, %v394, %v396
  %v421 = vsel %vm409, %v396, %v398
  %v422 = vsel %vm409, %v398, %v400
  %v423 = vsel %vm409, %v400, %v402
  %v424 = vsel %vm409, %v402, %v404
  %v425 = vsel %vm409, %v404, %v406
  %v426 = vsel %vm409, %v406, %v408
  %427 = vrot.lane.b32.xlu0 %v355, 92
  %v428 = vpop.permute.xlu0 %427
  %429 = vrot.lane.b32.xlu0 %v356, 92
  %v430 = vpop.permute.xlu0 %429
  %431 = vrot.lane.b32.xlu0 %v357, 92
  %v432 = vpop.permute.xlu0 %431
  %433 = vrot.lane.b32.xlu0 %v358, 92
  %v434 = vpop.permute.xlu0 %433
  %435 = vrot.lane.b32.xlu0 %v359, 92
  %v436 = vpop.permute.xlu0 %435
  %437 = vrot.lane.b32.xlu0 %v360, 92
  %v438 = vpop.permute.xlu0 %437
  %439 = vrot.lane.b32.xlu0 %v361, 92
  %v440 = vpop.permute.xlu0 %439
  %441 = vrot.lane.b32.xlu0 %v362, 92
  %v442 = vpop.permute.xlu0 %441
  %443 = vrot.lane.b32.xlu0 %v363, 92
  %v444 = vpop.permute.xlu0 %443
  %445 = vrot.lane.b32.xlu0 %v364, 92
  %v446 = vpop.permute.xlu0 %445
  %447 = vrot.lane.b32.xlu0 %v365, 92
  %v448 = vpop.permute.xlu0 %447
  %449 = vrot.lane.b32.xlu0 %v366, 92
  %v450 = vpop.permute.xlu0 %449
  %451 = vrot.lane.b32.xlu0 %v367, 92
  %v452 = vpop.permute.xlu0 %451
  %453 = vrot.lane.b32.xlu0 %v368, 92
  %v454 = vpop.permute.xlu0 %453
  %455 = vrot.lane.b32.xlu0 %v369, 92
  %v456 = vpop.permute.xlu0 %455
  %457 = vrot.lane.b32.xlu0 %v370, 92
  %v458 = vpop.permute.xlu0 %457
  %459 = vrot.lane.b32.xlu0 %v371, 92
  %v460 = vpop.permute.xlu0 %459
  %461 = vrot.lane.b32.xlu0 %v372, 92
  %v462 = vpop.permute.xlu0 %461
  %vm463 = vcmask 752640
  %v464 = vsel %vm463, %v428, %v430
  %v465 = vsel %vm463, %v430, %v432
  %v466 = vsel %vm463, %v432, %v434
  %v467 = vsel %vm463, %v434, %v436
  %v468 = vsel %vm463, %v436, %v438
  %v469 = vsel %vm463, %v438, %v440
  %v470 = vsel %vm463, %v440, %v442
  %v471 = vsel %vm463, %v442, %v444
  %v472 = vsel %vm463, %v444, %v446
  %v473 = vsel %vm463, %v446, %v448
  %v474 = vsel %vm463, %v448, %v450
  %v475 = vsel %vm463, %v450, %v452
  %v476 = vsel %vm463, %v452, %v454
  %v477 = vsel %vm463, %v454, %v456
  %v478 = vsel %vm463, %v456, %v458
  %v479 = vsel %vm463, %v458, %v460
  %v480 = vsel %vm463, %v460, %v462
  %481 = vrot.lane.b32.xlu0 %v355, 60
  %v482 = vpop.permute.xlu0 %481
  %483 = vrot.lane.b32.xlu0 %v356, 60
  %v484 = vpop.permute.xlu0 %483
  %485 = vrot.lane.b32.xlu0 %v357, 60
  %v486 = vpop.permute.xlu0 %485
  %487 = vrot.lane.b32.xlu0 %v358, 60
  %v488 = vpop.permute.xlu0 %487
  %489 = vrot.lane.b32.xlu0 %v359, 60
  %v490 = vpop.permute.xlu0 %489
  %491 = vrot.lane.b32.xlu0 %v360, 60
  %v492 = vpop.permute.xlu0 %491
  %493 = vrot.lane.b32.xlu0 %v361, 60
  %v494 = vpop.permute.xlu0 %493
  %495 = vrot.lane.b32.xlu0 %v362, 60
  %v496 = vpop.permute.xlu0 %495
  %497 = vrot.lane.b32.xlu0 %v363, 60
  %v498 = vpop.permute.xlu0 %497
  %499 = vrot.lane.b32.xlu0 %v364, 60
  %v500 = vpop.permute.xlu0 %499
  %501 = vrot.lane.b32.xlu0 %v365, 60
  %v502 = vpop.permute.xlu0 %501
  %503 = vrot.lane.b32.xlu0 %v366, 60
  %v504 = vpop.permute.xlu0 %503
  %505 = vrot.lane.b32.xlu0 %v367, 60
  %v506 = vpop.permute.xlu0 %505
  %507 = vrot.lane.b32.xlu0 %v368, 60
  %v508 = vpop.permute.xlu0 %507
  %509 = vrot.lane.b32.xlu0 %v369, 60
  %v510 = vpop.permute.xlu0 %509
  %511 = vrot.lane.b32.xlu0 %v370, 60
  %v512 = vpop.permute.xlu0 %511
  %513 = vrot.lane.b32.xlu0 %v371, 60
  %v514 = vpop.permute.xlu0 %513
  %515 = vrot.lane.b32.xlu0 %v372, 60
  %v516 = vpop.permute.xlu0 %515
  %vm517 = vcmask 490496
  %v518 = vsel %vm517, %v482, %v484
  %v519 = vsel %vm517, %v484, %v486
  %v520 = vsel %vm517, %v486, %v488
  %v521 = vsel %vm517, %v488, %v490
  %v522 = vsel %vm517, %v490, %v492
  %v523 = vsel %vm517, %v492, %v494
  %v524 = vsel %vm517, %v494, %v496
  %v525 = vsel %vm517, %v496, %v498
  %v526 = vsel %vm517, %v498, %v500
  %v527 = vsel %vm517, %v500, %v502
  %v528 = vsel %vm517, %v502, %v504
  %v529 = vsel %vm517, %v504, %v506
  %v530 = vsel %vm517, %v506, %v508
  %v531 = vsel %vm517, %v508, %v510
  %v532 = vsel %vm517, %v510, %v512
  %v533 = vsel %vm517, %v512, %v514
  %v534 = vsel %vm517, %v514, %v516
  %535 = vrot.lane.b32.xlu0 %v355, 59
  %v536 = vpop.permute.xlu0 %535
  %537 = vrot.lane.b32.xlu0 %v356, 59
  %v538 = vpop.permute.xlu0 %537
  %539 = vrot.lane.b32.xlu0 %v357, 59
  %v540 = vpop.permute.xlu0 %539
  %541 = vrot.lane.b32.xlu0 %v358, 59
  %v542 = vpop.permute.xlu0 %541
  %543 = vrot.lane.b32.xlu0 %v359, 59
  %v544 = vpop.permute.xlu0 %543
  %545 = vrot.lane.b32.xlu0 %v360, 59
  %v546 = vpop.permute.xlu0 %545
  %547 = vrot.lane.b32.xlu0 %v361, 59
  %v548 = vpop.permute.xlu0 %547
  %549 = vrot.lane.b32.xlu0 %v362, 59
  %v550 = vpop.permute.xlu0 %549
  %551 = vrot.lane.b32.xlu0 %v363, 59
  %v552 = vpop.permute.xlu0 %551
  %553 = vrot.lane.b32.xlu0 %v364, 59
  %v554 = vpop.permute.xlu0 %553
  %555 = vrot.lane.b32.xlu0 %v365, 59
  %v556 = vpop.permute.xlu0 %555
  %557 = vrot.lane.b32.xlu0 %v366, 59
  %v558 = vpop.permute.xlu0 %557
  %559 = vrot.lane.b32.xlu0 %v367, 59
  %v560 = vpop.permute.xlu0 %559
  %561 = vrot.lane.b32.xlu0 %v368, 59
  %v562 = vpop.permute.xlu0 %561
  %563 = vrot.lane.b32.xlu0 %v369, 59
  %v564 = vpop.permute.xlu0 %563
  %565 = vrot.lane.b32.xlu0 %v370, 59
  %v566 = vpop.permute.xlu0 %565
  %567 = vrot.lane.b32.xlu0 %v371, 59
  %v568 = vpop.permute.xlu0 %567
  %569 = vrot.lane.b32.xlu0 %v372, 59
  %v570 = vpop.permute.xlu0 %569
  %vm571 = vcmask 482304
  %v572 = vsel %vm571, %v536, %v538
  %v573 = vsel %vm571, %v538, %v540
  %v574 = vsel %vm571, %v540, %v542
  %v575 = vsel %vm571, %v542, %v544
  %v576 = vsel %vm571, %v544, %v546
  %v577 = vsel %vm571, %v546, %v548
  %v578 = vsel %vm571, %v548, %v550
  %v579 = vsel %vm571, %v550, %v552
  %v580 = vsel %vm571, %v552, %v554
  %v581 = vsel %vm571, %v554, %v556
  %v582 = vsel %vm571, %v556, %v558
  %v583 = vsel %vm571, %v558, %v560
  %v584 = vsel %vm571, %v560, %v562
  %v585 = vsel %vm571, %v562, %v564
  %v586 = vsel %vm571, %v564, %v566
  %v587 = vsel %vm571, %v566, %v568
  %v588 = vsel %vm571, %v568, %v570
  %589 = vrot.lane.b32.xlu0 %v355, 58
  %v590 = vpop.permute.xlu0 %589
  %591 = vrot.lane.b32.xlu0 %v356, 58
  %v592 = vpop.permute.xlu0 %591
  %593 = vrot.lane.b32.xlu0 %v357, 58
  %v594 = vpop.permute.xlu0 %593
  %595 = vrot.lane.b32.xlu0 %v358, 58
  %v596 = vpop.permute.xlu0 %595
  %597 = vrot.lane.b32.xlu0 %v359, 58
  %v598 = vpop.permute.xlu0 %597
  %599 = vrot.lane.b32.xlu0 %v360, 58
  %v600 = vpop.permute.xlu0 %599
  %601 = vrot.lane.b32.xlu0 %v361, 58
  %v602 = vpop.permute.xlu0 %601
  %603 = vrot.lane.b32.xlu0 %v362, 58
  %v604 = vpop.permute.xlu0 %603
  %605 = vrot.lane.b32.xlu0 %v363, 58
  %v606 = vpop.permute.xlu0 %605
  %607 = vrot.lane.b32.xlu0 %v364, 58
  %v608 = vpop.permute.xlu0 %607
  %609 = vrot.lane.b32.xlu0 %v365, 58
  %v610 = vpop.permute.xlu0 %609
  %611 = vrot.lane.b32.xlu0 %v366, 58
  %v612 = vpop.permute.xlu0 %611
  %613 = vrot.lane.b32.xlu0 %v367, 58
  %v614 = vpop.permute.xlu0 %613
  %615 = vrot.lane.b32.xlu0 %v368, 58
  %v616 = vpop.permute.xlu0 %615
  %617 = vrot.lane.b32.xlu0 %v369, 58
  %v618 = vpop.permute.xlu0 %617
  %619 = vrot.lane.b32.xlu0 %v370, 58
  %v620 = vpop.permute.xlu0 %619
  %621 = vrot.lane.b32.xlu0 %v371, 58
  %v622 = vpop.permute.xlu0 %621
  %623 = vrot.lane.b32.xlu0 %v372, 58
  %v624 = vpop.permute.xlu0 %623
  %vm625 = vcmask 474112
  %v626 = vsel %vm625, %v590, %v592
  %v627 = vsel %vm625, %v592, %v594
  %v628 = vsel %vm625, %v594, %v596
  %v629 = vsel %vm625, %v596, %v598
  %v630 = vsel %vm625, %v598, %v600
  %v631 = vsel %vm625, %v600, %v602
  %v632 = vsel %vm625, %v602, %v604
  %v633 = vsel %vm625, %v604, %v606
  %v634 = vsel %vm625, %v606, %v608
  %v635 = vsel %vm625, %v608, %v610
  %v636 = vsel %vm625, %v610, %v612
  %v637 = vsel %vm625, %v612, %v614
  %v638 = vsel %vm625, %v614, %v616
  %v639 = vsel %vm625, %v616, %v618
  %v640 = vsel %vm625, %v618, %v620
  %v641 = vsel %vm625, %v620, %v622
  %v642 = vsel %vm625, %v622, %v624
  %v643 = vld [vmem:[%s1] sm:$0xf]
  %v644 = vld [vmem:[%s2] sm:$0x7]
  %646 = vset.pattern.permute.xlu0 0
  %647 = vperm.xlu0 %646, %v644
  %v648 = vpop.permute.xlu0 %647
  %651 = vst [vmem:[#allocation1] ss:$4 sm:$0xff] %v643
  %v652 = vld.sshfl [vmem:[#allocation1] sm:$0xff pattern:$0x73625140]
  %v653 = vld.sshfl [vmem:[#allocation1 + $0x8] sm:$0xff pattern:$0x73625140]
  %655 = vrot.lane.b32.xlu0 %v111, 35
  %v656 = vpop.permute.xlu0 %655
  %657 = vrot.lane.b32.xlu0 %v112, 35
  %v658 = vpop.permute.xlu0 %657
  %659 = vrot.lane.b32.xlu0 %v113, 35
  %v660 = vpop.permute.xlu0 %659
  %661 = vrot.lane.b32.xlu0 %v114, 35
  %v662 = vpop.permute.xlu0 %661
  %663 = vrot.lane.b32.xlu0 %v115, 35
  %v664 = vpop.permute.xlu0 %663
  %665 = vrot.lane.b32.xlu0 %v116, 35
  %v666 = vpop.permute.xlu0 %665
  %667 = vrot.lane.b32.xlu0 %v117, 35
  %v668 = vpop.permute.xlu0 %667
  %669 = vrot.lane.b32.xlu0 %v118, 35
  %v670 = vpop.permute.xlu0 %669
  %671 = vrot.lane.b32.xlu0 %v119, 35
  %v672 = vpop.permute.xlu0 %671
  %673 = vrot.lane.b32.xlu0 %v120, 35
  %v674 = vpop.permute.xlu0 %673
  %675 = vrot.lane.b32.xlu0 %v121, 35
  %v676 = vpop.permute.xlu0 %675
  %677 = vrot.lane.b32.xlu0 %v122, 35
  %v678 = vpop.permute.xlu0 %677
  %679 = vrot.lane.b32.xlu0 %v123, 35
  %v680 = vpop.permute.xlu0 %679
  %681 = vrot.lane.b32.xlu0 %v124, 35
  %v682 = vpop.permute.xlu0 %681
  %683 = vrot.lane.b32.xlu0 %v125, 35
  %v684 = vpop.permute.xlu0 %683
  %685 = vrot.lane.b32.xlu0 %v126, 35
  %v686 = vpop.permute.xlu0 %685
  %687 = vrot.lane.b32.xlu0 %v127, 35
  %v688 = vpop.permute.xlu0 %687
  %689 = vrot.lane.b32.xlu0 %v128, 35
  %v690 = vpop.permute.xlu0 %689
  %691 = vrot.lane.b32.xlu0 %v129, 35
  %v692 = vpop.permute.xlu0 %691
  %693 = vrot.lane.b32.xlu0 %v169, 35
  %v694 = vpop.permute.xlu0 %693
  %695 = vrot.lane.b32.xlu0 %v170, 35
  %v696 = vpop.permute.xlu0 %695
  %697 = vrot.lane.b32.xlu0 %v171, 35
  %v698 = vpop.permute.xlu0 %697
  %699 = vrot.lane.b32.xlu0 %v172, 35
  %v700 = vpop.permute.xlu0 %699
  %701 = vrot.lane.b32.xlu0 %v173, 35
  %v702 = vpop.permute.xlu0 %701
  %703 = vrot.lane.b32.xlu0 %v174, 35
  %v704 = vpop.permute.xlu0 %703
  %705 = vrot.lane.b32.xlu0 %v175, 35
  %v706 = vpop.permute.xlu0 %705
  %707 = vrot.lane.b32.xlu0 %v176, 35
  %v708 = vpop.permute.xlu0 %707
  %709 = vrot.lane.b32.xlu0 %v177, 35
  %v710 = vpop.permute.xlu0 %709
  %711 = vrot.lane.b32.xlu0 %v178, 35
  %v712 = vpop.permute.xlu0 %711
  %713 = vrot.lane.b32.xlu0 %v179, 35
  %v714 = vpop.permute.xlu0 %713
  %715 = vrot.lane.b32.xlu0 %v180, 35
  %v716 = vpop.permute.xlu0 %715
  %717 = vrot.lane.b32.xlu0 %v181, 35
  %v718 = vpop.permute.xlu0 %717
  %719 = vrot.lane.b32.xlu0 %v182, 35
  %v720 = vpop.permute.xlu0 %719
  %721 = vrot.lane.b32.xlu0 %v183, 35
  %v722 = vpop.permute.xlu0 %721
  %723 = vrot.lane.b32.xlu0 %v184, 35
  %v724 = vpop.permute.xlu0 %723
  %725 = vrot.lane.b32.xlu0 %v185, 35
  %v726 = vpop.permute.xlu0 %725
  %727 = vrot.lane.b32.xlu0 %v186, 35
  %v728 = vpop.permute.xlu0 %727
  %729 = vrot.lane.b32.xlu0 %v167, 35
  %v730 = vpop.permute.xlu0 %729
  %731 = vrot.lane.b32.xlu0 %v226, 35
  %v732 = vpop.permute.xlu0 %731
  %733 = vrot.lane.b32.xlu0 %v227, 35
  %v734 = vpop.permute.xlu0 %733
  %735 = vrot.lane.b32.xlu0 %v228, 35
  %v736 = vpop.permute.xlu0 %735
  %737 = vrot.lane.b32.xlu0 %v229, 35
  %v738 = vpop.permute.xlu0 %737
  %739 = vrot.lane.b32.xlu0 %v230, 35
  %v740 = vpop.permute.xlu0 %739
  %741 = vrot.lane.b32.xlu0 %v231, 35
  %v742 = vpop.permute.xlu0 %741
  %743 = vrot.lane.b32.xlu0 %v232, 35
  %v744 = vpop.permute.xlu0 %743
  %745 = vrot.lane.b32.xlu0 %v233, 35
  %v746 = vpop.permute.xlu0 %745
  %747 = vrot.lane.b32.xlu0 %v234, 35
  %v748 = vpop.permute.xlu0 %747
  %749 = vrot.lane.b32.xlu0 %v235, 35
  %v750 = vpop.permute.xlu0 %749
  %751 = vrot.lane.b32.xlu0 %v236, 35
  %v752 = vpop.permute.xlu0 %751
  %753 = vrot.lane.b32.xlu0 %v237, 35
  %v754 = vpop.permute.xlu0 %753
  %755 = vrot.lane.b32.xlu0 %v238, 35
  %v756 = vpop.permute.xlu0 %755
  %757 = vrot.lane.b32.xlu0 %v239, 35
  %v758 = vpop.permute.xlu0 %757
  %759 = vrot.lane.b32.xlu0 %v240, 35
  %v760 = vpop.permute.xlu0 %759
  %761 = vrot.lane.b32.xlu0 %v241, 35
  %v762 = vpop.permute.xlu0 %761
  %763 = vrot.lane.b32.xlu0 %v242, 35
  %v764 = vpop.permute.xlu0 %763
  %765 = vrot.lane.b32.xlu0 %v243, 35
  %v766 = vpop.permute.xlu0 %765
  %767 = vrot.lane.b32.xlu0 %v224, 35
  %v768 = vpop.permute.xlu0 %767
  %769 = vrot.lane.b32.xlu0 %v283, 35
  %v770 = vpop.permute.xlu0 %769
  %771 = vrot.lane.b32.xlu0 %v284, 35
  %v772 = vpop.permute.xlu0 %771
  %773 = vrot.lane.b32.xlu0 %v285, 35
  %v774 = vpop.permute.xlu0 %773
  %775 = vrot.lane.b32.xlu0 %v286, 35
  %v776 = vpop.permute.xlu0 %775
  %777 = vrot.lane.b32.xlu0 %v287, 35
  %v778 = vpop.permute.xlu0 %777
  %779 = vrot.lane.b32.xlu0 %v288, 35
  %v780 = vpop.permute.xlu0 %779
  %781 = vrot.lane.b32.xlu0 %v289, 35
  %v782 = vpop.permute.xlu0 %781
  %783 = vrot.lane.b32.xlu0 %v290, 35
  %v784 = vpop.permute.xlu0 %783
  %785 = vrot.lane.b32.xlu0 %v291, 35
  %v786 = vpop.permute.xlu0 %785
  %787 = vrot.lane.b32.xlu0 %v292, 35
  %v788 = vpop.permute.xlu0 %787
  %789 = vrot.lane.b32.xlu0 %v293, 35
  %v790 = vpop.permute.xlu0 %789
  %791 = vrot.lane.b32.xlu0 %v294, 35
  %v792 = vpop.permute.xlu0 %791
  %793 = vrot.lane.b32.xlu0 %v295, 35
  %v794 = vpop.permute.xlu0 %793
  %795 = vrot.lane.b32.xlu0 %v296, 35
  %v796 = vpop.permute.xlu0 %795
  %797 = vrot.lane.b32.xlu0 %v297, 35
  %v798 = vpop.permute.xlu0 %797
  %799 = vrot.lane.b32.xlu0 %v298, 35
  %v800 = vpop.permute.xlu0 %799
  %801 = vrot.lane.b32.xlu0 %v299, 35
  %v802 = vpop.permute.xlu0 %801
  %803 = vrot.lane.b32.xlu0 %v300, 35
  %v804 = vpop.permute.xlu0 %803
  %805 = vrot.lane.b32.xlu0 %v281, 35
  %v806 = vpop.permute.xlu0 %805
  %807 = vrot.lane.b32.xlu0 %v374, 35
  %v808 = vpop.permute.xlu0 %807
  %809 = vrot.lane.b32.xlu0 %v410, 35
  %v810 = vpop.permute.xlu0 %809
  %811 = vrot.lane.b32.xlu0 %v411, 35
  %v812 = vpop.permute.xlu0 %811
  %813 = vrot.lane.b32.xlu0 %v412, 35
  %v814 = vpop.permute.xlu0 %813
  %815 = vrot.lane.b32.xlu0 %v413, 35
  %v816 = vpop.permute.xlu0 %815
  %817 = vrot.lane.b32.xlu0 %v414, 35
  %v818 = vpop.permute.xlu0 %817
  %819 = vrot.lane.b32.xlu0 %v415, 35
  %v820 = vpop.permute.xlu0 %819
  %821 = vrot.lane.b32.xlu0 %v416, 35
  %v822 = vpop.permute.xlu0 %821
  %823 = vrot.lane.b32.xlu0 %v417, 35
  %v824 = vpop.permute.xlu0 %823
  %825 = vrot.lane.b32.xlu0 %v418, 35
  %v826 = vpop.permute.xlu0 %825
  %827 = vrot.lane.b32.xlu0 %v419, 35
  %v828 = vpop.permute.xlu0 %827
  %829 = vrot.lane.b32.xlu0 %v420, 35
  %v830 = vpop.permute.xlu0 %829
  %831 = vrot.lane.b32.xlu0 %v421, 35
  %v832 = vpop.permute.xlu0 %831
  %833 = vrot.lane.b32.xlu0 %v422, 35
  %v834 = vpop.permute.xlu0 %833
  %835 = vrot.lane.b32.xlu0 %v423, 35
  %v836 = vpop.permute.xlu0 %835
  %837 = vrot.lane.b32.xlu0 %v424, 35
  %v838 = vpop.permute.xlu0 %837
  %839 = vrot.lane.b32.xlu0 %v425, 35
  %v840 = vpop.permute.xlu0 %839
  %841 = vrot.lane.b32.xlu0 %v426, 35
  %v842 = vpop.permute.xlu0 %841
  %843 = vrot.lane.b32.xlu0 %v408, 35
  %v844 = vpop.permute.xlu0 %843
  %845 = vrot.lane.b32.xlu0 %v428, 35
  %v846 = vpop.permute.xlu0 %845
  %847 = vrot.lane.b32.xlu0 %v464, 35
  %v848 = vpop.permute.xlu0 %847
  %849 = vrot.lane.b32.xlu0 %v465, 35
  %v850 = vpop.permute.xlu0 %849
  %851 = vrot.lane.b32.xlu0 %v466, 35
  %v852 = vpop.permute.xlu0 %851
  %853 = vrot.lane.b32.xlu0 %v467, 35
  %v854 = vpop.permute.xlu0 %853
  %855 = vrot.lane.b32.xlu0 %v468, 35
  %v856 = vpop.permute.xlu0 %855
  %857 = vrot.lane.b32.xlu0 %v469, 35
  %v858 = vpop.permute.xlu0 %857
  %859 = vrot.lane.b32.xlu0 %v470, 35
  %v860 = vpop.permute.xlu0 %859
  %861 = vrot.lane.b32.xlu0 %v471, 35
  %v862 = vpop.permute.xlu0 %861
  %863 = vrot.lane.b32.xlu0 %v472, 35
  %v864 = vpop.permute.xlu0 %863
  %865 = vrot.lane.b32.xlu0 %v473, 35
  %v866 = vpop.permute.xlu0 %865
  %867 = vrot.lane.b32.xlu0 %v474, 35
  %v868 = vpop.permute.xlu0 %867
  %869 = vrot.lane.b32.xlu0 %v475, 35
  %v870 = vpop.permute.xlu0 %869
  %871 = vrot.lane.b32.xlu0 %v476, 35
  %v872 = vpop.permute.xlu0 %871
  %873 = vrot.lane.b32.xlu0 %v477, 35
  %v874 = vpop.permute.xlu0 %873
  %875 = vrot.lane.b32.xlu0 %v478, 35
  %v876 = vpop.permute.xlu0 %875
  %877 = vrot.lane.b32.xlu0 %v479, 35
  %v878 = vpop.permute.xlu0 %877
  %879 = vrot.lane.b32.xlu0 %v480, 35
  %v880 = vpop.permute.xlu0 %879
  %881 = vrot.lane.b32.xlu0 %v462, 35
  %v882 = vpop.permute.xlu0 %881
  %883 = vrot.lane.b32.xlu0 %v482, 35
  %v884 = vpop.permute.xlu0 %883
  %885 = vrot.lane.b32.xlu0 %v518, 35
  %v886 = vpop.permute.xlu0 %885
  %887 = vrot.lane.b32.xlu0 %v519, 35
  %v888 = vpop.permute.xlu0 %887
  %889 = vrot.lane.b32.xlu0 %v520, 35
  %v890 = vpop.permute.xlu0 %889
  %891 = vrot.lane.b32.xlu0 %v521, 35
  %v892 = vpop.permute.xlu0 %891
  %893 = vrot.lane.b32.xlu0 %v522, 35
  %v894 = vpop.permute.xlu0 %893
  %895 = vrot.lane.b32.xlu0 %v523, 35
  %v896 = vpop.permute.xlu0 %895
  %897 = vrot.lane.b32.xlu0 %v524, 35
  %v898 = vpop.permute.xlu0 %897
  %899 = vrot.lane.b32.xlu0 %v525, 35
  %v900 = vpop.permute.xlu0 %899
  %901 = vrot.lane.b32.xlu0 %v526, 35
  %v902 = vpop.permute.xlu0 %901
  %903 = vrot.lane.b32.xlu0 %v527, 35
  %v904 = vpop.permute.xlu0 %903
  %905 = vrot.lane.b32.xlu0 %v528, 35
  %v906 = vpop.permute.xlu0 %905
  %907 = vrot.lane.b32.xlu0 %v529, 35
  %v908 = vpop.permute.xlu0 %907
  %909 = vrot.lane.b32.xlu0 %v530, 35
  %v910 = vpop.permute.xlu0 %909
  %911 = vrot.lane.b32.xlu0 %v531, 35
  %v912 = vpop.permute.xlu0 %911
  %913 = vrot.lane.b32.xlu0 %v532, 35
  %v914 = vpop.permute.xlu0 %913
  %915 = vrot.lane.b32.xlu0 %v533, 35
  %v916 = vpop.permute.xlu0 %915
  %917 = vrot.lane.b32.xlu0 %v534, 35
  %v918 = vpop.permute.xlu0 %917
  %919 = vrot.lane.b32.xlu0 %v516, 35
  %v920 = vpop.permute.xlu0 %919
  %921 = vrot.lane.b32.xlu0 %v536, 35
  %v922 = vpop.permute.xlu0 %921
  %923 = vrot.lane.b32.xlu0 %v572, 35
  %v924 = vpop.permute.xlu0 %923
  %925 = vrot.lane.b32.xlu0 %v573, 35
  %v926 = vpop.permute.xlu0 %925
  %927 = vrot.lane.b32.xlu0 %v574, 35
  %v928 = vpop.permute.xlu0 %927
  %929 = vrot.lane.b32.xlu0 %v575, 35
  %v930 = vpop.permute.xlu0 %929
  %931 = vrot.lane.b32.xlu0 %v576, 35
  %v932 = vpop.permute.xlu0 %931
  %933 = vrot.lane.b32.xlu0 %v577, 35
  %v934 = vpop.permute.xlu0 %933
  %935 = vrot.lane.b32.xlu0 %v578, 35
  %v936 = vpop.permute.xlu0 %935
  %937 = vrot.lane.b32.xlu0 %v579, 35
  %v938 = vpop.permute.xlu0 %937
  %939 = vrot.lane.b32.xlu0 %v580, 35
  %v940 = vpop.permute.xlu0 %939
  %941 = vrot.lane.b32.xlu0 %v581, 35
  %v942 = vpop.permute.xlu0 %941
  %943 = vrot.lane.b32.xlu0 %v582, 35
  %v944 = vpop.permute.xlu0 %943
  %945 = vrot.lane.b32.xlu0 %v583, 35
  %v946 = vpop.permute.xlu0 %945
  %947 = vrot.lane.b32.xlu0 %v584, 35
  %v948 = vpop.permute.xlu0 %947
  %949 = vrot.lane.b32.xlu0 %v585, 35
  %v950 = vpop.permute.xlu0 %949
  %951 = vrot.lane.b32.xlu0 %v586, 35
  %v952 = vpop.permute.xlu0 %951
  %953 = vrot.lane.b32.xlu0 %v587, 35
  %v954 = vpop.permute.xlu0 %953
  %955 = vrot.lane.b32.xlu0 %v588, 35
  %v956 = vpop.permute.xlu0 %955
  %957 = vrot.lane.b32.xlu0 %v570, 35
  %v958 = vpop.permute.xlu0 %957
  %959 = vrot.lane.b32.xlu0 %v590, 35
  %v960 = vpop.permute.xlu0 %959
  %961 = vrot.lane.b32.xlu0 %v626, 35
  %v962 = vpop.permute.xlu0 %961
  %963 = vrot.lane.b32.xlu0 %v627, 35
  %v964 = vpop.permute.xlu0 %963
  %965 = vrot.lane.b32.xlu0 %v628, 35
  %v966 = vpop.permute.xlu0 %965
  %967 = vrot.lane.b32.xlu0 %v629, 35
  %v968 = vpop.permute.xlu0 %967
  %969 = vrot.lane.b32.xlu0 %v630, 35
  %v970 = vpop.permute.xlu0 %969
  %971 = vrot.lane.b32.xlu0 %v631, 35
  %v972 = vpop.permute.xlu0 %971
  %973 = vrot.lane.b32.xlu0 %v632, 35
  %v974 = vpop.permute.xlu0 %973
  %975 = vrot.lane.b32.xlu0 %v633, 35
  %v976 = vpop.permute.xlu0 %975
  %977 = vrot.lane.b32.xlu0 %v634, 35
  %v978 = vpop.permute.xlu0 %977
  %979 = vrot.lane.b32.xlu0 %v635, 35
  %v980 = vpop.permute.xlu0 %979
  %981 = vrot.lane.b32.xlu0 %v636, 35
  %v982 = vpop.permute.xlu0 %981
  %983 = vrot.lane.b32.xlu0 %v637, 35
  %v984 = vpop.permute.xlu0 %983
  %985 = vrot.lane.b32.xlu0 %v638, 35
  %v986 = vpop.permute.xlu0 %985
  %987 = vrot.lane.b32.xlu0 %v639, 35
  %v988 = vpop.permute.xlu0 %987
  %989 = vrot.lane.b32.xlu0 %v640, 35
  %v990 = vpop.permute.xlu0 %989
  %991 = vrot.lane.b32.xlu0 %v641, 35
  %v992 = vpop.permute.xlu0 %991
  %993 = vrot.lane.b32.xlu0 %v642, 35
  %v994 = vpop.permute.xlu0 %993
  %995 = vrot.lane.b32.xlu0 %v624, 35
  %v996 = vpop.permute.xlu0 %995
  %vm997 = vcmask 285696
  %v998 = vsel %vm997, %v656, %v658
  %v999 = vsel %vm997, %v658, %v660
  %v1000 = vsel %vm997, %v660, %v662
  %v1001 = vsel %vm997, %v662, %v664
  %v1002 = vsel %vm997, %v664, %v666
  %v1003 = vsel %vm997, %v666, %v668
  %v1004 = vsel %vm997, %v668, %v670
  %v1005 = vsel %vm997, %v670, %v672
  %v1006 = vsel %vm997, %v672, %v674
  %v1007 = vsel %vm997, %v674, %v676
  %v1008 = vsel %vm997, %v676, %v678
  %v1009 = vsel %vm997, %v678, %v680
  %v1010 = vsel %vm997, %v680, %v682
  %v1011 = vsel %vm997, %v682, %v684
  %v1012 = vsel %vm997, %v684, %v686
  %v1013 = vsel %vm997, %v686, %v688
  %v1014 = vsel %vm997, %v688, %v690
  %v1015 = vsel %vm997, %v690, %v692
  %v1016 = vsel %vm997, %v694, %v696
  %v1017 = vsel %vm997, %v696, %v698
  %v1018 = vsel %vm997, %v698, %v700
  %v1019 = vsel %vm997, %v700, %v702
  %v1020 = vsel %vm997, %v702, %v704
  %v1021 = vsel %vm997, %v704, %v706
  %v1022 = vsel %vm997, %v706, %v708
  %v1023 = vsel %vm997, %v708, %v710
  %v1024 = vsel %vm997, %v710, %v712
  %v1025 = vsel %vm997, %v712, %v714
  %v1026 = vsel %vm997, %v714, %v716
  %v1027 = vsel %vm997, %v716, %v718
  %v1028 = vsel %vm997, %v718, %v720
  %v1029 = vsel %vm997, %v720, %v722
  %v1030 = vsel %vm997, %v722, %v724
  %v1031 = vsel %vm997, %v724, %v726
  %v1032 = vsel %vm997, %v726, %v728
  %v1033 = vsel %vm997, %v728, %v730
  %v1034 = vsel %vm997, %v732, %v734
  %v1035 = vsel %vm997, %v734, %v736
  %v1036 = vsel %vm997, %v736, %v738
  %v1037 = vsel %vm997, %v738, %v740
  %v1038 = vsel %vm997, %v740, %v742
  %v1039 = vsel %vm997, %v742, %v744
  %v1040 = vsel %vm997, %v744, %v746
  %v1041 = vsel %vm997, %v746, %v748
  %v1042 = vsel %vm997, %v748, %v750
  %v1043 = vsel %vm997, %v750, %v752
  %v1044 = vsel %vm997, %v752, %v754
  %v1045 = vsel %vm997, %v754, %v756
  %v1046 = vsel %vm997, %v756, %v758
  %v1047 = vsel %vm997, %v758, %v760
  %v1048 = vsel %vm997, %v760, %v762
  %v1049 = vsel %vm997, %v762, %v764
  %v1050 = vsel %vm997, %v764, %v766
  %v1051 = vsel %vm997, %v766, %v768
  %v1052 = vsel %vm997, %v770, %v772
  %v1053 = vsel %vm997, %v772, %v774
  %v1054 = vsel %vm997, %v774, %v776
  %v1055 = vsel %vm997, %v776, %v778
  %v1056 = vsel %vm997, %v778, %v780
  %v1057 = vsel %vm997, %v780, %v782
  %v1058 = vsel %vm997, %v782, %v784
  %v1059 = vsel %vm997, %v784, %v786
  %v1060 = vsel %vm997, %v786, %v788
  %v1061 = vsel %vm997, %v788, %v790
  %v1062 = vsel %vm997, %v790, %v792
  %v1063 = vsel %vm997, %v792, %v794
  %v1064 = vsel %vm997, %v794, %v796
  %v1065 = vsel %vm997, %v796, %v798
  %v1066 = vsel %vm997, %v798, %v800
  %v1067 = vsel %vm997, %v800, %v802
  %v1068 = vsel %vm997, %v802, %v804
  %v1069 = vsel %vm997, %v804, %v806
  %v1070 = vsel %vm997, %v808, %v810
  %v1071 = vsel %vm997, %v810, %v812
  %v1072 = vsel %vm997, %v812, %v814
  %v1073 = vsel %vm997, %v814, %v816
  %v1074 = vsel %vm997, %v816, %v818
  %v1075 = vsel %vm997, %v818, %v820
  %v1076 = vsel %vm997, %v820, %v822
  %v1077 = vsel %vm997, %v822, %v824
  %v1078 = vsel %vm997, %v824, %v826
  %v1079 = vsel %vm997, %v826, %v828
  %v1080 = vsel %vm997, %v828, %v830
  %v1081 = vsel %vm997, %v830, %v832
  %v1082 = vsel %vm997, %v832, %v834
  %v1083 = vsel %vm997, %v834, %v836
  %v1084 = vsel %vm997, %v836, %v838
  %v1085 = vsel %vm997, %v838, %v840
  %v1086 = vsel %vm997, %v840, %v842
  %v1087 = vsel %vm997, %v842, %v844
  %v1088 = vsel %vm997, %v846, %v848
  %v1089 = vsel %vm997, %v848, %v850
  %v1090 = vsel %vm997, %v850, %v852
  %v1091 = vsel %vm997, %v852, %v854
  %v1092 = vsel %vm997, %v854, %v856
  %v1093 = vsel %vm997, %v856, %v858
  %v1094 = vsel %vm997, %v858, %v860
  %v1095 = vsel %vm997, %v860, %v862
  %v1096 = vsel %vm997, %v862, %v864
  %v1097 = vsel %vm997, %v864, %v866
  %v1098 = vsel %vm997, %v866, %v868
  %v1099 = vsel %vm997, %v868, %v870
  %v1100 = vsel %vm997, %v870, %v872
  %v1101 = vsel %vm997, %v872, %v874
  %v1102 = vsel %vm997, %v874, %v876
  %v1103 = vsel %vm997, %v876, %v878
  %v1104 = vsel %vm997, %v878, %v880
  %v1105 = vsel %vm997, %v880, %v882
  %v1106 = vsel %vm997, %v884, %v886
  %v1107 = vsel %vm997, %v886, %v888
  %v1108 = vsel %vm997, %v888, %v890
  %v1109 = vsel %vm997, %v890, %v892
  %v1110 = vsel %vm997, %v892, %v894
  %v1111 = vsel %vm997, %v894, %v896
  %v1112 = vsel %vm997, %v896, %v898
  %v1113 = vsel %vm997, %v898, %v900
  %v1114 = vsel %vm997, %v900, %v902
  %v1115 = vsel %vm997, %v902, %v904
  %v1116 = vsel %vm997, %v904, %v906
  %v1117 = vsel %vm997, %v906, %v908
  %v1118 = vsel %vm997, %v908, %v910
  %v1119 = vsel %vm997, %v910, %v912
  %v1120 = vsel %vm997, %v912, %v914
  %v1121 = vsel %vm997, %v914, %v916
  %v1122 = vsel %vm997, %v916, %v918
  %v1123 = vsel %vm997, %v918, %v920
  %v1124 = vsel %vm997, %v922, %v924
  %v1125 = vsel %vm997, %v924, %v926
  %v1126 = vsel %vm997, %v926, %v928
  %v1127 = vsel %vm997, %v928, %v930
  %v1128 = vsel %vm997, %v930, %v932
  %v1129 = vsel %vm997, %v932, %v934
  %v1130 = vsel %vm997, %v934, %v936
  %v1131 = vsel %vm997, %v936, %v938
  %v1132 = vsel %vm997, %v938, %v940
  %v1133 = vsel %vm997, %v940, %v942
  %v1134 = vsel %vm997, %v942, %v944
  %v1135 = vsel %vm997, %v944, %v946
  %v1136 = vsel %vm997, %v946, %v948
  %v1137 = vsel %vm997, %v948, %v950
  %v1138 = vsel %vm997, %v950, %v952
  %v1139 = vsel %vm997, %v952, %v954
  %v1140 = vsel %vm997, %v954, %v956
  %v1141 = vsel %vm997, %v956, %v958
  %v1142 = vsel %vm997, %v960, %v962
  %v1143 = vsel %vm997, %v962, %v964
  %v1144 = vsel %vm997, %v964, %v966
  %v1145 = vsel %vm997, %v966, %v968
  %v1146 = vsel %vm997, %v968, %v970
  %v1147 = vsel %vm997, %v970, %v972
  %v1148 = vsel %vm997, %v972, %v974
  %v1149 = vsel %vm997, %v974, %v976
  %v1150 = vsel %vm997, %v976, %v978
  %v1151 = vsel %vm997, %v978, %v980
  %v1152 = vsel %vm997, %v980, %v982
  %v1153 = vsel %vm997, %v982, %v984
  %v1154 = vsel %vm997, %v984, %v986
  %v1155 = vsel %vm997, %v986, %v988
  %v1156 = vsel %vm997, %v988, %v990
  %v1157 = vsel %vm997, %v990, %v992
  %v1158 = vsel %vm997, %v992, %v994
  %v1159 = vsel %vm997, %v994, %v996
  %vm1322 = vcmask 130048
  %v1323 = vsel %vm1322, %v653, 0
  %1325 = vmatpush.bf16.msra.mxu0 %v1124
  %1326 = vmatpush.bf16.msra.mxu0 %v1106
  %1327 = vmatpush.bf16.msra.mxu0 %v1088
  %1328 = vmatpush.bf16.msra.mxu0 %v1070
  %1329 = vmatpush.bf16.msra.mxu0 %v1052
  %1330 = vmatpush.bf16.msra.mxu0 %v1034
  %1331 = vmatpush.bf16.msra.mxu0 %v1016
  %1332 = vmatpush.bf16.msra.mxu0 %v998
  %1333 = vmatmul.bf16.gmra.mxu0 %v652
  %v1334 = vpop.f32.mrf.mxu0
  %v1335 = vadd.f32 %v648, %v1334
  %v1336 = vpop.f32.mrf.mxu0
  %1337 = vdwg.mxu0
  %1338 = vmatpush.bf16.msra.mxu0 0
  %1339 = vmatpush.bf16.msra.mxu0 0
  %1340 = vmatpush.bf16.msra.mxu0 0
  %1341 = vmatpush.bf16.msra.mxu0 0
  %1342 = vmatpush.bf16.msra.mxu0 0
  %1343 = vmatpush.bf16.msra.mxu0 0
  %1344 = vmatpush.bf16.msra.mxu0 0
  %1345 = vmatpush.bf16.msra.mxu0 %v1142
  %1346 = vmatmul.bf16.gmra.mxu0 %v1323
  %v1347 = vpop.f32.mrf.mxu0
  %v1348 = vadd.f32 %v1335, %v1347
  %v1349 = vpop.f32.mrf.mxu0
  %1350 = vdwg.mxu0
  %1351 = vmatpush.bf16.msra.mxu0 %v1125
  %1352 = vmatpush.bf16.msra.mxu0 %v1107
  %1353 = vmatpush.bf16.msra.mxu0 %v1089
  %1354 = vmatpush.bf16.msra.mxu0 %v1071
  %1355 = vmatpush.bf16.msra.mxu0 %v1053
  %1356 = vmatpush.bf16.msra.mxu0 %v1035
  %1357 = vmatpush.bf16.msra.mxu0 %v1017
  %1358 = vmatpush.bf16.msra.mxu0 %v999
  %1359 = vmatmul.bf16.gmra.mxu0 %v652
  %v1360 = vpop.f32.mrf.mxu0
  %v1361 = vadd.f32 %v648, %v1360
  %v1362 = vpop.f32.mrf.mxu0
  %1363 = vdwg.mxu0
  %1364 = vmatpush.bf16.msra.mxu0 0
  %1365 = vmatpush.bf16.msra.mxu0 0
  %1366 = vmatpush.bf16.msra.mxu0 0
  %1367 = vmatpush.bf16.msra.mxu0 0
  %1368 = vmatpush.bf16.msra.mxu0 0
  %1369 = vmatpush.bf16.msra.mxu0 0
  %1370 = vmatpush.bf16.msra.mxu0 0
  %1371 = vmatpush.bf16.msra.mxu0 %v1143
  %1372 = vmatmul.bf16.gmra.mxu0 %v1323
  %v1373 = vpop.f32.mrf.mxu0
  %v1374 = vadd.f32 %v1361, %v1373
  %v1375 = vpop.f32.mrf.mxu0
  %1376 = vdwg.mxu0
  %1377 = vmatpush.bf16.msra.mxu0 %v1126
  %1378 = vmatpush.bf16.msra.mxu0 %v1108
  %1379 = vmatpush.bf16.msra.mxu0 %v1090
  %1380 = vmatpush.bf16.msra.mxu0 %v1072
  %1381 = vmatpush.bf16.msra.mxu0 %v1054
  %1382 = vmatpush.bf16.msra.mxu0 %v1036
  %1383 = vmatpush.bf16.msra.mxu0 %v1018
  %1384 = vmatpush.bf16.msra.mxu0 %v1000
  %1385 = vmatmul.bf16.gmra.mxu0 %v652
  %v1386 = vpop.f32.mrf.mxu0
  %v1387 = vadd.f32 %v648, %v1386
  %v1388 = vpop.f32.mrf.mxu0
  %1389 = vdwg.mxu0
  %1390 = vmatpush.bf16.msra.mxu0 0
  %1391 = vmatpush.bf16.msra.mxu0 0
  %1392 = vmatpush.bf16.msra.mxu0 0
  %1393 = vmatpush.bf16.msra.mxu0 0
  %1394 = vmatpush.bf16.msra.mxu0 0
  %1395 = vmatpush.bf16.msra.mxu0 0
  %1396 = vmatpush.bf16.msra.mxu0 0
  %1397 = vmatpush.bf16.msra.mxu0 %v1144
  %1398 = vmatmul.bf16.gmra.mxu0 %v1323
  %v1399 = vpop.f32.mrf.mxu0
  %v1400 = vadd.f32 %v1387, %v1399
  %v1401 = vpop.f32.mrf.mxu0
  %1402 = vdwg.mxu0
  %1403 = vmatpush.bf16.msra.mxu0 %v1127
  %1404 = vmatpush.bf16.msra.mxu0 %v1109
  %1405 = vmatpush.bf16.msra.mxu0 %v1091
  %1406 = vmatpush.bf16.msra.mxu0 %v1073
  %1407 = vmatpush.bf16.msra.mxu0 %v1055
  %1408 = vmatpush.bf16.msra.mxu0 %v1037
  %1409 = vmatpush.bf16.msra.mxu0 %v1019
  %1410 = vmatpush.bf16.msra.mxu0 %v1001
  %1411 = vmatmul.bf16.gmra.mxu0 %v652
  %v1412 = vpop.f32.mrf.mxu0
  %v1413 = vadd.f32 %v648, %v1412
  %v1414 = vpop.f32.mrf.mxu0
  %1415 = vdwg.mxu0
  %1416 = vmatpush.bf16.msra.mxu0 0
  %1417 = vmatpush.bf16.msra.mxu0 0
  %1418 = vmatpush.bf16.msra.mxu0 0
  %1419 = vmatpush.bf16.msra.mxu0 0
  %1420 = vmatpush.bf16.msra.mxu0 0
  %1421 = vmatpush.bf16.msra.mxu0 0
  %1422 = vmatpush.bf16.msra.mxu0 0
  %1423 = vmatpush.bf16.msra.mxu0 %v1145
  %1424 = vmatmul.bf16.gmra.mxu0 %v1323
  %v1425 = vpop.f32.mrf.mxu0
  %v1426 = vadd.f32 %v1413, %v1425
  %v1427 = vpop.f32.mrf.mxu0
  %1428 = vdwg.mxu0
  %1429 = vmatpush.bf16.msra.mxu0 %v1128
  %1430 = vmatpush.bf16.msra.mxu0 %v1110
  %1431 = vmatpush.bf16.msra.mxu0 %v1092
  %1432 = vmatpush.bf16.msra.mxu0 %v1074
  %1433 = vmatpush.bf16.msra.mxu0 %v1056
  %1434 = vmatpush.bf16.msra.mxu0 %v1038
  %1435 = vmatpush.bf16.msra.mxu0 %v1020
  %1436 = vmatpush.bf16.msra.mxu0 %v1002
  %1437 = vmatmul.bf16.gmra.mxu0 %v652
  %v1438 = vpop.f32.mrf.mxu0
  %v1439 = vadd.f32 %v648, %v1438
  %v1440 = vpop.f32.mrf.mxu0
  %1441 = vdwg.mxu0
  %1442 = vmatpush.bf16.msra.mxu0 0
  %1443 = vmatpush.bf16.msra.mxu0 0
  %1444 = vmatpush.bf16.msra.mxu0 0
  %1445 = vmatpush.bf16.msra.mxu0 0
  %1446 = vmatpush.bf16.msra.mxu0 0
  %1447 = vmatpush.bf16.msra.mxu0 0
  %1448 = vmatpush.bf16.msra.mxu0 0
  %1449 = vmatpush.bf16.msra.mxu0 %v1146
  %1450 = vmatmul.bf16.gmra.mxu0 %v1323
  %v1451 = vpop.f32.mrf.mxu0
  %v1452 = vadd.f32 %v1439, %v1451
  %v1453 = vpop.f32.mrf.mxu0
  %1454 = vdwg.mxu0
  %1455 = vmatpush.bf16.msra.mxu0 %v1129
  %1456 = vmatpush.bf16.msra.mxu0 %v1111
  %1457 = vmatpush.bf16.msra.mxu0 %v1093
  %1458 = vmatpush.bf16.msra.mxu0 %v1075
  %1459 = vmatpush.bf16.msra.mxu0 %v1057
  %1460 = vmatpush.bf16.msra.mxu0 %v1039
  %1461 = vmatpush.bf16.msra.mxu0 %v1021
  %1462 = vmatpush.bf16.msra.mxu0 %v1003
  %1463 = vmatmul.bf16.gmra.mxu0 %v652
  %v1464 = vpop.f32.mrf.mxu0
  %v1465 = vadd.f32 %v648, %v1464
  %v1466 = vpop.f32.mrf.mxu0
  %1467 = vdwg.mxu0
  %1468 = vmatpush.bf16.msra.mxu0 0
  %1469 = vmatpush.bf16.msra.mxu0 0
  %1470 = vmatpush.bf16.msra.mxu0 0
  %1471 = vmatpush.bf16.msra.mxu0 0
  %1472 = vmatpush.bf16.msra.mxu0 0
  %1473 = vmatpush.bf16.msra.mxu0 0
  %1474 = vmatpush.bf16.msra.mxu0 0
  %1475 = vmatpush.bf16.msra.mxu0 %v1147
  %1476 = vmatmul.bf16.gmra.mxu0 %v1323
  %v1477 = vpop.f32.mrf.mxu0
  %v1478 = vadd.f32 %v1465, %v1477
  %v1479 = vpop.f32.mrf.mxu0
  %1480 = vdwg.mxu0
  %1481 = vmatpush.bf16.msra.mxu0 %v1130
  %1482 = vmatpush.bf16.msra.mxu0 %v1112
  %1483 = vmatpush.bf16.msra.mxu0 %v1094
  %1484 = vmatpush.bf16.msra.mxu0 %v1076
  %1485 = vmatpush.bf16.msra.mxu0 %v1058
  %1486 = vmatpush.bf16.msra.mxu0 %v1040
  %1487 = vmatpush.bf16.msra.mxu0 %v1022
  %1488 = vmatpush.bf16.msra.mxu0 %v1004
  %1489 = vmatmul.bf16.gmra.mxu0 %v652
  %v1490 = vpop.f32.mrf.mxu0
  %v1491 = vadd.f32 %v648, %v1490
  %v1492 = vpop.f32.mrf.mxu0
  %1493 = vdwg.mxu0
  %1494 = vmatpush.bf16.msra.mxu0 0
  %1495 = vmatpush.bf16.msra.mxu0 0
  %1496 = vmatpush.bf16.msra.mxu0 0
  %1497 = vmatpush.bf16.msra.mxu0 0
  %1498 = vmatpush.bf16.msra.mxu0 0
  %1499 = vmatpush.bf16.msra.mxu0 0
  %1500 = vmatpush.bf16.msra.mxu0 0
  %1501 = vmatpush.bf16.msra.mxu0 %v1148
  %1502 = vmatmul.bf16.gmra.mxu0 %v1323
  %v1503 = vpop.f32.mrf.mxu0
  %v1504 = vadd.f32 %v1491, %v1503
  %v1505 = vpop.f32.mrf.mxu0
  %1506 = vdwg.mxu0
  %1507 = vmatpush.bf16.msra.mxu0 %v1131
  %1508 = vmatpush.bf16.msra.mxu0 %v1113
  %1509 = vmatpush.bf16.msra.mxu0 %v1095
  %1510 = vmatpush.bf16.msra.mxu0 %v1077
  %1511 = vmatpush.bf16.msra.mxu0 %v1059
  %1512 = vmatpush.bf16.msra.mxu0 %v1041
  %1513 = vmatpush.bf16.msra.mxu0 %v1023
  %1514 = vmatpush.bf16.msra.mxu0 %v1005
  %1515 = vmatmul.bf16.gmra.mxu0 %v652
  %v1516 = vpop.f32.mrf.mxu0
  %v1517 = vadd.f32 %v648, %v1516
  %v1518 = vpop.f32.mrf.mxu0
  %1519 = vdwg.mxu0
  %1520 = vmatpush.bf16.msra.mxu0 0
  %1521 = vmatpush.bf16.msra.mxu0 0
  %1522 = vmatpush.bf16.msra.mxu0 0
  %1523 = vmatpush.bf16.msra.mxu0 0
  %1524 = vmatpush.bf16.msra.mxu0 0
  %1525 = vmatpush.bf16.msra.mxu0 0
  %1526 = vmatpush.bf16.msra.mxu0 0
  %1527 = vmatpush.bf16.msra.mxu0 %v1149
  %1528 = vmatmul.bf16.gmra.mxu0 %v1323
  %v1529 = vpop.f32.mrf.mxu0
  %v1530 = vadd.f32 %v1517, %v1529
  %v1531 = vpop.f32.mrf.mxu0
  %1532 = vdwg.mxu0
  %1533 = vmatpush.bf16.msra.mxu0 %v1132
  %1534 = vmatpush.bf16.msra.mxu0 %v1114
  %1535 = vmatpush.bf16.msra.mxu0 %v1096
  %1536 = vmatpush.bf16.msra.mxu0 %v1078
  %1537 = vmatpush.bf16.msra.mxu0 %v1060
  %1538 = vmatpush.bf16.msra.mxu0 %v1042
  %1539 = vmatpush.bf16.msra.mxu0 %v1024
  %1540 = vmatpush.bf16.msra.mxu0 %v1006
  %1541 = vmatmul.bf16.gmra.mxu0 %v652
  %v1542 = vpop.f32.mrf.mxu0
  %v1543 = vadd.f32 %v648, %v1542
  %v1544 = vpop.f32.mrf.mxu0
  %1545 = vdwg.mxu0
  %1546 = vmatpush.bf16.msra.mxu0 0
  %1547 = vmatpush.bf16.msra.mxu0 0
  %1548 = vmatpush.bf16.msra.mxu0 0
  %1549 = vmatpush.bf16.msra.mxu0 0
  %1550 = vmatpush.bf16.msra.mxu0 0
  %1551 = vmatpush.bf16.msra.mxu0 0
  %1552 = vmatpush.bf16.msra.mxu0 0
  %1553 = vmatpush.bf16.msra.mxu0 %v1150
  %1554 = vmatmul.bf16.gmra.mxu0 %v1323
  %v1555 = vpop.f32.mrf.mxu0
  %v1556 = vadd.f32 %v1543, %v1555
  %v1557 = vpop.f32.mrf.mxu0
  %1558 = vdwg.mxu0
  %1559 = vmatpush.bf16.msra.mxu0 %v1133
  %1560 = vmatpush.bf16.msra.mxu0 %v1115
  %1561 = vmatpush.bf16.msra.mxu0 %v1097
  %1562 = vmatpush.bf16.msra.mxu0 %v1079
  %1563 = vmatpush.bf16.msra.mxu0 %v1061
  %1564 = vmatpush.bf16.msra.mxu0 %v1043
  %1565 = vmatpush.bf16.msra.mxu0 %v1025
  %1566 = vmatpush.bf16.msra.mxu0 %v1007
  %1567 = vmatmul.bf16.gmra.mxu0 %v652
  %v1568 = vpop.f32.mrf.mxu0
  %v1569 = vadd.f32 %v648, %v1568
  %v1570 = vpop.f32.mrf.mxu0
  %1571 = vdwg.mxu0
  %1572 = vmatpush.bf16.msra.mxu0 0
  %1573 = vmatpush.bf16.msra.mxu0 0
  %1574 = vmatpush.bf16.msra.mxu0 0
  %1575 = vmatpush.bf16.msra.mxu0 0
  %1576 = vmatpush.bf16.msra.mxu0 0
  %1577 = vmatpush.bf16.msra.mxu0 0
  %1578 = vmatpush.bf16.msra.mxu0 0
  %1579 = vmatpush.bf16.msra.mxu0 %v1151
  %1580 = vmatmul.bf16.gmra.mxu0 %v1323
  %v1581 = vpop.f32.mrf.mxu0
  %v1582 = vadd.f32 %v1569, %v1581
  %v1583 = vpop.f32.mrf.mxu0
  %1584 = vdwg.mxu0
  %1585 = vmatpush.bf16.msra.mxu0 %v1134
  %1586 = vmatpush.bf16.msra.mxu0 %v1116
  %1587 = vmatpush.bf16.msra.mxu0 %v1098
  %1588 = vmatpush.bf16.msra.mxu0 %v1080
  %1589 = vmatpush.bf16.msra.mxu0 %v1062
  %1590 = vmatpush.bf16.msra.mxu0 %v1044
  %1591 = vmatpush.bf16.msra.mxu0 %v1026
  %1592 = vmatpush.bf16.msra.mxu0 %v1008
  %1593 = vmatmul.bf16.gmra.mxu0 %v652
  %v1594 = vpop.f32.mrf.mxu0
  %v1595 = vadd.f32 %v648, %v1594
  %v1596 = vpop.f32.mrf.mxu0
  %1597 = vdwg.mxu0
  %1598 = vmatpush.bf16.msra.mxu0 0
  %1599 = vmatpush.bf16.msra.mxu0 0
  %1600 = vmatpush.bf16.msra.mxu0 0
  %1601 = vmatpush.bf16.msra.mxu0 0
  %1602 = vmatpush.bf16.msra.mxu0 0
  %1603 = vmatpush.bf16.msra.mxu0 0
  %1604 = vmatpush.bf16.msra.mxu0 0
  %1605 = vmatpush.bf16.msra.mxu0 %v1152
  %1606 = vmatmul.bf16.gmra.mxu0 %v1323
  %v1607 = vpop.f32.mrf.mxu0
  %v1608 = vadd.f32 %v1595, %v1607
  %v1609 = vpop.f32.mrf.mxu0
  %1610 = vdwg.mxu0
  %1611 = vmatpush.bf16.msra.mxu0 %v1135
  %1612 = vmatpush.bf16.msra.mxu0 %v1117
  %1613 = vmatpush.bf16.msra.mxu0 %v1099
  %1614 = vmatpush.bf16.msra.mxu0 %v1081
  %1615 = vmatpush.bf16.msra.mxu0 %v1063
  %1616 = vmatpush.bf16.msra.mxu0 %v1045
  %1617 = vmatpush.bf16.msra.mxu0 %v1027
  %1618 = vmatpush.bf16.msra.mxu0 %v1009
  %1619 = vmatmul.bf16.gmra.mxu0 %v652
  %v1620 = vpop.f32.mrf.mxu0
  %v1621 = vadd.f32 %v648, %v1620
  %v1622 = vpop.f32.mrf.mxu0
  %1623 = vdwg.mxu0
  %1624 = vmatpush.bf16.msra.mxu0 0
  %1625 = vmatpush.bf16.msra.mxu0 0
  %1626 = vmatpush.bf16.msra.mxu0 0
  %1627 = vmatpush.bf16.msra.mxu0 0
  %1628 = vmatpush.bf16.msra.mxu0 0
  %1629 = vmatpush.bf16.msra.mxu0 0
  %1630 = vmatpush.bf16.msra.mxu0 0
  %1631 = vmatpush.bf16.msra.mxu0 %v1153
  %1632 = vmatmul.bf16.gmra.mxu0 %v1323
  %v1633 = vpop.f32.mrf.mxu0
  %v1634 = vadd.f32 %v1621, %v1633
  %v1635 = vpop.f32.mrf.mxu0
  %1636 = vdwg.mxu0
  %1637 = vmatpush.bf16.msra.mxu0 %v1136
  %1638 = vmatpush.bf16.msra.mxu0 %v1118
  %1639 = vmatpush.bf16.msra.mxu0 %v1100
  %1640 = vmatpush.bf16.msra.mxu0 %v1082
  %1641 = vmatpush.bf16.msra.mxu0 %v1064
  %1642 = vmatpush.bf16.msra.mxu0 %v1046
  %1643 = vmatpush.bf16.msra.mxu0 %v1028
  %1644 = vmatpush.bf16.msra.mxu0 %v1010
  %1645 = vmatmul.bf16.gmra.mxu0 %v652
  %v1646 = vpop.f32.mrf.mxu0
  %v1647 = vadd.f32 %v648, %v1646
  %v1648 = vpop.f32.mrf.mxu0
  %1649 = vdwg.mxu0
  %1650 = vmatpush.bf16.msra.mxu0 0
  %1651 = vmatpush.bf16.msra.mxu0 0
  %1652 = vmatpush.bf16.msra.mxu0 0
  %1653 = vmatpush.bf16.msra.mxu0 0
  %1654 = vmatpush.bf16.msra.mxu0 0
  %1655 = vmatpush.bf16.msra.mxu0 0
  %1656 = vmatpush.bf16.msra.mxu0 0
  %1657 = vmatpush.bf16.msra.mxu0 %v1154
  %1658 = vmatmul.bf16.gmra.mxu0 %v1323
  %v1659 = vpop.f32.mrf.mxu0
  %v1660 = vadd.f32 %v1647, %v1659
  %v1661 = vpop.f32.mrf.mxu0
  %1662 = vdwg.mxu0
  %1663 = vmatpush.bf16.msra.mxu0 %v1137
  %1664 = vmatpush.bf16.msra.mxu0 %v1119
  %1665 = vmatpush.bf16.msra.mxu0 %v1101
  %1666 = vmatpush.bf16.msra.mxu0 %v1083
  %1667 = vmatpush.bf16.msra.mxu0 %v1065
  %1668 = vmatpush.bf16.msra.mxu0 %v1047
  %1669 = vmatpush.bf16.msra.mxu0 %v1029
  %1670 = vmatpush.bf16.msra.mxu0 %v1011
  %1671 = vmatmul.bf16.gmra.mxu0 %v652
  %v1672 = vpop.f32.mrf.mxu0
  %v1673 = vadd.f32 %v648, %v1672
  %v1674 = vpop.f32.mrf.mxu0
  %1675 = vdwg.mxu0
  %1676 = vmatpush.bf16.msra.mxu0 0
  %1677 = vmatpush.bf16.msra.mxu0 0
  %1678 = vmatpush.bf16.msra.mxu0 0
  %1679 = vmatpush.bf16.msra.mxu0 0
  %1680 = vmatpush.bf16.msra.mxu0 0
  %1681 = vmatpush.bf16.msra.mxu0 0
  %1682 = vmatpush.bf16.msra.mxu0 0
  %1683 = vmatpush.bf16.msra.mxu0 %v1155
  %1684 = vmatmul.bf16.gmra.mxu0 %v1323
  %v1685 = vpop.f32.mrf.mxu0
  %v1686 = vadd.f32 %v1673, %v1685
  %v1687 = vpop.f32.mrf.mxu0
  %1688 = vdwg.mxu0
  %1689 = vmatpush.bf16.msra.mxu0 %v1138
  %1690 = vmatpush.bf16.msra.mxu0 %v1120
  %1691 = vmatpush.bf16.msra.mxu0 %v1102
  %1692 = vmatpush.bf16.msra.mxu0 %v1084
  %1693 = vmatpush.bf16.msra.mxu0 %v1066
  %1694 = vmatpush.bf16.msra.mxu0 %v1048
  %1695 = vmatpush.bf16.msra.mxu0 %v1030
  %1696 = vmatpush.bf16.msra.mxu0 %v1012
  %1697 = vmatmul.bf16.gmra.mxu0 %v652
  %v1698 = vpop.f32.mrf.mxu0
  %v1699 = vadd.f32 %v648, %v1698
  %v1700 = vpop.f32.mrf.mxu0
  %1701 = vdwg.mxu0
  %1702 = vmatpush.bf16.msra.mxu0 0
  %1703 = vmatpush.bf16.msra.mxu0 0
  %1704 = vmatpush.bf16.msra.mxu0 0
  %1705 = vmatpush.bf16.msra.mxu0 0
  %1706 = vmatpush.bf16.msra.mxu0 0
  %1707 = vmatpush.bf16.msra.mxu0 0
  %1708 = vmatpush.bf16.msra.mxu0 0
  %1709 = vmatpush.bf16.msra.mxu0 %v1156
  %1710 = vmatmul.bf16.gmra.mxu0 %v1323
  %v1711 = vpop.f32.mrf.mxu0
  %v1712 = vadd.f32 %v1699, %v1711
  %v1713 = vpop.f32.mrf.mxu0
  %1714 = vdwg.mxu0
  %1715 = vmatpush.bf16.msra.mxu0 %v1139
  %1716 = vmatpush.bf16.msra.mxu0 %v1121
  %1717 = vmatpush.bf16.msra.mxu0 %v1103
  %1718 = vmatpush.bf16.msra.mxu0 %v1085
  %1719 = vmatpush.bf16.msra.mxu0 %v1067
  %1720 = vmatpush.bf16.msra.mxu0 %v1049
  %1721 = vmatpush.bf16.msra.mxu0 %v1031
  %1722 = vmatpush.bf16.msra.mxu0 %v1013
  %1723 = vmatmul.bf16.gmra.mxu0 %v652
  %v1724 = vpop.f32.mrf.mxu0
  %v1725 = vadd.f32 %v648, %v1724
  %v1726 = vpop.f32.mrf.mxu0
  %1727 = vdwg.mxu0
  %1728 = vmatpush.bf16.msra.mxu0 0
  %1729 = vmatpush.bf16.msra.mxu0 0
  %1730 = vmatpush.bf16.msra.mxu0 0
  %1731 = vmatpush.bf16.msra.mxu0 0
  %1732 = vmatpush.bf16.msra.mxu0 0
  %1733 = vmatpush.bf16.msra.mxu0 0
  %1734 = vmatpush.bf16.msra.mxu0 0
  %1735 = vmatpush.bf16.msra.mxu0 %v1157
  %1736 = vmatmul.bf16.gmra.mxu0 %v1323
  %v1737 = vpop.f32.mrf.mxu0
  %v1738 = vadd.f32 %v1725, %v1737
  %v1739 = vpop.f32.mrf.mxu0
  %1740 = vdwg.mxu0
  %1741 = vmatpush.bf16.msra.mxu0 %v1140
  %1742 = vmatpush.bf16.msra.mxu0 %v1122
  %1743 = vmatpush.bf16.msra.mxu0 %v1104
  %1744 = vmatpush.bf16.msra.mxu0 %v1086
  %1745 = vmatpush.bf16.msra.mxu0 %v1068
  %1746 = vmatpush.bf16.msra.mxu0 %v1050
  %1747 = vmatpush.bf16.msra.mxu0 %v1032
  %1748 = vmatpush.bf16.msra.mxu0 %v1014
  %1749 = vmatmul.bf16.gmra.mxu0 %v652
  %v1750 = vpop.f32.mrf.mxu0
  %v1751 = vadd.f32 %v648, %v1750
  %v1752 = vpop.f32.mrf.mxu0
  %1753 = vdwg.mxu0
  %1754 = vmatpush.bf16.msra.mxu0 0
  %1755 = vmatpush.bf16.msra.mxu0 0
  %1756 = vmatpush.bf16.msra.mxu0 0
  %1757 = vmatpush.bf16.msra.mxu0 0
  %1758 = vmatpush.bf16.msra.mxu0 0
  %1759 = vmatpush.bf16.msra.mxu0 0
  %1760 = vmatpush.bf16.msra.mxu0 0
  %1761 = vmatpush.bf16.msra.mxu0 %v1158
  %1762 = vmatmul.bf16.gmra.mxu0 %v1323
  %v1763 = vpop.f32.mrf.mxu0
  %v1764 = vadd.f32 %v1751, %v1763
  %v1765 = vpop.f32.mrf.mxu0
  %1766 = vdwg.mxu0
  %1767 = vmatpush.bf16.msra.mxu0 %v1141
  %1768 = vmatpush.bf16.msra.mxu0 %v1123
  %1769 = vmatpush.bf16.msra.mxu0 %v1105
  %1770 = vmatpush.bf16.msra.mxu0 %v1087
  %1771 = vmatpush.bf16.msra.mxu0 %v1069
  %1772 = vmatpush.bf16.msra.mxu0 %v1051
  %1773 = vmatpush.bf16.msra.mxu0 %v1033
  %1774 = vmatpush.bf16.msra.mxu0 %v1015
  %1775 = vmatmul.bf16.gmra.mxu0 %v652
  %v1776 = vpop.f32.mrf.mxu0
  %v1777 = vadd.f32 %v648, %v1776
  %v1778 = vpop.f32.mrf.mxu0
  %1779 = vdwg.mxu0
  %1780 = vmatpush.bf16.msra.mxu0 0
  %1781 = vmatpush.bf16.msra.mxu0 0
  %1782 = vmatpush.bf16.msra.mxu0 0
  %1783 = vmatpush.bf16.msra.mxu0 0
  %1784 = vmatpush.bf16.msra.mxu0 0
  %1785 = vmatpush.bf16.msra.mxu0 0
  %1786 = vmatpush.bf16.msra.mxu0 0
  %1787 = vmatpush.bf16.msra.mxu0 %v1159
  %1788 = vmatmul.bf16.gmra.mxu0 %v1323
  %v1789 = vpop.f32.mrf.mxu0
  %v1790 = vadd.f32 %v1777, %v1789
  %v1791 = vpop.f32.mrf.mxu0
  %1792 = vdwg.mxu0
  %1793 = vst [vmem:[%s3] sm:$0x7] 0.0
  %vm1794 = vcmask 821776
  %1795 = vst.msk [vmem:[%s3 + $0x48] sm:$0x7] %vm1794, 0.0
  %v1814 = vrot.slane %v1374, 4
  %v1815 = vrot.slane %v1426, 4
  %v1816 = vrot.slane %v1478, 4
  %v1817 = vrot.slane %v1530, 4
  %v1818 = vrot.slane %v1582, 4
  %v1819 = vrot.slane %v1634, 4
  %v1820 = vrot.slane %v1686, 4
  %v1821 = vrot.slane %v1738, 4
  %v1822 = vrot.slane %v1790, 4
  %vm1823 = vcmask 1043456
  %v1824 = vsel %vm1823, %v1348, %v1814
  %v1825 = vsel %vm1823, %v1400, %v1815
  %v1826 = vsel %vm1823, %v1452, %v1816
  %v1827 = vsel %vm1823, %v1504, %v1817
  %v1828 = vsel %vm1823, %v1556, %v1818
  %v1829 = vsel %vm1823, %v1608, %v1819
  %v1830 = vsel %vm1823, %v1660, %v1820
  %v1831 = vsel %vm1823, %v1712, %v1821
  %v1832 = vsel %vm1823, %v1764, %v1822
  %1842 = vst [vmem:[%s3 + $0x4] sm:$0x77] %v1824
  %1843 = vst [vmem:[%s3 + $0xc] sm:$0x77] %v1825
  %1844 = vst [vmem:[%s3 + $0x14] sm:$0x77] %v1826
  %1845 = vst [vmem:[%s3 + $0x1c] sm:$0x77] %v1827
  %1846 = vst [vmem:[%s3 + $0x24] sm:$0x77] %v1828
  %1847 = vst [vmem:[%s3 + $0x2c] sm:$0x77] %v1829
  %1848 = vst [vmem:[%s3 + $0x34] sm:$0x77] %v1830
  %1849 = vst [vmem:[%s3 + $0x3c] sm:$0x77] %v1831
  %vm1850 = vcmask 1042432
  %vm1851 = vcmask 538628
  %vm1852 = vmor %vm1851, %vm1850
  %1853 = vst.msk [vmem:[%s3 + $0x44] sm:$0x77] %vm1852, %v1832
  // Predicated region
  $region14: #{edsr_forward.5} parent=0 // pred_check
    _
  $region15: #{edsr_forward.5} parent=0 // pred_check_branch
    %1855 = sbr.rel (0) target = $region17
  $region16: #{edsr_forward.5} parent=0 // pred_region
    _
  $region17: #{edsr_forward.5} parent=0 // pred_fallthru
    _
  // Predicated region
  $region18: #{edsr_forward.5} parent=0 // pred_check
    _
  $region19: #{edsr_forward.5} parent=0 // pred_check_branch
    %1857 = sbr.rel (0) target = $region21
  $region20: #{edsr_forward.5} parent=0 // pred_region
    _
  $region21: #{edsr_forward.5} parent=0 // pred_fallthru
    _

</llo_original>
